<compile_context>
chip_gen: v5e
topology: v5e:2x2
jax: 0.10.0
libtpu: 0.0.40
codegen_flags: <defaults>
</compile_context>

<pallas_src>
import jax
import jax.numpy as jnp
import numpy as np
from jax import lax
from jax.experimental import pallas as pl
from jax.experimental.pallas import tpu as pltpu


def _make_kernel(heads: int, dim_head: int, dim: int, c: int, batch_tile: int,
                 n: int, n_tile: int, compute_dtype):
    hidden = heads * dim_head
    n_steps = n // n_tile
    # K = c is tiny in the demo (4): a padded MXU matmul wastes 32-64x of the
    # contraction depth, so do an unrolled broadcast-FMA on otherwise-idle VALU
    # slots.  For production channel counts keep the MXU path.
    use_vpu_qkv = c <= 8

    def kernel(x_ref, w_qkv_ref, w_out_ref, b_out_ref, mask_ref, o_ref):
        # x_ref:     (bt, c, n)        f32 tokens, lane axis = n
        # w_qkv_ref: (3*hidden, c)     f32 qkv 1x1 conv weight (no bias)
        # w_out_ref: (dim, hidden)     f32 output 1x1 conv weight
        # b_out_ref: (dim, 1)          f32 output 1x1 conv bias
        # mask_ref:  (hidden, hidden)  f32 per-head block-diagonal mask
        # o_ref:     (bt, dim, n)
        w_qkv = w_qkv_ref[...]
        if not use_vpu_qkv:
            w_qkv = w_qkv.astype(compute_dtype)     # cast once, not per tile
        w_q = w_qkv[:hidden]
        w_k = w_qkv[hidden:2 * hidden]
        w_v = w_qkv[2 * hidden:]
        w_out = w_out_ref[...]
        bias = b_out_ref[...]
        mask = mask_ref[...]

        def project(w, x_t):
            # (O, c) @ (c, nt) -> (O, nt), f32.
            if use_vpu_qkv:
                acc = w[:, 0:1] * x_t[0:1, :]
                for ci in range(1, c):
                    acc = acc + w[:, ci:ci + 1] * x_t[ci:ci + 1, :]
                return acc
            return jnp.dot(w, x_t.astype(compute_dtype),
                           preferred_element_type=jnp.float32)

        def x_tile(bi, t):
            start = t * n_tile
            if n_steps > 2:                       # rolled loop: give the hint
                start = pl.multiple_of(start, n_tile)
            # bf16 casting (when needed) happens downstream, inside VMEM.
            return x_ref[bi, :, pl.ds(start, n_tile)], start

        def batch_body(bi, carry):
            # ---- pass 1: online-softmax accumulation of the UN-normalized
            #      per-head context C[i, j] = sum_n exp(k[i,n]-m_i) v[j,n].
            def kv_body(t, kv_carry):
                m_run, l_run, c_run = kv_carry
                x_t, _ = x_tile(bi, t)                              # (c, nt) f32
                k_t = project(w_k, x_t)                             # (hidden, nt)
                v_t = project(w_v, x_t)                             # (hidden, nt)
                m_new = jnp.maximum(m_run,
                                    jnp.max(k_t, axis=-1, keepdims=True))
                alpha = jnp.exp(m_run - m_new)                      # (hidden, 1)
                p = jnp.exp(k_t - m_new)                            # (hidden, nt)
                l_new = alpha * l_run + jnp.sum(p, axis=-1, keepdims=True)
                # NOTE: contracting dim 1 of both operands; if the v6e bundle
                # dump shows an XLU vxpose of v_t here, restructure so v is
                # produced contraction-major.
                pv = lax.dot_general(
                    p.astype(compute_dtype), v_t.astype(compute_dtype),
                    (((1,), (1,)), ((), ())),
                    preferred_element_type=jnp.float32)             # (hidden, hidden)
                return m_new, l_new, alpha * c_run + pv

            m0 = jnp.full((hidden, 1), -jnp.inf, jnp.float32)
            l0 = jnp.zeros((hidden, 1), jnp.float32)
            c0 = jnp.zeros((hidden, hidden), jnp.float32)
            _, l_run, ctx = lax.fori_loop(0, n_steps, kv_body, (m0, l0, c0),
                                          unroll=(n_steps <= 2))

            # Deferred softmax normalization: softmax row i = exp(k_i - m_i)/l_i,
            # so scale the rows of the tiny context by 1/l_i (exact reciprocal —
            # essentially free at (hidden, hidden)).  Mask to per-head blocks.
            ctx = ctx * mask * (1.0 / l_run)

            # Fold the output 1x1 conv: M[o, i] = sum_j W_out[o, j] ctx[i, j]
            # (= W_out @ ctx^T), tiny (dim, hidden), f32.
            m_mat = lax.dot_general(w_out, ctx, (((1,), (1,)), ((), ())),
                                    preferred_element_type=jnp.float32)
            m_bf = m_mat.astype(compute_dtype)

            # ---- pass 2: emit y = M @ Q + b per token tile (lane-dense stores).
            def out_body(t, out_carry):
                x_t, start = x_tile(bi, t)
                q_t = project(w_q, x_t)                             # (hidden, nt)
                y_t = jnp.dot(m_bf, q_t.astype(compute_dtype),
                              preferred_element_type=jnp.float32)   # (dim, nt)
                o_ref[bi, :, pl.ds(start, n_tile)] = (y_t + bias).astype(o_ref.dtype)
                return out_carry

            lax.fori_loop(0, n_steps, out_body, 0, unroll=(n_steps <= 2))
            return carry

        lax.fori_loop(0, batch_tile, batch_body, 0, unroll=(batch_tile <= 2))

    return kernel


def _pick_batch_tile(b: int) -> int:
    """Fold the batch on single-TC chips (v5e/v6e); keep >=2 grid steps on v7x."""
    try:
        kind = jax.devices()[0].device_kind.lower()
    except Exception:  # pragma: no cover - defensive
        kind = ""
    dual_tc = "v7" in kind
    target = max(b // 2, 1) if (dual_tc and b >= 2) else b
    while target > 1 and b % target:
        target -= 1
    return max(target, 1)


def _pick_n_tile(n: int) -> int:
    """Token tile for the in-kernel flash-style sweep (bounds VMEM temps)."""
    if n <= 2048:
        return n
    for cand in (2048, 1024, 512, 256, 128):
        if n % cand == 0:
            return cand
    return n  # fall back to a single slab if n has awkward factors


def linear_attention(x, w_qkv, w_out, b_out, *, heads=4, dim_head=32,
                     batch_tile=None, n_tile=None, compute_dtype=jnp.bfloat16):
    """x: (b, dim, h, w) NCHW f32; conv weights as in nn.Conv2d (O, I, 1, 1)."""
    b, c, h, w = x.shape
    n = h * w
    hidden = heads * dim_head
    dim = c

    if batch_tile is None:
        batch_tile = _pick_batch_tile(b)
    assert b % batch_tile == 0, "batch_tile must divide batch"
    if n_tile is None:
        n_tile = _pick_n_tile(n)
    assert n % n_tile == 0, "n_tile must divide h*w"

    # Channel-major glue: NCHW reshapes straight to (b, c, n) — no transposes and
    # no dtype converts in the wrapper (x stays f32 until it is in VMEM).
    x_cn = x.reshape(b, c, n)
    w_qkv_2d = w_qkv.reshape(3 * hidden, c)          # (3*hidden, c) f32
    w_out_2d = w_out.reshape(dim, hidden)            # (dim, hidden) f32
    b_out_2d = b_out.reshape(dim, 1)                 # (dim, 1)      f32
    head_ids = jnp.arange(hidden, dtype=jnp.int32) // dim_head
    head_mask = (head_ids[:, None] == head_ids[None, :]).astype(jnp.float32)

    kernel = _make_kernel(heads, dim_head, dim, c, batch_tile, n, n_tile,
                          compute_dtype)

    # Explicit scoped-VMEM limit only when the estimate exceeds the 32 MiB
    # default (large n / large batch_tile); the demo shapes stay well under it.
    est_bytes = 4 * (2 * 2 * batch_tile * n * (c + dim)      # double-buffered x/y
                     + 2 * hidden * hidden                   # mask + ctx
                     + 8 * hidden * n_tile)                  # per-tile k/v/p temps
    vmem_limit = None
    if est_bytes > (24 << 20):
        vmem_limit = min(int(est_bytes * 1.5), 100 << 20)

    y = pl.pallas_call(
        kernel,
        out_shape=jax.ShapeDtypeStruct((b, dim, n), x.dtype),
        grid_spec=pltpu.PrefetchScalarGridSpec(
            num_scalar_prefetch=0,
            grid=(b // batch_tile,),
            in_specs=[
                pl.BlockSpec((batch_tile, c, n), lambda i: (i, 0, 0)),
                pl.BlockSpec((3 * hidden, c), lambda i: (0, 0)),
                pl.BlockSpec((dim, hidden), lambda i: (0, 0)),
                pl.BlockSpec((dim, 1), lambda i: (0, 0)),
                pl.BlockSpec((hidden, hidden), lambda i: (0, 0)),
            ],
            out_specs=pl.BlockSpec((batch_tile, dim, n), lambda i: (i, 0, 0)),
        ),
        compiler_params=pltpu.CompilerParams(
            dimension_semantics=("parallel",),
            vmem_limit_bytes=vmem_limit),
    )(x_cn, w_qkv_2d, w_out_2d, b_out_2d, head_mask)

    return y.reshape(b, dim, h, w)


def linear_attention_ref(x, w_qkv, w_out, b_out, *, heads=4, dim_head=32):
    """Pure-JAX f32 reference mirroring the PyTorch LinearAttention exactly."""
    b, c, h, w = x.shape
    n = h * w
    hidden = heads * dim_head
    qkv = jnp.einsum('bchw,oc->bohw', x, w_qkv.reshape(3 * hidden, c))
    qkv = qkv.reshape(b, 3, heads, dim_head, n)
    q, k, v = qkv[:, 0], qkv[:, 1], qkv[:, 2]
    k = jax.nn.softmax(k, axis=-1)
    context = jnp.einsum('bhdn,bhen->bhde', k, v)
    out = jnp.einsum('bhde,bhdn->bhen', context, q)
    out = out.reshape(b, hidden, h, w)
    y = jnp.einsum('bchw,oc->bohw', out, w_out.reshape(c, hidden))
    return y + b_out[None, :, None, None]


if __name__ == "__main__":
    # Small deterministic setup: dim=4, heads=4, dim_head=32 -> hidden=128, n=256
    dim, heads, dim_head = 4, 4, 32
    hidden = heads * dim_head
    b, h, w = 2, 16, 16

    key = jax.random.PRNGKey(0)
    k_x, k_qkv, k_out, k_bias = jax.random.split(key, 4)

    x = jax.random.normal(k_x, (b, dim, h, w), dtype=jnp.float32)
    # Conv2d 1x1 weights (synthetic, deterministic init)
    w_qkv = jax.random.normal(k_qkv, (hidden * 3, dim, 1, 1), dtype=jnp.float32) * 0.1
    w_out = jax.random.normal(k_out, (dim, hidden, 1, 1), dtype=jnp.float32) * 0.1
    b_out = jax.random.normal(k_bias, (dim,), dtype=jnp.float32) * 0.1

    out = linear_attention(x, w_qkv, w_out, b_out, heads=heads, dim_head=dim_head)
    out = jax.block_until_ready(out)

    ref = linear_attention_ref(x, w_qkv, w_out, b_out, heads=heads, dim_head=dim_head)
    # bf16 MXU operands (f32 accumulation) -> tolerance loosened vs the f32 ref.
    np.testing.assert_allclose(np.asarray(out), np.asarray(ref), rtol=2e-2, atol=2e-2)

    print("KERNEL_OK")
</pallas_src>

<mosaic_0001>
module attributes {stable_mosaic.version = 11 : i64} {
  func.func @kernel(%arg0: i32, %arg1: memref<2x4x256xf32, #tpu.memory_space<vmem>>, %arg2: memref<384x4xf32, #tpu.memory_space<vmem>>, %arg3: memref<4x128xf32, #tpu.memory_space<vmem>>, %arg4: memref<4x1xf32, #tpu.memory_space<vmem>>, %arg5: memref<128x128xf32, #tpu.memory_space<vmem>>, %arg6: memref<2x4x256xf32, #tpu.memory_space<vmem>>) attributes {dimension_semantics = [#tpu.dimension_semantics<parallel>], iteration_bounds = array<i64: 1>, scalar_prefetch = 0 : i64, scratch_operands = 0 : i64, tpu.core_type = #tpu.core_type<tc>, window_params = [{transform_indices = @transform_0, window_bounds = array<i64: 2, 4, 256>}, {pipeline_mode = #tpu.pipeline_mode<synchronous>, transform_indices = @transform_1, window_bounds = array<i64: 384, 4>}, {pipeline_mode = #tpu.pipeline_mode<synchronous>, transform_indices = @transform_2, window_bounds = array<i64: 4, 128>}, {pipeline_mode = #tpu.pipeline_mode<synchronous>, transform_indices = @transform_3, window_bounds = array<i64: 4, 1>}, {pipeline_mode = #tpu.pipeline_mode<synchronous>, transform_indices = @transform_4, window_bounds = array<i64: 128, 128>}, {transform_indices = @transform_5, window_bounds = array<i64: 2, 4, 256>}]} {
    %c0 = arith.constant 0 : index
    %c0_0 = arith.constant 0 : index
    %0 = vector.load %arg2[%c0, %c0_0] : memref<384x4xf32, #tpu.memory_space<vmem>>, vector<384x4xf32>
    %1 = vector.extract_strided_slice %0 {offsets = [0, 0], sizes = [128, 4], strides = [1, 1]} : vector<384x4xf32> to vector<128x4xf32>
    %2 = vector.extract_strided_slice %0 {offsets = [128, 0], sizes = [128, 4], strides = [1, 1]} : vector<384x4xf32> to vector<128x4xf32>
    %3 = vector.extract_strided_slice %0 {offsets = [256, 0], sizes = [128, 4], strides = [1, 1]} : vector<384x4xf32> to vector<128x4xf32>
    %c0_1 = arith.constant 0 : index
    %c0_2 = arith.constant 0 : index
    %4 = vector.load %arg3[%c0_1, %c0_2] : memref<4x128xf32, #tpu.memory_space<vmem>>, vector<4x128xf32>
    %c0_3 = arith.constant 0 : index
    %c0_4 = arith.constant 0 : index
    %5 = vector.load %arg4[%c0_3, %c0_4] : memref<4x1xf32, #tpu.memory_space<vmem>>, vector<4x1xf32>
    %c0_5 = arith.constant 0 : index
    %c0_6 = arith.constant 0 : index
    %6 = vector.load %arg5[%c0_5, %c0_6] : memref<128x128xf32, #tpu.memory_space<vmem>>, vector<128x128xf32>
    %c0_i32 = arith.constant 0 : i32
    %cst = arith.constant 0xFF800000 : f32
    %7 = vector.broadcast %cst : f32 to vector<128x1xf32>
    %cst_7 = arith.constant 0.000000e+00 : f32
    %8 = vector.broadcast %cst_7 : f32 to vector<128x1xf32>
    %cst_8 = arith.constant 0.000000e+00 : f32
    %9 = vector.broadcast %cst_8 : f32 to vector<128x128xf32>
    %c0_i32_9 = arith.constant 0 : i32
    %c256_i32 = arith.constant 256 : i32
    %10 = arith.muli %c0_i32_9, %c256_i32 : i32
    %11 = arith.index_cast %c0_i32 : i32 to index
    %c0_10 = arith.constant 0 : index
    %12 = arith.index_cast %10 : i32 to index
    %13 = vector.load %arg1[%11, %c0_10, %12] : memref<2x4x256xf32, #tpu.memory_space<vmem>>, vector<1x4x256xf32>
    %14 = vector.shape_cast %13 : vector<1x4x256xf32> to vector<4x256xf32>
    %15 = vector.extract_strided_slice %2 {offsets = [0, 0], sizes = [128, 1], strides = [1, 1]} : vector<128x4xf32> to vector<128x1xf32>
    %16 = vector.extract_strided_slice %14 {offsets = [0, 0], sizes = [1, 256], strides = [1, 1]} : vector<4x256xf32> to vector<1x256xf32>
    %17 = vector.broadcast %15 : vector<128x1xf32> to vector<128x256xf32>
    %18 = vector.broadcast %16 : vector<1x256xf32> to vector<128x256xf32>
    %19 = arith.mulf %17, %18 : vector<128x256xf32>
    %20 = vector.extract_strided_slice %2 {offsets = [0, 1], sizes = [128, 1], strides = [1, 1]} : vector<128x4xf32> to vector<128x1xf32>
    %21 = vector.extract_strided_slice %14 {offsets = [1, 0], sizes = [1, 256], strides = [1, 1]} : vector<4x256xf32> to vector<1x256xf32>
    %22 = vector.broadcast %20 : vector<128x1xf32> to vector<128x256xf32>
    %23 = vector.broadcast %21 : vector<1x256xf32> to vector<128x256xf32>
    %24 = arith.mulf %22, %23 : vector<128x256xf32>
    %25 = arith.addf %19, %24 : vector<128x256xf32>
    %26 = vector.extract_strided_slice %2 {offsets = [0, 2], sizes = [128, 1], strides = [1, 1]} : vector<128x4xf32> to vector<128x1xf32>
    %27 = vector.extract_strided_slice %14 {offsets = [2, 0], sizes = [1, 256], strides = [1, 1]} : vector<4x256xf32> to vector<1x256xf32>
    %28 = vector.broadcast %26 : vector<128x1xf32> to vector<128x256xf32>
    %29 = vector.broadcast %27 : vector<1x256xf32> to vector<128x256xf32>
    %30 = arith.mulf %28, %29 : vector<128x256xf32>
    %31 = arith.addf %25, %30 : vector<128x256xf32>
    %32 = vector.extract_strided_slice %2 {offsets = [0, 3], sizes = [128, 1], strides = [1, 1]} : vector<128x4xf32> to vector<128x1xf32>
    %33 = vector.extract_strided_slice %14 {offsets = [3, 0], sizes = [1, 256], strides = [1, 1]} : vector<4x256xf32> to vector<1x256xf32>
    %34 = vector.broadcast %32 : vector<128x1xf32> to vector<128x256xf32>
    %35 = vector.broadcast %33 : vector<1x256xf32> to vector<128x256xf32>
    %36 = arith.mulf %34, %35 : vector<128x256xf32>
    %37 = arith.addf %31, %36 : vector<128x256xf32>
    %38 = vector.extract_strided_slice %3 {offsets = [0, 0], sizes = [128, 1], strides = [1, 1]} : vector<128x4xf32> to vector<128x1xf32>
    %39 = vector.extract_strided_slice %14 {offsets = [0, 0], sizes = [1, 256], strides = [1, 1]} : vector<4x256xf32> to vector<1x256xf32>
    %40 = vector.broadcast %38 : vector<128x1xf32> to vector<128x256xf32>
    %41 = vector.broadcast %39 : vector<1x256xf32> to vector<128x256xf32>
    %42 = arith.mulf %40, %41 : vector<128x256xf32>
    %43 = vector.extract_strided_slice %3 {offsets = [0, 1], sizes = [128, 1], strides = [1, 1]} : vector<128x4xf32> to vector<128x1xf32>
    %44 = vector.extract_strided_slice %14 {offsets = [1, 0], sizes = [1, 256], strides = [1, 1]} : vector<4x256xf32> to vector<1x256xf32>
    %45 = vector.broadcast %43 : vector<128x1xf32> to vector<128x256xf32>
    %46 = vector.broadcast %44 : vector<1x256xf32> to vector<128x256xf32>
    %47 = arith.mulf %45, %46 : vector<128x256xf32>
    %48 = arith.addf %42, %47 : vector<128x256xf32>
    %49 = vector.extract_strided_slice %3 {offsets = [0, 2], sizes = [128, 1], strides = [1, 1]} : vector<128x4xf32> to vector<128x1xf32>
    %50 = vector.extract_strided_slice %14 {offsets = [2, 0], sizes = [1, 256], strides = [1, 1]} : vector<4x256xf32> to vector<1x256xf32>
    %51 = vector.broadcast %49 : vector<128x1xf32> to vector<128x256xf32>
    %52 = vector.broadcast %50 : vector<1x256xf32> to vector<128x256xf32>
    %53 = arith.mulf %51, %52 : vector<128x256xf32>
    %54 = arith.addf %48, %53 : vector<128x256xf32>
    %55 = vector.extract_strided_slice %3 {offsets = [0, 3], sizes = [128, 1], strides = [1, 1]} : vector<128x4xf32> to vector<128x1xf32>
    %56 = vector.extract_strided_slice %14 {offsets = [3, 0], sizes = [1, 256], strides = [1, 1]} : vector<4x256xf32> to vector<1x256xf32>
    %57 = vector.broadcast %55 : vector<128x1xf32> to vector<128x256xf32>
    %58 = vector.broadcast %56 : vector<1x256xf32> to vector<128x256xf32>
    %59 = arith.mulf %57, %58 : vector<128x256xf32>
    %60 = arith.addf %54, %59 : vector<128x256xf32>
    %cst_11 = arith.constant dense<0xFF800000> : vector<128xf32>
    %61 = vector.multi_reduction <maximumf>, %37, %cst_11 [1] : vector<128x256xf32> to vector<128xf32>
    %62 = vector.shape_cast %61 : vector<128xf32> to vector<128x1xf32>
    %63 = arith.maximumf %7, %62 : vector<128x1xf32>
    %64 = arith.subf %7, %63 : vector<128x1xf32>
    %65 = math.exp %64 : vector<128x1xf32>
    %66 = vector.broadcast %63 : vector<128x1xf32> to vector<128x256xf32>
    %67 = arith.subf %37, %66 : vector<128x256xf32>
    %68 = math.exp %67 : vector<128x256xf32>
    %69 = arith.mulf %65, %8 : vector<128x1xf32>
    %cst_12 = arith.constant dense<0.000000e+00> : vector<128xf32>
    %70 = vector.multi_reduction <add>, %68, %cst_12 [1] : vector<128x256xf32> to vector<128xf32>
    %71 = vector.shape_cast %70 : vector<128xf32> to vector<128x1xf32>
    %72 = arith.addf %69, %71 : vector<128x1xf32>
    %73 = arith.truncf %68 : vector<128x256xf32> to vector<128x256xbf16>
    %74 = arith.truncf %60 : vector<128x256xf32> to vector<128x256xbf16>
    %cst_13 = arith.constant dense<0.000000e+00> : vector<128x128xf32>
    %75 = tpu.matmul %73, %74, %cst_13 {dimension_numbers = #tpu.dot_dimension_numbers<[1], [1], [0], [0], [0, 0, 1, 0], [], []>} : vector<128x256xbf16>, vector<128x256xbf16>, vector<128x128xf32> -> vector<128x128xf32>
    %76 = vector.broadcast %65 : vector<128x1xf32> to vector<128x128xf32>
    %77 = arith.mulf %76, %9 : vector<128x128xf32>
    %78 = arith.addf %77, %75 : vector<128x128xf32>
    %c1_i32 = arith.constant 1 : i32
    %79 = arith.mulf %78, %6 : vector<128x128xf32>
    %cst_14 = arith.constant 1.000000e+00 : f32
    %80 = vector.broadcast %cst_14 : f32 to vector<128x1xf32>
    %81 = arith.divf %80, %72 : vector<128x1xf32>
    %82 = vector.broadcast %81 : vector<128x1xf32> to vector<128x128xf32>
    %83 = arith.mulf %79, %82 : vector<128x128xf32>
    %cst_15 = arith.constant dense<0.000000e+00> : vector<4x128xf32>
    %84 = tpu.matmul %4, %83, %cst_15 {dimension_numbers = #tpu.dot_dimension_numbers<[1], [1], [0], [0], [0, 0, 1, 0], [], []>} : vector<4x128xf32>, vector<128x128xf32>, vector<4x128xf32> -> vector<4x128xf32>
    %85 = arith.truncf %84 : vector<4x128xf32> to vector<4x128xbf16>
    %c0_i32_16 = arith.constant 0 : i32
    %c256_i32_17 = arith.constant 256 : i32
    %86 = arith.muli %c0_i32_16, %c256_i32_17 : i32
    %87 = arith.index_cast %c0_i32 : i32 to index
    %c0_18 = arith.constant 0 : index
    %88 = arith.index_cast %86 : i32 to index
    %89 = vector.load %arg1[%87, %c0_18, %88] : memref<2x4x256xf32, #tpu.memory_space<vmem>>, vector<1x4x256xf32>
    %90 = vector.shape_cast %89 : vector<1x4x256xf32> to vector<4x256xf32>
    %91 = vector.extract_strided_slice %1 {offsets = [0, 0], sizes = [128, 1], strides = [1, 1]} : vector<128x4xf32> to vector<128x1xf32>
    %92 = vector.extract_strided_slice %90 {offsets = [0, 0], sizes = [1, 256], strides = [1, 1]} : vector<4x256xf32> to vector<1x256xf32>
    %93 = vector.broadcast %91 : vector<128x1xf32> to vector<128x256xf32>
    %94 = vector.broadcast %92 : vector<1x256xf32> to vector<128x256xf32>
    %95 = arith.mulf %93, %94 : vector<128x256xf32>
    %96 = vector.extract_strided_slice %1 {offsets = [0, 1], sizes = [128, 1], strides = [1, 1]} : vector<128x4xf32> to vector<128x1xf32>
    %97 = vector.extract_strided_slice %90 {offsets = [1, 0], sizes = [1, 256], strides = [1, 1]} : vector<4x256xf32> to vector<1x256xf32>
    %98 = vector.broadcast %96 : vector<128x1xf32> to vector<128x256xf32>
    %99 = vector.broadcast %97 : vector<1x256xf32> to vector<128x256xf32>
    %100 = arith.mulf %98, %99 : vector<128x256xf32>
    %101 = arith.addf %95, %100 : vector<128x256xf32>
    %102 = vector.extract_strided_slice %1 {offsets = [0, 2], sizes = [128, 1], strides = [1, 1]} : vector<128x4xf32> to vector<128x1xf32>
    %103 = vector.extract_strided_slice %90 {offsets = [2, 0], sizes = [1, 256], strides = [1, 1]} : vector<4x256xf32> to vector<1x256xf32>
    %104 = vector.broadcast %102 : vector<128x1xf32> to vector<128x256xf32>
    %105 = vector.broadcast %103 : vector<1x256xf32> to vector<128x256xf32>
    %106 = arith.mulf %104, %105 : vector<128x256xf32>
    %107 = arith.addf %101, %106 : vector<128x256xf32>
    %108 = vector.extract_strided_slice %1 {offsets = [0, 3], sizes = [128, 1], strides = [1, 1]} : vector<128x4xf32> to vector<128x1xf32>
    %109 = vector.extract_strided_slice %90 {offsets = [3, 0], sizes = [1, 256], strides = [1, 1]} : vector<4x256xf32> to vector<1x256xf32>
    %110 = vector.broadcast %108 : vector<128x1xf32> to vector<128x256xf32>
    %111 = vector.broadcast %109 : vector<1x256xf32> to vector<128x256xf32>
    %112 = arith.mulf %110, %111 : vector<128x256xf32>
    %113 = arith.addf %107, %112 : vector<128x256xf32>
    %114 = arith.truncf %113 : vector<128x256xf32> to vector<128x256xbf16>
    %cst_19 = arith.constant dense<0.000000e+00> : vector<4x256xf32>
    %115 = tpu.matmul %85, %114, %cst_19 {dimension_numbers = #tpu.dot_dimension_numbers<[1], [0], [0], [1], [0, 0, 1, 1], [], []>} : vector<4x128xbf16>, vector<128x256xbf16>, vector<4x256xf32> -> vector<4x256xf32>
    %116 = vector.broadcast %5 : vector<4x1xf32> to vector<4x256xf32>
    %117 = arith.addf %115, %116 : vector<4x256xf32>
    %118 = arith.index_cast %c0_i32 : i32 to index
    %c0_20 = arith.constant 0 : index
    %119 = arith.index_cast %86 : i32 to index
    %120 = vector.load %arg6[%118, %c0_20, %119] : memref<2x4x256xf32, #tpu.memory_space<vmem>>, vector<1x4x256xf32>
    %121 = vector.shape_cast %120 : vector<1x4x256xf32> to vector<4x256xf32>
    %122 = vector.shape_cast %117 : vector<4x256xf32> to vector<1x4x256xf32>
    tpu.vector_store %arg6[%118, %c0_20, %119], %122 {strides = array<i32>} : memref<2x4x256xf32, #tpu.memory_space<vmem>>, vector<1x4x256xf32>,
    %c1_i32_21 = arith.constant 1 : i32
    %c1_i32_22 = arith.constant 1 : i32
    %cst_23 = arith.constant 0xFF800000 : f32
    %123 = vector.broadcast %cst_23 : f32 to vector<128x1xf32>
    %cst_24 = arith.constant 0.000000e+00 : f32
    %124 = vector.broadcast %cst_24 : f32 to vector<128x1xf32>
    %cst_25 = arith.constant 0.000000e+00 : f32
    %125 = vector.broadcast %cst_25 : f32 to vector<128x128xf32>
    %c0_i32_26 = arith.constant 0 : i32
    %c256_i32_27 = arith.constant 256 : i32
    %126 = arith.muli %c0_i32_26, %c256_i32_27 : i32
    %127 = arith.index_cast %c1_i32_22 : i32 to index
    %c0_28 = arith.constant 0 : index
    %128 = arith.index_cast %126 : i32 to index
    %129 = vector.load %arg1[%127, %c0_28, %128] : memref<2x4x256xf32, #tpu.memory_space<vmem>>, vector<1x4x256xf32>
    %130 = vector.shape_cast %129 : vector<1x4x256xf32> to vector<4x256xf32>
    %131 = vector.extract_strided_slice %2 {offsets = [0, 0], sizes = [128, 1], strides = [1, 1]} : vector<128x4xf32> to vector<128x1xf32>
    %132 = vector.extract_strided_slice %130 {offsets = [0, 0], sizes = [1, 256], strides = [1, 1]} : vector<4x256xf32> to vector<1x256xf32>
    %133 = vector.broadcast %131 : vector<128x1xf32> to vector<128x256xf32>
    %134 = vector.broadcast %132 : vector<1x256xf32> to vector<128x256xf32>
    %135 = arith.mulf %133, %134 : vector<128x256xf32>
    %136 = vector.extract_strided_slice %2 {offsets = [0, 1], sizes = [128, 1], strides = [1, 1]} : vector<128x4xf32> to vector<128x1xf32>
    %137 = vector.extract_strided_slice %130 {offsets = [1, 0], sizes = [1, 256], strides = [1, 1]} : vector<4x256xf32> to vector<1x256xf32>
    %138 = vector.broadcast %136 : vector<128x1xf32> to vector<128x256xf32>
    %139 = vector.broadcast %137 : vector<1x256xf32> to vector<128x256xf32>
    %140 = arith.mulf %138, %139 : vector<128x256xf32>
    %141 = arith.addf %135, %140 : vector<128x256xf32>
    %142 = vector.extract_strided_slice %2 {offsets = [0, 2], sizes = [128, 1], strides = [1, 1]} : vector<128x4xf32> to vector<128x1xf32>
    %143 = vector.extract_strided_slice %130 {offsets = [2, 0], sizes = [1, 256], strides = [1, 1]} : vector<4x256xf32> to vector<1x256xf32>
    %144 = vector.broadcast %142 : vector<128x1xf32> to vector<128x256xf32>
    %145 = vector.broadcast %143 : vector<1x256xf32> to vector<128x256xf32>
    %146 = arith.mulf %144, %145 : vector<128x256xf32>
    %147 = arith.addf %141, %146 : vector<128x256xf32>
    %148 = vector.extract_strided_slice %2 {offsets = [0, 3], sizes = [128, 1], strides = [1, 1]} : vector<128x4xf32> to vector<128x1xf32>
    %149 = vector.extract_strided_slice %130 {offsets = [3, 0], sizes = [1, 256], strides = [1, 1]} : vector<4x256xf32> to vector<1x256xf32>
    %150 = vector.broadcast %148 : vector<128x1xf32> to vector<128x256xf32>
    %151 = vector.broadcast %149 : vector<1x256xf32> to vector<128x256xf32>
    %152 = arith.mulf %150, %151 : vector<128x256xf32>
    %153 = arith.addf %147, %152 : vector<128x256xf32>
    %154 = vector.extract_strided_slice %3 {offsets = [0, 0], sizes = [128, 1], strides = [1, 1]} : vector<128x4xf32> to vector<128x1xf32>
    %155 = vector.extract_strided_slice %130 {offsets = [0, 0], sizes = [1, 256], strides = [1, 1]} : vector<4x256xf32> to vector<1x256xf32>
    %156 = vector.broadcast %154 : vector<128x1xf32> to vector<128x256xf32>
    %157 = vector.broadcast %155 : vector<1x256xf32> to vector<128x256xf32>
    %158 = arith.mulf %156, %157 : vector<128x256xf32>
    %159 = vector.extract_strided_slice %3 {offsets = [0, 1], sizes = [128, 1], strides = [1, 1]} : vector<128x4xf32> to vector<128x1xf32>
    %160 = vector.extract_strided_slice %130 {offsets = [1, 0], sizes = [1, 256], strides = [1, 1]} : vector<4x256xf32> to vector<1x256xf32>
    %161 = vector.broadcast %159 : vector<128x1xf32> to vector<128x256xf32>
    %162 = vector.broadcast %160 : vector<1x256xf32> to vector<128x256xf32>
    %163 = arith.mulf %161, %162 : vector<128x256xf32>
    %164 = arith.addf %158, %163 : vector<128x256xf32>
    %165 = vector.extract_strided_slice %3 {offsets = [0, 2], sizes = [128, 1], strides = [1, 1]} : vector<128x4xf32> to vector<128x1xf32>
    %166 = vector.extract_strided_slice %130 {offsets = [2, 0], sizes = [1, 256], strides = [1, 1]} : vector<4x256xf32> to vector<1x256xf32>
    %167 = vector.broadcast %165 : vector<128x1xf32> to vector<128x256xf32>
    %168 = vector.broadcast %166 : vector<1x256xf32> to vector<128x256xf32>
    %169 = arith.mulf %167, %168 : vector<128x256xf32>
    %170 = arith.addf %164, %169 : vector<128x256xf32>
    %171 = vector.extract_strided_slice %3 {offsets = [0, 3], sizes = [128, 1], strides = [1, 1]} : vector<128x4xf32> to vector<128x1xf32>
    %172 = vector.extract_strided_slice %130 {offsets = [3, 0], sizes = [1, 256], strides = [1, 1]} : vector<4x256xf32> to vector<1x256xf32>
    %173 = vector.broadcast %171 : vector<128x1xf32> to vector<128x256xf32>
    %174 = vector.broadcast %172 : vector<1x256xf32> to vector<128x256xf32>
    %175 = arith.mulf %173, %174 : vector<128x256xf32>
    %176 = arith.addf %170, %175 : vector<128x256xf32>
    %cst_29 = arith.constant dense<0xFF800000> : vector<128xf32>
    %177 = vector.multi_reduction <maximumf>, %153, %cst_29 [1] : vector<128x256xf32> to vector<128xf32>
    %178 = vector.shape_cast %177 : vector<128xf32> to vector<128x1xf32>
    %179 = arith.maximumf %123, %178 : vector<128x1xf32>
    %180 = arith.subf %123, %179 : vector<128x1xf32>
    %181 = math.exp %180 : vector<128x1xf32>
    %182 = vector.broadcast %179 : vector<128x1xf32> to vector<128x256xf32>
    %183 = arith.subf %153, %182 : vector<128x256xf32>
    %184 = math.exp %183 : vector<128x256xf32>
    %185 = arith.mulf %181, %124 : vector<128x1xf32>
    %cst_30 = arith.constant dense<0.000000e+00> : vector<128xf32>
    %186 = vector.multi_reduction <add>, %184, %cst_30 [1] : vector<128x256xf32> to vector<128xf32>
    %187 = vector.shape_cast %186 : vector<128xf32> to vector<128x1xf32>
    %188 = arith.addf %185, %187 : vector<128x1xf32>
    %189 = arith.truncf %184 : vector<128x256xf32> to vector<128x256xbf16>
    %190 = arith.truncf %176 : vector<128x256xf32> to vector<128x256xbf16>
    %cst_31 = arith.constant dense<0.000000e+00> : vector<128x128xf32>
    %191 = tpu.matmul %189, %190, %cst_31 {dimension_numbers = #tpu.dot_dimension_numbers<[1], [1], [0], [0], [0, 0, 1, 0], [], []>} : vector<128x256xbf16>, vector<128x256xbf16>, vector<128x128xf32> -> vector<128x128xf32>
    %192 = vector.broadcast %181 : vector<128x1xf32> to vector<128x128xf32>
    %193 = arith.mulf %192, %125 : vector<128x128xf32>
    %194 = arith.addf %193, %191 : vector<128x128xf32>
    %c1_i32_32 = arith.constant 1 : i32
    %195 = arith.mulf %194, %6 : vector<128x128xf32>
    %cst_33 = arith.constant 1.000000e+00 : f32
    %196 = vector.broadcast %cst_33 : f32 to vector<128x1xf32>
    %197 = arith.divf %196, %188 : vector<128x1xf32>
    %198 = vector.broadcast %197 : vector<128x1xf32> to vector<128x128xf32>
    %199 = arith.mulf %195, %198 : vector<128x128xf32>
    %cst_34 = arith.constant dense<0.000000e+00> : vector<4x128xf32>
    %200 = tpu.matmul %4, %199, %cst_34 {dimension_numbers = #tpu.dot_dimension_numbers<[1], [1], [0], [0], [0, 0, 1, 0], [], []>} : vector<4x128xf32>, vector<128x128xf32>, vector<4x128xf32> -> vector<4x128xf32>
    %201 = arith.truncf %200 : vector<4x128xf32> to vector<4x128xbf16>
    %c0_i32_35 = arith.constant 0 : i32
    %c256_i32_36 = arith.constant 256 : i32
    %202 = arith.muli %c0_i32_35, %c256_i32_36 : i32
    %203 = arith.index_cast %c1_i32_22 : i32 to index
    %c0_37 = arith.constant 0 : index
    %204 = arith.index_cast %202 : i32 to index
    %205 = vector.load %arg1[%203, %c0_37, %204] : memref<2x4x256xf32, #tpu.memory_space<vmem>>, vector<1x4x256xf32>
    %206 = vector.shape_cast %205 : vector<1x4x256xf32> to vector<4x256xf32>
    %207 = vector.extract_strided_slice %1 {offsets = [0, 0], sizes = [128, 1], strides = [1, 1]} : vector<128x4xf32> to vector<128x1xf32>
    %208 = vector.extract_strided_slice %206 {offsets = [0, 0], sizes = [1, 256], strides = [1, 1]} : vector<4x256xf32> to vector<1x256xf32>
    %209 = vector.broadcast %207 : vector<128x1xf32> to vector<128x256xf32>
    %210 = vector.broadcast %208 : vector<1x256xf32> to vector<128x256xf32>
    %211 = arith.mulf %209, %210 : vector<128x256xf32>
    %212 = vector.extract_strided_slice %1 {offsets = [0, 1], sizes = [128, 1], strides = [1, 1]} : vector<128x4xf32> to vector<128x1xf32>
    %213 = vector.extract_strided_slice %206 {offsets = [1, 0], sizes = [1, 256], strides = [1, 1]} : vector<4x256xf32> to vector<1x256xf32>
    %214 = vector.broadcast %212 : vector<128x1xf32> to vector<128x256xf32>
    %215 = vector.broadcast %213 : vector<1x256xf32> to vector<128x256xf32>
    %216 = arith.mulf %214, %215 : vector<128x256xf32>
    %217 = arith.addf %211, %216 : vector<128x256xf32>
    %218 = vector.extract_strided_slice %1 {offsets = [0, 2], sizes = [128, 1], strides = [1, 1]} : vector<128x4xf32> to vector<128x1xf32>
    %219 = vector.extract_strided_slice %206 {offsets = [2, 0], sizes = [1, 256], strides = [1, 1]} : vector<4x256xf32> to vector<1x256xf32>
    %220 = vector.broadcast %218 : vector<128x1xf32> to vector<128x256xf32>
    %221 = vector.broadcast %219 : vector<1x256xf32> to vector<128x256xf32>
    %222 = arith.mulf %220, %221 : vector<128x256xf32>
    %223 = arith.addf %217, %222 : vector<128x256xf32>
    %224 = vector.extract_strided_slice %1 {offsets = [0, 3], sizes = [128, 1], strides = [1, 1]} : vector<128x4xf32> to vector<128x1xf32>
    %225 = vector.extract_strided_slice %206 {offsets = [3, 0], sizes = [1, 256], strides = [1, 1]} : vector<4x256xf32> to vector<1x256xf32>
    %226 = vector.broadcast %224 : vector<128x1xf32> to vector<128x256xf32>
    %227 = vector.broadcast %225 : vector<1x256xf32> to vector<128x256xf32>
    %228 = arith.mulf %226, %227 : vector<128x256xf32>
    %229 = arith.addf %223, %228 : vector<128x256xf32>
    %230 = arith.truncf %229 : vector<128x256xf32> to vector<128x256xbf16>
    %cst_38 = arith.constant dense<0.000000e+00> : vector<4x256xf32>
    %231 = tpu.matmul %201, %230, %cst_38 {dimension_numbers = #tpu.dot_dimension_numbers<[1], [0], [0], [1], [0, 0, 1, 1], [], []>} : vector<4x128xbf16>, vector<128x256xbf16>, vector<4x256xf32> -> vector<4x256xf32>
    %232 = vector.broadcast %5 : vector<4x1xf32> to vector<4x256xf32>
    %233 = arith.addf %231, %232 : vector<4x256xf32>
    %234 = arith.index_cast %c1_i32_22 : i32 to index
    %c0_39 = arith.constant 0 : index
    %235 = arith.index_cast %202 : i32 to index
    %236 = vector.load %arg6[%234, %c0_39, %235] : memref<2x4x256xf32, #tpu.memory_space<vmem>>, vector<1x4x256xf32>
    %237 = vector.shape_cast %236 : vector<1x4x256xf32> to vector<4x256xf32>
    %238 = vector.shape_cast %233 : vector<4x256xf32> to vector<1x4x256xf32>
    tpu.vector_store %arg6[%234, %c0_39, %235], %238 {strides = array<i32>} : memref<2x4x256xf32, #tpu.memory_space<vmem>>, vector<1x4x256xf32>,
    %c1_i32_40 = arith.constant 1 : i32
    %c2_i32 = arith.constant 2 : i32
    return
  }
  func.func @transform_0(%arg0: i32) -> (i32, i32, i32) {
    %c0_i32 = arith.constant 0 : i32
    %c0_i32_0 = arith.constant 0 : i32
    %c0_i32_1 = arith.constant 0 : i32
    return %arg0, %c0_i32, %c0_i32_0 : i32, i32, i32
  }
  func.func @transform_1(%arg0: i32) -> (i32, i32) {
    %c0_i32 = arith.constant 0 : i32
    %c0_i32_0 = arith.constant 0 : i32
    %c0_i32_1 = arith.constant 0 : i32
    return %c0_i32, %c0_i32_0 : i32, i32
  }
  func.func @transform_2(%arg0: i32) -> (i32, i32) {
    %c0_i32 = arith.constant 0 : i32
    %c0_i32_0 = arith.constant 0 : i32
    %c0_i32_1 = arith.constant 0 : i32
    return %c0_i32, %c0_i32_0 : i32, i32
  }
  func.func @transform_3(%arg0: i32) -> (i32, i32) {
    %c0_i32 = arith.constant 0 : i32
    %c0_i32_0 = arith.constant 0 : i32
    %c0_i32_1 = arith.constant 0 : i32
    return %c0_i32, %c0_i32_0 : i32, i32
  }
  func.func @transform_4(%arg0: i32) -> (i32, i32) {
    %c0_i32 = arith.constant 0 : i32
    %c0_i32_0 = arith.constant 0 : i32
    %c0_i32_1 = arith.constant 0 : i32
    return %c0_i32, %c0_i32_0 : i32, i32
  }
  func.func @transform_5(%arg0: i32) -> (i32, i32, i32) {
    %c0_i32 = arith.constant 0 : i32
    %c0_i32_0 = arith.constant 0 : i32
    %c0_i32_1 = arith.constant 0 : i32
    return %arg0, %c0_i32, %c0_i32_0 : i32, i32, i32
  }
}

</mosaic_0001>

<llo_original>
// kernel: tpu_custom_call.1
$region0: #{tpu_custom_call.1}
  #allocation0 [shape = 'u32[]', space=smem, size = 0x4, offset = 0x4, fixed_abs, tag = 'smem constant byte address 0x4 - core index']
  #allocation1 [shape = 'u32[72,128]{1,0:T(1,128)}', space=vmem, size = 0x9000, scoped, tag = 'internal scratch']
  %s0 = inlined_call_operand.vmem [shape: f32[2,4,256], index: 0, kind: input, shape index: {}]
  %s1 = inlined_call_operand.vmem [shape: f32[384,4], index: 1, kind: input, shape index: {}]
  %s2 = inlined_call_operand.vmem [shape: f32[4,128], index: 2, kind: input, shape index: {}]
  %s3 = inlined_call_operand.vmem [shape: f32[4,1], index: 3, kind: input, shape index: {}]
  %s4 = inlined_call_operand.vmem [shape: f32[128,128], index: 4, kind: input, shape index: {}]
  %s5 = inlined_call_operand.hbm [shape: f32[2,4,256], index: 5, kind: output, shape index: {}]
  %s6 = sld [smem:[#allocation0]]
  $region30: #{tpu_custom_call.1} parent=0
    _
  %s8 = ssub.s32 1, %s6
  %s9 = scalar_select 0, %s8, %s6
  $region1: #{tpu_custom_call.1} parent=0
    #allocation2 [shape = 'u8[8192]{0}', space=vmem, size = 0x2000, scoped, tag = 'output window, operand 0, single buffered']
    #allocation3 [shape = 's32[1]{0}', space=sflag, size = 0x4, scoped, tag = 'scoped memory for tpu_custom_call.1']
    %10 = vsyncpa [#allocation3], 0
    // Predicated region
    $region2: #{tpu_custom_call.1} parent=1 // pred_check
      _
    $region3: #{tpu_custom_call.1} parent=1 // pred_check_branch
      %12 = sbr.rel (0) target = $region5
    $region4: #{tpu_custom_call.1} parent=1 // pred_region
      _
    $region5: #{tpu_custom_call.1} parent=1 // pred_fallthru
      _
    // Predicated region
    $region6: #{tpu_custom_call.1} parent=1 // pred_check
      _
    $region7: #{tpu_custom_call.1} parent=1 // pred_check_branch
      %14 = sbr.rel (0) target = $region9
    $region8: #{tpu_custom_call.1} parent=1 // pred_region
      _
    $region9: #{tpu_custom_call.1} parent=1 // pred_fallthru
      _
    // Predicated region
    $region10: #{tpu_custom_call.1} parent=1 // pred_check
      _
    $region11: #{tpu_custom_call.1} parent=1 // pred_check_branch
      %16 = sbr.rel (0) target = $region13
    $region12: #{tpu_custom_call.1} parent=1 // pred_region
      _
    $region13: #{tpu_custom_call.1} parent=1 // pred_fallthru
      _
    // Predicated region
    $region14: #{tpu_custom_call.1} parent=1 // pred_check
      _
    $region15: #{tpu_custom_call.1} parent=1 // pred_check_branch
      %18 = sbr.rel (0) target = $region17
    $region16: #{tpu_custom_call.1} parent=1 // pred_region
      _
    $region17: #{tpu_custom_call.1} parent=1 // pred_fallthru
      _
    // Predicated region
    $region18: #{tpu_custom_call.1} parent=1 // pred_check
      _
    $region19: #{tpu_custom_call.1} parent=1 // pred_check_branch
      %20 = sbr.rel (0) target = $region21
    $region20: #{tpu_custom_call.1} parent=1 // pred_region
      _
    $region21: #{tpu_custom_call.1} parent=1 // pred_fallthru
      _
    %v21 = vld [vmem:[%s1] sm:$0xff]
    %v22 = vld [vmem:[%s1 + $0x8] sm:$0xff]
    %v23 = vld [vmem:[%s1 + $0x10] sm:$0xff]
    %v24 = vld [vmem:[%s1 + $0x18] sm:$0xff]
    %v25 = vld [vmem:[%s1 + $0x20] sm:$0xff]
    %v26 = vld [vmem:[%s1 + $0x28] sm:$0xff]
    %v27 = vld [vmem:[%s1 + $0x30] sm:$0xff]
    %v28 = vld [vmem:[%s1 + $0x38] sm:$0xff]
    %v29 = vld [vmem:[%s1 + $0x40] sm:$0xff]
    %v30 = vld [vmem:[%s1 + $0x48] sm:$0xff]
    %v31 = vld [vmem:[%s1 + $0x50] sm:$0xff]
    %v32 = vld [vmem:[%s1 + $0x58] sm:$0xff]
    %v33 = vld [vmem:[%s1 + $0x60] sm:$0xff]
    %v34 = vld [vmem:[%s1 + $0x68] sm:$0xff]
    %v35 = vld [vmem:[%s1 + $0x70] sm:$0xff]
    %v36 = vld [vmem:[%s1 + $0x78] sm:$0xff]
    %v37 = vld [vmem:[%s1 + $0x80] sm:$0xff]
    %v38 = vld [vmem:[%s1 + $0x88] sm:$0xff]
    %v39 = vld [vmem:[%s1 + $0x90] sm:$0xff]
    %v40 = vld [vmem:[%s1 + $0x98] sm:$0xff]
    %v41 = vld [vmem:[%s1 + $0xa0] sm:$0xff]
    %v42 = vld [vmem:[%s1 + $0xa8] sm:$0xff]
    %v43 = vld [vmem:[%s1 + $0xb0] sm:$0xff]
    %v44 = vld [vmem:[%s1 + $0xb8] sm:$0xff]
    %v45 = vld [vmem:[%s1 + $0xc0] sm:$0xff]
    %v46 = vld [vmem:[%s1 + $0xc8] sm:$0xff]
    %v47 = vld [vmem:[%s1 + $0xd0] sm:$0xff]
    %v48 = vld [vmem:[%s1 + $0xd8] sm:$0xff]
    %v49 = vld [vmem:[%s1 + $0xe0] sm:$0xff]
    %v50 = vld [vmem:[%s1 + $0xe8] sm:$0xff]
    %v51 = vld [vmem:[%s1 + $0xf0] sm:$0xff]
    %v52 = vld [vmem:[%s1 + $0xf8] sm:$0xff]
    %v53 = vld [vmem:[%s1 + $0x100] sm:$0xff]
    %v54 = vld [vmem:[%s1 + $0x108] sm:$0xff]
    %v55 = vld [vmem:[%s1 + $0x110] sm:$0xff]
    %v56 = vld [vmem:[%s1 + $0x118] sm:$0xff]
    %v57 = vld [vmem:[%s1 + $0x120] sm:$0xff]
    %v58 = vld [vmem:[%s1 + $0x128] sm:$0xff]
    %v59 = vld [vmem:[%s1 + $0x130] sm:$0xff]
    %v60 = vld [vmem:[%s1 + $0x138] sm:$0xff]
    %v61 = vld [vmem:[%s1 + $0x140] sm:$0xff]
    %v62 = vld [vmem:[%s1 + $0x148] sm:$0xff]
    %v63 = vld [vmem:[%s1 + $0x150] sm:$0xff]
    %v64 = vld [vmem:[%s1 + $0x158] sm:$0xff]
    %v65 = vld [vmem:[%s1 + $0x160] sm:$0xff]
    %v66 = vld [vmem:[%s1 + $0x168] sm:$0xff]
    %v67 = vld [vmem:[%s1 + $0x170] sm:$0xff]
    %v68 = vld [vmem:[%s1 + $0x178] sm:$0xff]
    %v69 = vld [vmem:[%s2] sm:$0xf]
    %v70 = vld [vmem:[%s3] sm:$0xf]
    %v71 = vld [vmem:[%s4] sm:$0xff]
    %v72 = vld [vmem:[%s4 + $0x8] sm:$0xff]
    %v73 = vld [vmem:[%s4 + $0x10] sm:$0xff]
    %v74 = vld [vmem:[%s4 + $0x18] sm:$0xff]
    %v75 = vld [vmem:[%s4 + $0x20] sm:$0xff]
    %v76 = vld [vmem:[%s4 + $0x28] sm:$0xff]
    %v77 = vld [vmem:[%s4 + $0x30] sm:$0xff]
    %v78 = vld [vmem:[%s4 + $0x38] sm:$0xff]
    %v79 = vld [vmem:[%s4 + $0x40] sm:$0xff]
    %v80 = vld [vmem:[%s4 + $0x48] sm:$0xff]
    %v81 = vld [vmem:[%s4 + $0x50] sm:$0xff]
    %v82 = vld [vmem:[%s4 + $0x58] sm:$0xff]
    %v83 = vld [vmem:[%s4 + $0x60] sm:$0xff]
    %v84 = vld [vmem:[%s4 + $0x68] sm:$0xff]
    %v85 = vld [vmem:[%s4 + $0x70] sm:$0xff]
    %v86 = vld [vmem:[%s4 + $0x78] sm:$0xff]
    %v87 = vld [vmem:[%s0] sm:$0xff]
    %89 = vset.pattern.permute.xlu0 0
    %90 = vperm.xlu0 %89, %v37
    %v91 = vpop.permute.xlu0 %90
    %94 = vset.pattern.permute.xlu0 0
    %95 = vperm.xlu0 %94, %v38
    %v96 = vpop.permute.xlu0 %95
    %99 = vset.pattern.permute.xlu0 0
    %100 = vperm.xlu0 %99, %v39
    %v101 = vpop.permute.xlu0 %100
    %104 = vset.pattern.permute.xlu0 0
    %105 = vperm.xlu0 %104, %v40
    %v106 = vpop.permute.xlu0 %105
    %109 = vset.pattern.permute.xlu0 0
    %110 = vperm.xlu0 %109, %v41
    %v111 = vpop.permute.xlu0 %110
    %114 = vset.pattern.permute.xlu0 0
    %115 = vperm.xlu0 %114, %v42
    %v116 = vpop.permute.xlu0 %115
    %119 = vset.pattern.permute.xlu0 0
    %120 = vperm.xlu0 %119, %v43
    %v121 = vpop.permute.xlu0 %120
    %124 = vset.pattern.permute.xlu0 0
    %125 = vperm.xlu0 %124, %v44
    %v126 = vpop.permute.xlu0 %125
    %129 = vset.pattern.permute.xlu0 0
    %130 = vperm.xlu0 %129, %v45
    %v131 = vpop.permute.xlu0 %130
    %134 = vset.pattern.permute.xlu0 0
    %135 = vperm.xlu0 %134, %v46
    %v136 = vpop.permute.xlu0 %135
    %139 = vset.pattern.permute.xlu0 0
    %140 = vperm.xlu0 %139, %v47
    %v141 = vpop.permute.xlu0 %140
    %144 = vset.pattern.permute.xlu0 0
    %145 = vperm.xlu0 %144, %v48
    %v146 = vpop.permute.xlu0 %145
    %149 = vset.pattern.permute.xlu0 0
    %150 = vperm.xlu0 %149, %v49
    %v151 = vpop.permute.xlu0 %150
    %154 = vset.pattern.permute.xlu0 0
    %155 = vperm.xlu0 %154, %v50
    %v156 = vpop.permute.xlu0 %155
    %159 = vset.pattern.permute.xlu0 0
    %160 = vperm.xlu0 %159, %v51
    %v161 = vpop.permute.xlu0 %160
    %164 = vset.pattern.permute.xlu0 0
    %165 = vperm.xlu0 %164, %v52
    %v166 = vpop.permute.xlu0 %165
    %v169 = vperm.slane %v87, 0
    %v170 = vperm.slane %v87, 4
    %v173 = vperm.slane %v169, 0
    %v174 = vperm.slane %v170, 0
    %v175 = vmul.f32 %v91, %v173
    %v176 = vmul.f32 %v91, %v174
    %v177 = vmul.f32 %v96, %v173
    %v178 = vmul.f32 %v96, %v174
    %v179 = vmul.f32 %v101, %v173
    %v180 = vmul.f32 %v101, %v174
    %v181 = vmul.f32 %v106, %v173
    %v182 = vmul.f32 %v106, %v174
    %v183 = vmul.f32 %v111, %v173
    %v184 = vmul.f32 %v111, %v174
    %v185 = vmul.f32 %v116, %v173
    %v186 = vmul.f32 %v116, %v174
    %v187 = vmul.f32 %v121, %v173
    %v188 = vmul.f32 %v121, %v174
    %v189 = vmul.f32 %v126, %v173
    %v190 = vmul.f32 %v126, %v174
    %v191 = vmul.f32 %v131, %v173
    %v192 = vmul.f32 %v131, %v174
    %v193 = vmul.f32 %v136, %v173
    %v194 = vmul.f32 %v136, %v174
    %v195 = vmul.f32 %v141, %v173
    %v196 = vmul.f32 %v141, %v174
    %v197 = vmul.f32 %v146, %v173
    %v198 = vmul.f32 %v146, %v174
    %v199 = vmul.f32 %v151, %v173
    %v200 = vmul.f32 %v151, %v174
    %v201 = vmul.f32 %v156, %v173
    %v202 = vmul.f32 %v156, %v174
    %v203 = vmul.f32 %v161, %v173
    %v204 = vmul.f32 %v161, %v174
    %v205 = vmul.f32 %v166, %v173
    %v206 = vmul.f32 %v166, %v174
    %207 = vset.pattern.permute.xlu0 1
    %208 = vperm.xlu0 %207, %v37
    %v209 = vpop.permute.xlu0 %208
    %211 = vset.pattern.permute.xlu0 1
    %212 = vperm.xlu0 %211, %v38
    %v213 = vpop.permute.xlu0 %212
    %215 = vset.pattern.permute.xlu0 1
    %216 = vperm.xlu0 %215, %v39
    %v217 = vpop.permute.xlu0 %216
    %219 = vset.pattern.permute.xlu0 1
    %220 = vperm.xlu0 %219, %v40
    %v221 = vpop.permute.xlu0 %220
    %223 = vset.pattern.permute.xlu0 1
    %224 = vperm.xlu0 %223, %v41
    %v225 = vpop.permute.xlu0 %224
    %227 = vset.pattern.permute.xlu0 1
    %228 = vperm.xlu0 %227, %v42
    %v229 = vpop.permute.xlu0 %228
    %231 = vset.pattern.permute.xlu0 1
    %232 = vperm.xlu0 %231, %v43
    %v233 = vpop.permute.xlu0 %232
    %235 = vset.pattern.permute.xlu0 1
    %236 = vperm.xlu0 %235, %v44
    %v237 = vpop.permute.xlu0 %236
    %239 = vset.pattern.permute.xlu0 1
    %240 = vperm.xlu0 %239, %v45
    %v241 = vpop.permute.xlu0 %240
    %243 = vset.pattern.permute.xlu0 1
    %244 = vperm.xlu0 %243, %v46
    %v245 = vpop.permute.xlu0 %244
    %247 = vset.pattern.permute.xlu0 1
    %248 = vperm.xlu0 %247, %v47
    %v249 = vpop.permute.xlu0 %248
    %251 = vset.pattern.permute.xlu0 1
    %252 = vperm.xlu0 %251, %v48
    %v253 = vpop.permute.xlu0 %252
    %255 = vset.pattern.permute.xlu0 1
    %256 = vperm.xlu0 %255, %v49
    %v257 = vpop.permute.xlu0 %256
    %259 = vset.pattern.permute.xlu0 1
    %260 = vperm.xlu0 %259, %v50
    %v261 = vpop.permute.xlu0 %260
    %263 = vset.pattern.permute.xlu0 1
    %264 = vperm.xlu0 %263, %v51
    %v265 = vpop.permute.xlu0 %264
    %267 = vset.pattern.permute.xlu0 1
    %268 = vperm.xlu0 %267, %v52
    %v269 = vpop.permute.xlu0 %268
    %v271 = vperm.slane %v87, 1
    %v272 = vperm.slane %v87, 5
    %v275 = vperm.slane %v271, 1
    %v276 = vperm.slane %v272, 1
    %v277 = vmul.f32 %v209, %v275
    %v278 = vmul.f32 %v209, %v276
    %v279 = vmul.f32 %v213, %v275
    %v280 = vmul.f32 %v213, %v276
    %v281 = vmul.f32 %v217, %v275
    %v282 = vmul.f32 %v217, %v276
    %v283 = vmul.f32 %v221, %v275
    %v284 = vmul.f32 %v221, %v276
    %v285 = vmul.f32 %v225, %v275
    %v286 = vmul.f32 %v225, %v276
    %v287 = vmul.f32 %v229, %v275
    %v288 = vmul.f32 %v229, %v276
    %v289 = vmul.f32 %v233, %v275
    %v290 = vmul.f32 %v233, %v276
    %v291 = vmul.f32 %v237, %v275
    %v292 = vmul.f32 %v237, %v276
    %v293 = vmul.f32 %v241, %v275
    %v294 = vmul.f32 %v241, %v276
    %v295 = vmul.f32 %v245, %v275
    %v296 = vmul.f32 %v245, %v276
    %v297 = vmul.f32 %v249, %v275
    %v298 = vmul.f32 %v249, %v276
    %v299 = vmul.f32 %v253, %v275
    %v300 = vmul.f32 %v253, %v276
    %v301 = vmul.f32 %v257, %v275
    %v302 = vmul.f32 %v257, %v276
    %v303 = vmul.f32 %v261, %v275
    %v304 = vmul.f32 %v261, %v276
    %v305 = vmul.f32 %v265, %v275
    %v306 = vmul.f32 %v265, %v276
    %v307 = vmul.f32 %v269, %v275
    %v308 = vmul.f32 %v269, %v276
    %v309 = vadd.f32 %v175, %v277
    %v310 = vadd.f32 %v176, %v278
    %v311 = vadd.f32 %v177, %v279
    %v312 = vadd.f32 %v178, %v280
    %v313 = vadd.f32 %v179, %v281
    %v314 = vadd.f32 %v180, %v282
    %v315 = vadd.f32 %v181, %v283
    %v316 = vadd.f32 %v182, %v284
    %v317 = vadd.f32 %v183, %v285
    %v318 = vadd.f32 %v184, %v286
    %v319 = vadd.f32 %v185, %v287
    %v320 = vadd.f32 %v186, %v288
    %v321 = vadd.f32 %v187, %v289
    %v322 = vadd.f32 %v188, %v290
    %v323 = vadd.f32 %v189, %v291
    %v324 = vadd.f32 %v190, %v292
    %v325 = vadd.f32 %v191, %v293
    %v326 = vadd.f32 %v192, %v294
    %v327 = vadd.f32 %v193, %v295
    %v328 = vadd.f32 %v194, %v296
    %v329 = vadd.f32 %v195, %v297
    %v330 = vadd.f32 %v196, %v298
    %v331 = vadd.f32 %v197, %v299
    %v332 = vadd.f32 %v198, %v300
    %v333 = vadd.f32 %v199, %v301
    %v334 = vadd.f32 %v200, %v302
    %v335 = vadd.f32 %v201, %v303
    %v336 = vadd.f32 %v202, %v304
    %v337 = vadd.f32 %v203, %v305
    %v338 = vadd.f32 %v204, %v306
    %v339 = vadd.f32 %v205, %v307
    %v340 = vadd.f32 %v206, %v308
    %341 = vset.pattern.permute.xlu0 2
    %342 = vperm.xlu0 %341, %v37
    %v343 = vpop.permute.xlu0 %342
    %345 = vset.pattern.permute.xlu0 2
    %346 = vperm.xlu0 %345, %v38
    %v347 = vpop.permute.xlu0 %346
    %349 = vset.pattern.permute.xlu0 2
    %350 = vperm.xlu0 %349, %v39
    %v351 = vpop.permute.xlu0 %350
    %353 = vset.pattern.permute.xlu0 2
    %354 = vperm.xlu0 %353, %v40
    %v355 = vpop.permute.xlu0 %354
    %357 = vset.pattern.permute.xlu0 2
    %358 = vperm.xlu0 %357, %v41
    %v359 = vpop.permute.xlu0 %358
    %361 = vset.pattern.permute.xlu0 2
    %362 = vperm.xlu0 %361, %v42
    %v363 = vpop.permute.xlu0 %362
    %365 = vset.pattern.permute.xlu0 2
    %366 = vperm.xlu0 %365, %v43
    %v367 = vpop.permute.xlu0 %366
    %369 = vset.pattern.permute.xlu0 2
    %370 = vperm.xlu0 %369, %v44
    %v371 = vpop.permute.xlu0 %370
    %373 = vset.pattern.permute.xlu0 2
    %374 = vperm.xlu0 %373, %v45
    %v375 = vpop.permute.xlu0 %374
    %377 = vset.pattern.permute.xlu0 2
    %378 = vperm.xlu0 %377, %v46
    %v379 = vpop.permute.xlu0 %378
    %381 = vset.pattern.permute.xlu0 2
    %382 = vperm.xlu0 %381, %v47
    %v383 = vpop.permute.xlu0 %382
    %385 = vset.pattern.permute.xlu0 2
    %386 = vperm.xlu0 %385, %v48
    %v387 = vpop.permute.xlu0 %386
    %389 = vset.pattern.permute.xlu0 2
    %390 = vperm.xlu0 %389, %v49
    %v391 = vpop.permute.xlu0 %390
    %393 = vset.pattern.permute.xlu0 2
    %394 = vperm.xlu0 %393, %v50
    %v395 = vpop.permute.xlu0 %394
    %397 = vset.pattern.permute.xlu0 2
    %398 = vperm.xlu0 %397, %v51
    %v399 = vpop.permute.xlu0 %398
    %401 = vset.pattern.permute.xlu0 2
    %402 = vperm.xlu0 %401, %v52
    %v403 = vpop.permute.xlu0 %402
    %v405 = vperm.slane %v87, 2
    %v406 = vperm.slane %v87, 6
    %v409 = vperm.slane %v405, 2
    %v410 = vperm.slane %v406, 2
    %v411 = vmul.f32 %v343, %v409
    %v412 = vmul.f32 %v343, %v410
    %v413 = vmul.f32 %v347, %v409
    %v414 = vmul.f32 %v347, %v410
    %v415 = vmul.f32 %v351, %v409
    %v416 = vmul.f32 %v351, %v410
    %v417 = vmul.f32 %v355, %v409
    %v418 = vmul.f32 %v355, %v410
    %v419 = vmul.f32 %v359, %v409
    %v420 = vmul.f32 %v359, %v410
    %v421 = vmul.f32 %v363, %v409
    %v422 = vmul.f32 %v363, %v410
    %v423 = vmul.f32 %v367, %v409
    %v424 = vmul.f32 %v367, %v410
    %v425 = vmul.f32 %v371, %v409
    %v426 = vmul.f32 %v371, %v410
    %v427 = vmul.f32 %v375, %v409
    %v428 = vmul.f32 %v375, %v410
    %v429 = vmul.f32 %v379, %v409
    %v430 = vmul.f32 %v379, %v410
    %v431 = vmul.f32 %v383, %v409
    %v432 = vmul.f32 %v383, %v410
    %v433 = vmul.f32 %v387, %v409
    %v434 = vmul.f32 %v387, %v410
    %v435 = vmul.f32 %v391, %v409
    %v436 = vmul.f32 %v391, %v410
    %v437 = vmul.f32 %v395, %v409
    %v438 = vmul.f32 %v395, %v410
    %v439 = vmul.f32 %v399, %v409
    %v440 = vmul.f32 %v399, %v410
    %v441 = vmul.f32 %v403, %v409
    %v442 = vmul.f32 %v403, %v410
    %v443 = vadd.f32 %v309, %v411
    %v444 = vadd.f32 %v310, %v412
    %v445 = vadd.f32 %v311, %v413
    %v446 = vadd.f32 %v312, %v414
    %v447 = vadd.f32 %v313, %v415
    %v448 = vadd.f32 %v314, %v416
    %v449 = vadd.f32 %v315, %v417
    %v450 = vadd.f32 %v316, %v418
    %v451 = vadd.f32 %v317, %v419
    %v452 = vadd.f32 %v318, %v420
    %v453 = vadd.f32 %v319, %v421
    %v454 = vadd.f32 %v320, %v422
    %v455 = vadd.f32 %v321, %v423
    %v456 = vadd.f32 %v322, %v424
    %v457 = vadd.f32 %v323, %v425
    %v458 = vadd.f32 %v324, %v426
    %v459 = vadd.f32 %v325, %v427
    %v460 = vadd.f32 %v326, %v428
    %v461 = vadd.f32 %v327, %v429
    %v462 = vadd.f32 %v328, %v430
    %v463 = vadd.f32 %v329, %v431
    %v464 = vadd.f32 %v330, %v432
    %v465 = vadd.f32 %v331, %v433
    %v466 = vadd.f32 %v332, %v434
    %v467 = vadd.f32 %v333, %v435
    %v468 = vadd.f32 %v334, %v436
    %v469 = vadd.f32 %v335, %v437
    %v470 = vadd.f32 %v336, %v438
    %v471 = vadd.f32 %v337, %v439
    %v472 = vadd.f32 %v338, %v440
    %v473 = vadd.f32 %v339, %v441
    %v474 = vadd.f32 %v340, %v442
    %475 = vset.pattern.permute.xlu0 3
    %476 = vperm.xlu0 %475, %v37
    %v477 = vpop.permute.xlu0 %476
    %479 = vset.pattern.permute.xlu0 3
    %480 = vperm.xlu0 %479, %v38
    %v481 = vpop.permute.xlu0 %480
    %483 = vset.pattern.permute.xlu0 3
    %484 = vperm.xlu0 %483, %v39
    %v485 = vpop.permute.xlu0 %484
    %487 = vset.pattern.permute.xlu0 3
    %488 = vperm.xlu0 %487, %v40
    %v489 = vpop.permute.xlu0 %488
    %491 = vset.pattern.permute.xlu0 3
    %492 = vperm.xlu0 %491, %v41
    %v493 = vpop.permute.xlu0 %492
    %495 = vset.pattern.permute.xlu0 3
    %496 = vperm.xlu0 %495, %v42
    %v497 = vpop.permute.xlu0 %496
    %499 = vset.pattern.permute.xlu0 3
    %500 = vperm.xlu0 %499, %v43
    %v501 = vpop.permute.xlu0 %500
    %503 = vset.pattern.permute.xlu0 3
    %504 = vperm.xlu0 %503, %v44
    %v505 = vpop.permute.xlu0 %504
    %507 = vset.pattern.permute.xlu0 3
    %508 = vperm.xlu0 %507, %v45
    %v509 = vpop.permute.xlu0 %508
    %511 = vset.pattern.permute.xlu0 3
    %512 = vperm.xlu0 %511, %v46
    %v513 = vpop.permute.xlu0 %512
    %515 = vset.pattern.permute.xlu0 3
    %516 = vperm.xlu0 %515, %v47
    %v517 = vpop.permute.xlu0 %516
    %519 = vset.pattern.permute.xlu0 3
    %520 = vperm.xlu0 %519, %v48
    %v521 = vpop.permute.xlu0 %520
    %523 = vset.pattern.permute.xlu0 3
    %524 = vperm.xlu0 %523, %v49
    %v525 = vpop.permute.xlu0 %524
    %527 = vset.pattern.permute.xlu0 3
    %528 = vperm.xlu0 %527, %v50
    %v529 = vpop.permute.xlu0 %528
    %531 = vset.pattern.permute.xlu0 3
    %532 = vperm.xlu0 %531, %v51
    %v533 = vpop.permute.xlu0 %532
    %535 = vset.pattern.permute.xlu0 3
    %536 = vperm.xlu0 %535, %v52
    %v537 = vpop.permute.xlu0 %536
    %v539 = vperm.slane %v87, 3
    %v540 = vperm.slane %v87, 7
    %v543 = vperm.slane %v539, 3
    %v544 = vperm.slane %v540, 3
    %v545 = vmul.f32 %v477, %v543
    %v546 = vmul.f32 %v477, %v544
    %v547 = vmul.f32 %v481, %v543
    %v548 = vmul.f32 %v481, %v544
    %v549 = vmul.f32 %v485, %v543
    %v550 = vmul.f32 %v485, %v544
    %v551 = vmul.f32 %v489, %v543
    %v552 = vmul.f32 %v489, %v544
    %v553 = vmul.f32 %v493, %v543
    %v554 = vmul.f32 %v493, %v544
    %v555 = vmul.f32 %v497, %v543
    %v556 = vmul.f32 %v497, %v544
    %v557 = vmul.f32 %v501, %v543
    %v558 = vmul.f32 %v501, %v544
    %v559 = vmul.f32 %v505, %v543
    %v560 = vmul.f32 %v505, %v544
    %v561 = vmul.f32 %v509, %v543
    %v562 = vmul.f32 %v509, %v544
    %v563 = vmul.f32 %v513, %v543
    %v564 = vmul.f32 %v513, %v544
    %v565 = vmul.f32 %v517, %v543
    %v566 = vmul.f32 %v517, %v544
    %v567 = vmul.f32 %v521, %v543
    %v568 = vmul.f32 %v521, %v544
    %v569 = vmul.f32 %v525, %v543
    %v570 = vmul.f32 %v525, %v544
    %v571 = vmul.f32 %v529, %v543
    %v572 = vmul.f32 %v529, %v544
    %v573 = vmul.f32 %v533, %v543
    %v574 = vmul.f32 %v533, %v544
    %v575 = vmul.f32 %v537, %v543
    %v576 = vmul.f32 %v537, %v544
    %v577 = vadd.f32 %v443, %v545
    %v578 = vadd.f32 %v444, %v546
    %v579 = vadd.f32 %v445, %v547
    %v580 = vadd.f32 %v446, %v548
    %v581 = vadd.f32 %v447, %v549
    %v582 = vadd.f32 %v448, %v550
    %v583 = vadd.f32 %v449, %v551
    %v584 = vadd.f32 %v450, %v552
    %v585 = vadd.f32 %v451, %v553
    %v586 = vadd.f32 %v452, %v554
    %v587 = vadd.f32 %v453, %v555
    %v588 = vadd.f32 %v454, %v556
    %v589 = vadd.f32 %v455, %v557
    %v590 = vadd.f32 %v456, %v558
    %v591 = vadd.f32 %v457, %v559
    %v592 = vadd.f32 %v458, %v560
    %v593 = vadd.f32 %v459, %v561
    %v594 = vadd.f32 %v460, %v562
    %v595 = vadd.f32 %v461, %v563
    %v596 = vadd.f32 %v462, %v564
    %v597 = vadd.f32 %v463, %v565
    %v598 = vadd.f32 %v464, %v566
    %v599 = vadd.f32 %v465, %v567
    %v600 = vadd.f32 %v466, %v568
    %v601 = vadd.f32 %v467, %v569
    %v602 = vadd.f32 %v468, %v570
    %v603 = vadd.f32 %v469, %v571
    %v604 = vadd.f32 %v470, %v572
    %v605 = vadd.f32 %v471, %v573
    %v606 = vadd.f32 %v472, %v574
    %v607 = vadd.f32 %v473, %v575
    %v608 = vadd.f32 %v474, %v576
    %610 = vset.pattern.permute.xlu0 0
    %611 = vperm.xlu0 %610, %v53
    %v612 = vpop.permute.xlu0 %611
    %615 = vset.pattern.permute.xlu0 0
    %616 = vperm.xlu0 %615, %v54
    %v617 = vpop.permute.xlu0 %616
    %620 = vset.pattern.permute.xlu0 0
    %621 = vperm.xlu0 %620, %v55
    %v622 = vpop.permute.xlu0 %621
    %625 = vset.pattern.permute.xlu0 0
    %626 = vperm.xlu0 %625, %v56
    %v627 = vpop.permute.xlu0 %626
    %630 = vset.pattern.permute.xlu0 0
    %631 = vperm.xlu0 %630, %v57
    %v632 = vpop.permute.xlu0 %631
    %635 = vset.pattern.permute.xlu0 0
    %636 = vperm.xlu0 %635, %v58
    %v637 = vpop.permute.xlu0 %636
    %640 = vset.pattern.permute.xlu0 0
    %641 = vperm.xlu0 %640, %v59
    %v642 = vpop.permute.xlu0 %641
    %645 = vset.pattern.permute.xlu0 0
    %646 = vperm.xlu0 %645, %v60
    %v647 = vpop.permute.xlu0 %646
    %650 = vset.pattern.permute.xlu0 0
    %651 = vperm.xlu0 %650, %v61
    %v652 = vpop.permute.xlu0 %651
    %655 = vset.pattern.permute.xlu0 0
    %656 = vperm.xlu0 %655, %v62
    %v657 = vpop.permute.xlu0 %656
    %660 = vset.pattern.permute.xlu0 0
    %661 = vperm.xlu0 %660, %v63
    %v662 = vpop.permute.xlu0 %661
    %665 = vset.pattern.permute.xlu0 0
    %666 = vperm.xlu0 %665, %v64
    %v667 = vpop.permute.xlu0 %666
    %670 = vset.pattern.permute.xlu0 0
    %671 = vperm.xlu0 %670, %v65
    %v672 = vpop.permute.xlu0 %671
    %675 = vset.pattern.permute.xlu0 0
    %676 = vperm.xlu0 %675, %v66
    %v677 = vpop.permute.xlu0 %676
    %680 = vset.pattern.permute.xlu0 0
    %681 = vperm.xlu0 %680, %v67
    %v682 = vpop.permute.xlu0 %681
    %685 = vset.pattern.permute.xlu0 0
    %686 = vperm.xlu0 %685, %v68
    %v687 = vpop.permute.xlu0 %686
    %v689 = vmul.f32 %v612, %v173
    %v690 = vmul.f32 %v612, %v174
    %v691 = vmul.f32 %v617, %v173
    %v692 = vmul.f32 %v617, %v174
    %v693 = vmul.f32 %v622, %v173
    %v694 = vmul.f32 %v622, %v174
    %v695 = vmul.f32 %v627, %v173
    %v696 = vmul.f32 %v627, %v174
    %v697 = vmul.f32 %v632, %v173
    %v698 = vmul.f32 %v632, %v174
    %v699 = vmul.f32 %v637, %v173
    %v700 = vmul.f32 %v637, %v174
    %v701 = vmul.f32 %v642, %v173
    %v702 = vmul.f32 %v642, %v174
    %v703 = vmul.f32 %v647, %v173
    %v704 = vmul.f32 %v647, %v174
    %v705 = vmul.f32 %v652, %v173
    %v706 = vmul.f32 %v652, %v174
    %v707 = vmul.f32 %v657, %v173
    %v708 = vmul.f32 %v657, %v174
    %v709 = vmul.f32 %v662, %v173
    %v710 = vmul.f32 %v662, %v174
    %v711 = vmul.f32 %v667, %v173
    %v712 = vmul.f32 %v667, %v174
    %v713 = vmul.f32 %v672, %v173
    %v714 = vmul.f32 %v672, %v174
    %v715 = vmul.f32 %v677, %v173
    %v716 = vmul.f32 %v677, %v174
    %v717 = vmul.f32 %v682, %v173
    %v718 = vmul.f32 %v682, %v174
    %v719 = vmul.f32 %v687, %v173
    %v720 = vmul.f32 %v687, %v174
    %721 = vset.pattern.permute.xlu0 1
    %722 = vperm.xlu0 %721, %v53
    %v723 = vpop.permute.xlu0 %722
    %725 = vset.pattern.permute.xlu0 1
    %726 = vperm.xlu0 %725, %v54
    %v727 = vpop.permute.xlu0 %726
    %729 = vset.pattern.permute.xlu0 1
    %730 = vperm.xlu0 %729, %v55
    %v731 = vpop.permute.xlu0 %730
    %733 = vset.pattern.permute.xlu0 1
    %734 = vperm.xlu0 %733, %v56
    %v735 = vpop.permute.xlu0 %734
    %737 = vset.pattern.permute.xlu0 1
    %738 = vperm.xlu0 %737, %v57
    %v739 = vpop.permute.xlu0 %738
    %741 = vset.pattern.permute.xlu0 1
    %742 = vperm.xlu0 %741, %v58
    %v743 = vpop.permute.xlu0 %742
    %745 = vset.pattern.permute.xlu0 1
    %746 = vperm.xlu0 %745, %v59
    %v747 = vpop.permute.xlu0 %746
    %749 = vset.pattern.permute.xlu0 1
    %750 = vperm.xlu0 %749, %v60
    %v751 = vpop.permute.xlu0 %750
    %753 = vset.pattern.permute.xlu0 1
    %754 = vperm.xlu0 %753, %v61
    %v755 = vpop.permute.xlu0 %754
    %757 = vset.pattern.permute.xlu0 1
    %758 = vperm.xlu0 %757, %v62
    %v759 = vpop.permute.xlu0 %758
    %761 = vset.pattern.permute.xlu0 1
    %762 = vperm.xlu0 %761, %v63
    %v763 = vpop.permute.xlu0 %762
    %765 = vset.pattern.permute.xlu0 1
    %766 = vperm.xlu0 %765, %v64
    %v767 = vpop.permute.xlu0 %766
    %769 = vset.pattern.permute.xlu0 1
    %770 = vperm.xlu0 %769, %v65
    %v771 = vpop.permute.xlu0 %770
    %773 = vset.pattern.permute.xlu0 1
    %774 = vperm.xlu0 %773, %v66
    %v775 = vpop.permute.xlu0 %774
    %777 = vset.pattern.permute.xlu0 1
    %778 = vperm.xlu0 %777, %v67
    %v779 = vpop.permute.xlu0 %778
    %781 = vset.pattern.permute.xlu0 1
    %782 = vperm.xlu0 %781, %v68
    %v783 = vpop.permute.xlu0 %782
    %v785 = vmul.f32 %v723, %v275
    %v786 = vmul.f32 %v723, %v276
    %v787 = vmul.f32 %v727, %v275
    %v788 = vmul.f32 %v727, %v276
    %v789 = vmul.f32 %v731, %v275
    %v790 = vmul.f32 %v731, %v276
    %v791 = vmul.f32 %v735, %v275
    %v792 = vmul.f32 %v735, %v276
    %v793 = vmul.f32 %v739, %v275
    %v794 = vmul.f32 %v739, %v276
    %v795 = vmul.f32 %v743, %v275
    %v796 = vmul.f32 %v743, %v276
    %v797 = vmul.f32 %v747, %v275
    %v798 = vmul.f32 %v747, %v276
    %v799 = vmul.f32 %v751, %v275
    %v800 = vmul.f32 %v751, %v276
    %v801 = vmul.f32 %v755, %v275
    %v802 = vmul.f32 %v755, %v276
    %v803 = vmul.f32 %v759, %v275
    %v804 = vmul.f32 %v759, %v276
    %v805 = vmul.f32 %v763, %v275
    %v806 = vmul.f32 %v763, %v276
    %v807 = vmul.f32 %v767, %v275
    %v808 = vmul.f32 %v767, %v276
    %v809 = vmul.f32 %v771, %v275
    %v810 = vmul.f32 %v771, %v276
    %v811 = vmul.f32 %v775, %v275
    %v812 = vmul.f32 %v775, %v276
    %v813 = vmul.f32 %v779, %v275
    %v814 = vmul.f32 %v779, %v276
    %v815 = vmul.f32 %v783, %v275
    %v816 = vmul.f32 %v783, %v276
    %v817 = vadd.f32 %v689, %v785
    %v818 = vadd.f32 %v690, %v786
    %v819 = vadd.f32 %v691, %v787
    %v820 = vadd.f32 %v692, %v788
    %v821 = vadd.f32 %v693, %v789
    %v822 = vadd.f32 %v694, %v790
    %v823 = vadd.f32 %v695, %v791
    %v824 = vadd.f32 %v696, %v792
    %v825 = vadd.f32 %v697, %v793
    %v826 = vadd.f32 %v698, %v794
    %v827 = vadd.f32 %v699, %v795
    %v828 = vadd.f32 %v700, %v796
    %v829 = vadd.f32 %v701, %v797
    %v830 = vadd.f32 %v702, %v798
    %v831 = vadd.f32 %v703, %v799
    %v832 = vadd.f32 %v704, %v800
    %v833 = vadd.f32 %v705, %v801
    %v834 = vadd.f32 %v706, %v802
    %v835 = vadd.f32 %v707, %v803
    %v836 = vadd.f32 %v708, %v804
    %v837 = vadd.f32 %v709, %v805
    %v838 = vadd.f32 %v710, %v806
    %v839 = vadd.f32 %v711, %v807
    %v840 = vadd.f32 %v712, %v808
    %v841 = vadd.f32 %v713, %v809
    %v842 = vadd.f32 %v714, %v810
    %v843 = vadd.f32 %v715, %v811
    %v844 = vadd.f32 %v716, %v812
    %v845 = vadd.f32 %v717, %v813
    %v846 = vadd.f32 %v718, %v814
    %v847 = vadd.f32 %v719, %v815
    %v848 = vadd.f32 %v720, %v816
    %849 = vset.pattern.permute.xlu0 2
    %850 = vperm.xlu0 %849, %v53
    %v851 = vpop.permute.xlu0 %850
    %853 = vset.pattern.permute.xlu0 2
    %854 = vperm.xlu0 %853, %v54
    %v855 = vpop.permute.xlu0 %854
    %857 = vset.pattern.permute.xlu0 2
    %858 = vperm.xlu0 %857, %v55
    %v859 = vpop.permute.xlu0 %858
    %861 = vset.pattern.permute.xlu0 2
    %862 = vperm.xlu0 %861, %v56
    %v863 = vpop.permute.xlu0 %862
    %865 = vset.pattern.permute.xlu0 2
    %866 = vperm.xlu0 %865, %v57
    %v867 = vpop.permute.xlu0 %866
    %869 = vset.pattern.permute.xlu0 2
    %870 = vperm.xlu0 %869, %v58
    %v871 = vpop.permute.xlu0 %870
    %873 = vset.pattern.permute.xlu0 2
    %874 = vperm.xlu0 %873, %v59
    %v875 = vpop.permute.xlu0 %874
    %877 = vset.pattern.permute.xlu0 2
    %878 = vperm.xlu0 %877, %v60
    %v879 = vpop.permute.xlu0 %878
    %881 = vset.pattern.permute.xlu0 2
    %882 = vperm.xlu0 %881, %v61
    %v883 = vpop.permute.xlu0 %882
    %885 = vset.pattern.permute.xlu0 2
    %886 = vperm.xlu0 %885, %v62
    %v887 = vpop.permute.xlu0 %886
    %889 = vset.pattern.permute.xlu0 2
    %890 = vperm.xlu0 %889, %v63
    %v891 = vpop.permute.xlu0 %890
    %893 = vset.pattern.permute.xlu0 2
    %894 = vperm.xlu0 %893, %v64
    %v895 = vpop.permute.xlu0 %894
    %897 = vset.pattern.permute.xlu0 2
    %898 = vperm.xlu0 %897, %v65
    %v899 = vpop.permute.xlu0 %898
    %901 = vset.pattern.permute.xlu0 2
    %902 = vperm.xlu0 %901, %v66
    %v903 = vpop.permute.xlu0 %902
    %905 = vset.pattern.permute.xlu0 2
    %906 = vperm.xlu0 %905, %v67
    %v907 = vpop.permute.xlu0 %906
    %909 = vset.pattern.permute.xlu0 2
    %910 = vperm.xlu0 %909, %v68
    %v911 = vpop.permute.xlu0 %910
    %v913 = vmul.f32 %v851, %v409
    %v914 = vmul.f32 %v851, %v410
    %v915 = vmul.f32 %v855, %v409
    %v916 = vmul.f32 %v855, %v410
    %v917 = vmul.f32 %v859, %v409
    %v918 = vmul.f32 %v859, %v410
    %v919 = vmul.f32 %v863, %v409
    %v920 = vmul.f32 %v863, %v410
    %v921 = vmul.f32 %v867, %v409
    %v922 = vmul.f32 %v867, %v410
    %v923 = vmul.f32 %v871, %v409
    %v924 = vmul.f32 %v871, %v410
    %v925 = vmul.f32 %v875, %v409
    %v926 = vmul.f32 %v875, %v410
    %v927 = vmul.f32 %v879, %v409
    %v928 = vmul.f32 %v879, %v410
    %v929 = vmul.f32 %v883, %v409
    %v930 = vmul.f32 %v883, %v410
    %v931 = vmul.f32 %v887, %v409
    %v932 = vmul.f32 %v887, %v410
    %v933 = vmul.f32 %v891, %v409
    %v934 = vmul.f32 %v891, %v410
    %v935 = vmul.f32 %v895, %v409
    %v936 = vmul.f32 %v895, %v410
    %v937 = vmul.f32 %v899, %v409
    %v938 = vmul.f32 %v899, %v410
    %v939 = vmul.f32 %v903, %v409
    %v940 = vmul.f32 %v903, %v410
    %v941 = vmul.f32 %v907, %v409
    %v942 = vmul.f32 %v907, %v410
    %v943 = vmul.f32 %v911, %v409
    %v944 = vmul.f32 %v911, %v410
    %v945 = vadd.f32 %v817, %v913
    %v946 = vadd.f32 %v818, %v914
    %v947 = vadd.f32 %v819, %v915
    %v948 = vadd.f32 %v820, %v916
    %v949 = vadd.f32 %v821, %v917
    %v950 = vadd.f32 %v822, %v918
    %v951 = vadd.f32 %v823, %v919
    %v952 = vadd.f32 %v824, %v920
    %v953 = vadd.f32 %v825, %v921
    %v954 = vadd.f32 %v826, %v922
    %v955 = vadd.f32 %v827, %v923
    %v956 = vadd.f32 %v828, %v924
    %v957 = vadd.f32 %v829, %v925
    %v958 = vadd.f32 %v830, %v926
    %v959 = vadd.f32 %v831, %v927
    %v960 = vadd.f32 %v832, %v928
    %v961 = vadd.f32 %v833, %v929
    %v962 = vadd.f32 %v834, %v930
    %v963 = vadd.f32 %v835, %v931
    %v964 = vadd.f32 %v836, %v932
    %v965 = vadd.f32 %v837, %v933
    %v966 = vadd.f32 %v838, %v934
    %v967 = vadd.f32 %v839, %v935
    %v968 = vadd.f32 %v840, %v936
    %v969 = vadd.f32 %v841, %v937
    %v970 = vadd.f32 %v842, %v938
    %v971 = vadd.f32 %v843, %v939
    %v972 = vadd.f32 %v844, %v940
    %v973 = vadd.f32 %v845, %v941
    %v974 = vadd.f32 %v846, %v942
    %v975 = vadd.f32 %v847, %v943
    %v976 = vadd.f32 %v848, %v944
    %977 = vset.pattern.permute.xlu0 3
    %978 = vperm.xlu0 %977, %v53
    %v979 = vpop.permute.xlu0 %978
    %981 = vset.pattern.permute.xlu0 3
    %982 = vperm.xlu0 %981, %v54
    %v983 = vpop.permute.xlu0 %982
    %985 = vset.pattern.permute.xlu0 3
    %986 = vperm.xlu0 %985, %v55
    %v987 = vpop.permute.xlu0 %986
    %989 = vset.pattern.permute.xlu0 3
    %990 = vperm.xlu0 %989, %v56
    %v991 = vpop.permute.xlu0 %990
    %993 = vset.pattern.permute.xlu0 3
    %994 = vperm.xlu0 %993, %v57
    %v995 = vpop.permute.xlu0 %994
    %997 = vset.pattern.permute.xlu0 3
    %998 = vperm.xlu0 %997, %v58
    %v999 = vpop.permute.xlu0 %998
    %1001 = vset.pattern.permute.xlu0 3
    %1002 = vperm.xlu0 %1001, %v59
    %v1003 = vpop.permute.xlu0 %1002
    %1005 = vset.pattern.permute.xlu0 3
    %1006 = vperm.xlu0 %1005, %v60
    %v1007 = vpop.permute.xlu0 %1006
    %1009 = vset.pattern.permute.xlu0 3
    %1010 = vperm.xlu0 %1009, %v61
    %v1011 = vpop.permute.xlu0 %1010
    %1013 = vset.pattern.permute.xlu0 3
    %1014 = vperm.xlu0 %1013, %v62
    %v1015 = vpop.permute.xlu0 %1014
    %1017 = vset.pattern.permute.xlu0 3
    %1018 = vperm.xlu0 %1017, %v63
    %v1019 = vpop.permute.xlu0 %1018
    %1021 = vset.pattern.permute.xlu0 3
    %1022 = vperm.xlu0 %1021, %v64
    %v1023 = vpop.permute.xlu0 %1022
    %1025 = vset.pattern.permute.xlu0 3
    %1026 = vperm.xlu0 %1025, %v65
    %v1027 = vpop.permute.xlu0 %1026
    %1029 = vset.pattern.permute.xlu0 3
    %1030 = vperm.xlu0 %1029, %v66
    %v1031 = vpop.permute.xlu0 %1030
    %1033 = vset.pattern.permute.xlu0 3
    %1034 = vperm.xlu0 %1033, %v67
    %v1035 = vpop.permute.xlu0 %1034
    %1037 = vset.pattern.permute.xlu0 3
    %1038 = vperm.xlu0 %1037, %v68
    %v1039 = vpop.permute.xlu0 %1038
    %v1041 = vmul.f32 %v979, %v543
    %v1042 = vmul.f32 %v979, %v544
    %v1043 = vmul.f32 %v983, %v543
    %v1044 = vmul.f32 %v983, %v544
    %v1045 = vmul.f32 %v987, %v543
    %v1046 = vmul.f32 %v987, %v544
    %v1047 = vmul.f32 %v991, %v543
    %v1048 = vmul.f32 %v991, %v544
    %v1049 = vmul.f32 %v995, %v543
    %v1050 = vmul.f32 %v995, %v544
    %v1051 = vmul.f32 %v999, %v543
    %v1052 = vmul.f32 %v999, %v544
    %v1053 = vmul.f32 %v1003, %v543
    %v1054 = vmul.f32 %v1003, %v544
    %v1055 = vmul.f32 %v1007, %v543
    %v1056 = vmul.f32 %v1007, %v544
    %v1057 = vmul.f32 %v1011, %v543
    %v1058 = vmul.f32 %v1011, %v544
    %v1059 = vmul.f32 %v1015, %v543
    %v1060 = vmul.f32 %v1015, %v544
    %v1061 = vmul.f32 %v1019, %v543
    %v1062 = vmul.f32 %v1019, %v544
    %v1063 = vmul.f32 %v1023, %v543
    %v1064 = vmul.f32 %v1023, %v544
    %v1065 = vmul.f32 %v1027, %v543
    %v1066 = vmul.f32 %v1027, %v544
    %v1067 = vmul.f32 %v1031, %v543
    %v1068 = vmul.f32 %v1031, %v544
    %v1069 = vmul.f32 %v1035, %v543
    %v1070 = vmul.f32 %v1035, %v544
    %v1071 = vmul.f32 %v1039, %v543
    %v1072 = vmul.f32 %v1039, %v544
    %v1073 = vadd.f32 %v945, %v1041
    %v1074 = vadd.f32 %v946, %v1042
    %v1075 = vadd.f32 %v947, %v1043
    %v1076 = vadd.f32 %v948, %v1044
    %v1077 = vadd.f32 %v949, %v1045
    %v1078 = vadd.f32 %v950, %v1046
    %v1079 = vadd.f32 %v951, %v1047
    %v1080 = vadd.f32 %v952, %v1048
    %v1081 = vadd.f32 %v953, %v1049
    %v1082 = vadd.f32 %v954, %v1050
    %v1083 = vadd.f32 %v955, %v1051
    %v1084 = vadd.f32 %v956, %v1052
    %v1085 = vadd.f32 %v957, %v1053
    %v1086 = vadd.f32 %v958, %v1054
    %v1087 = vadd.f32 %v959, %v1055
    %v1088 = vadd.f32 %v960, %v1056
    %v1089 = vadd.f32 %v961, %v1057
    %v1090 = vadd.f32 %v962, %v1058
    %v1091 = vadd.f32 %v963, %v1059
    %v1092 = vadd.f32 %v964, %v1060
    %v1093 = vadd.f32 %v965, %v1061
    %v1094 = vadd.f32 %v966, %v1062
    %v1095 = vadd.f32 %v967, %v1063
    %v1096 = vadd.f32 %v968, %v1064
    %v1097 = vadd.f32 %v969, %v1065
    %v1098 = vadd.f32 %v970, %v1066
    %v1099 = vadd.f32 %v971, %v1067
    %v1100 = vadd.f32 %v972, %v1068
    %v1101 = vadd.f32 %v973, %v1069
    %v1102 = vadd.f32 %v974, %v1070
    %v1103 = vadd.f32 %v975, %v1071
    %v1104 = vadd.f32 %v976, %v1072
    %v1105 = vmax.f32 %v577, %v578
    %1106 = vmax.xlane.f32.xlu0 %v1105
    %v1107 = vpop.xlane.xlu0 %1106
    %v1108 = vmax.f32 %v579, %v580
    %1109 = vmax.xlane.f32.xlu0 %v1108
    %v1110 = vpop.xlane.xlu0 %1109
    %v1111 = vmax.f32 %v581, %v582
    %1112 = vmax.xlane.f32.xlu0 %v1111
    %v1113 = vpop.xlane.xlu0 %1112
    %v1114 = vmax.f32 %v583, %v584
    %1115 = vmax.xlane.f32.xlu0 %v1114
    %v1116 = vpop.xlane.xlu0 %1115
    %v1117 = vmax.f32 %v585, %v586
    %1118 = vmax.xlane.f32.xlu0 %v1117
    %v1119 = vpop.xlane.xlu0 %1118
    %v1120 = vmax.f32 %v587, %v588
    %1121 = vmax.xlane.f32.xlu0 %v1120
    %v1122 = vpop.xlane.xlu0 %1121
    %v1123 = vmax.f32 %v589, %v590
    %1124 = vmax.xlane.f32.xlu0 %v1123
    %v1125 = vpop.xlane.xlu0 %1124
    %v1126 = vmax.f32 %v591, %v592
    %1127 = vmax.xlane.f32.xlu0 %v1126
    %v1128 = vpop.xlane.xlu0 %1127
    %v1129 = vmax.f32 %v593, %v594
    %1130 = vmax.xlane.f32.xlu0 %v1129
    %v1131 = vpop.xlane.xlu0 %1130
    %v1132 = vmax.f32 %v595, %v596
    %1133 = vmax.xlane.f32.xlu0 %v1132
    %v1134 = vpop.xlane.xlu0 %1133
    %v1135 = vmax.f32 %v597, %v598
    %1136 = vmax.xlane.f32.xlu0 %v1135
    %v1137 = vpop.xlane.xlu0 %1136
    %v1138 = vmax.f32 %v599, %v600
    %1139 = vmax.xlane.f32.xlu0 %v1138
    %v1140 = vpop.xlane.xlu0 %1139
    %v1141 = vmax.f32 %v601, %v602
    %1142 = vmax.xlane.f32.xlu0 %v1141
    %v1143 = vpop.xlane.xlu0 %1142
    %v1144 = vmax.f32 %v603, %v604
    %1145 = vmax.xlane.f32.xlu0 %v1144
    %v1146 = vpop.xlane.xlu0 %1145
    %v1147 = vmax.f32 %v605, %v606
    %1148 = vmax.xlane.f32.xlu0 %v1147
    %v1149 = vpop.xlane.xlu0 %1148
    %v1150 = vmax.f32 %v607, %v608
    %1151 = vmax.xlane.f32.xlu0 %v1150
    %v1152 = vpop.xlane.xlu0 %1151
    %v1153 = vsub.f32 -inf, %v1107
    %v1154 = vsub.f32 -inf, %v1110
    %v1155 = vsub.f32 -inf, %v1113
    %v1156 = vsub.f32 -inf, %v1116
    %v1157 = vsub.f32 -inf, %v1119
    %v1158 = vsub.f32 -inf, %v1122
    %v1159 = vsub.f32 -inf, %v1125
    %v1160 = vsub.f32 -inf, %v1128
    %v1161 = vsub.f32 -inf, %v1131
    %v1162 = vsub.f32 -inf, %v1134
    %v1163 = vsub.f32 -inf, %v1137
    %v1164 = vsub.f32 -inf, %v1140
    %v1165 = vsub.f32 -inf, %v1143
    %v1166 = vsub.f32 -inf, %v1146
    %v1167 = vsub.f32 -inf, %v1149
    %v1168 = vsub.f32 -inf, %v1152
    %v1169 = vmul.f32 %v1153, 1.442695
    %v1170 = vpow.pop %v1169
    %v1171 = vmul.f32 %v1154, 1.442695
    %v1172 = vpow.pop %v1171
    %v1173 = vmul.f32 %v1155, 1.442695
    %v1174 = vpow.pop %v1173
    %v1175 = vmul.f32 %v1156, 1.442695
    %v1176 = vpow.pop %v1175
    %v1177 = vmul.f32 %v1157, 1.442695
    %v1178 = vpow.pop %v1177
    %v1179 = vmul.f32 %v1158, 1.442695
    %v1180 = vpow.pop %v1179
    %v1181 = vmul.f32 %v1159, 1.442695
    %v1182 = vpow.pop %v1181
    %v1183 = vmul.f32 %v1160, 1.442695
    %v1184 = vpow.pop %v1183
    %v1185 = vmul.f32 %v1161, 1.442695
    %v1186 = vpow.pop %v1185
    %v1187 = vmul.f32 %v1162, 1.442695
    %v1188 = vpow.pop %v1187
    %v1189 = vmul.f32 %v1163, 1.442695
    %v1190 = vpow.pop %v1189
    %v1191 = vmul.f32 %v1164, 1.442695
    %v1192 = vpow.pop %v1191
    %v1193 = vmul.f32 %v1165, 1.442695
    %v1194 = vpow.pop %v1193
    %v1195 = vmul.f32 %v1166, 1.442695
    %v1196 = vpow.pop %v1195
    %v1197 = vmul.f32 %v1167, 1.442695
    %v1198 = vpow.pop %v1197
    %v1199 = vmul.f32 %v1168, 1.442695
    %v1200 = vpow.pop %v1199
    %v1201 = vsub.f32 %v577, %v1107
    %v1202 = vsub.f32 %v578, %v1107
    %v1203 = vsub.f32 %v579, %v1110
    %v1204 = vsub.f32 %v580, %v1110
    %v1205 = vsub.f32 %v581, %v1113
    %v1206 = vsub.f32 %v582, %v1113
    %v1207 = vsub.f32 %v583, %v1116
    %v1208 = vsub.f32 %v584, %v1116
    %v1209 = vsub.f32 %v585, %v1119
    %v1210 = vsub.f32 %v586, %v1119
    %v1211 = vsub.f32 %v587, %v1122
    %v1212 = vsub.f32 %v588, %v1122
    %v1213 = vsub.f32 %v589, %v1125
    %v1214 = vsub.f32 %v590, %v1125
    %v1215 = vsub.f32 %v591, %v1128
    %v1216 = vsub.f32 %v592, %v1128
    %v1217 = vsub.f32 %v593, %v1131
    %v1218 = vsub.f32 %v594, %v1131
    %v1219 = vsub.f32 %v595, %v1134
    %v1220 = vsub.f32 %v596, %v1134
    %v1221 = vsub.f32 %v597, %v1137
    %v1222 = vsub.f32 %v598, %v1137
    %v1223 = vsub.f32 %v599, %v1140
    %v1224 = vsub.f32 %v600, %v1140
    %v1225 = vsub.f32 %v601, %v1143
    %v1226 = vsub.f32 %v602, %v1143
    %v1227 = vsub.f32 %v603, %v1146
    %v1228 = vsub.f32 %v604, %v1146
    %v1229 = vsub.f32 %v605, %v1149
    %v1230 = vsub.f32 %v606, %v1149
    %v1231 = vsub.f32 %v607, %v1152
    %v1232 = vsub.f32 %v608, %v1152
    %v1233 = vmul.f32 %v1201, 1.442695
    %v1234 = vpow.pop %v1233
    %v1235 = vmul.f32 %v1202, 1.442695
    %v1236 = vpow.pop %v1235
    %v1237 = vmul.f32 %v1203, 1.442695
    %v1238 = vpow.pop %v1237
    %v1239 = vmul.f32 %v1204, 1.442695
    %v1240 = vpow.pop %v1239
    %v1241 = vmul.f32 %v1205, 1.442695
    %v1242 = vpow.pop %v1241
    %v1243 = vmul.f32 %v1206, 1.442695
    %v1244 = vpow.pop %v1243
    %v1245 = vmul.f32 %v1207, 1.442695
    %v1246 = vpow.pop %v1245
    %v1247 = vmul.f32 %v1208, 1.442695
    %v1248 = vpow.pop %v1247
    %v1249 = vmul.f32 %v1209, 1.442695
    %v1250 = vpow.pop %v1249
    %v1251 = vmul.f32 %v1210, 1.442695
    %v1252 = vpow.pop %v1251
    %v1253 = vmul.f32 %v1211, 1.442695
    %v1254 = vpow.pop %v1253
    %v1255 = vmul.f32 %v1212, 1.442695
    %v1256 = vpow.pop %v1255
    %v1257 = vmul.f32 %v1213, 1.442695
    %v1258 = vpow.pop %v1257
    %v1259 = vmul.f32 %v1214, 1.442695
    %v1260 = vpow.pop %v1259
    %v1261 = vmul.f32 %v1215, 1.442695
    %v1262 = vpow.pop %v1261
    %v1263 = vmul.f32 %v1216, 1.442695
    %v1264 = vpow.pop %v1263
    %v1265 = vmul.f32 %v1217, 1.442695
    %v1266 = vpow.pop %v1265
    %v1267 = vmul.f32 %v1218, 1.442695
    %v1268 = vpow.pop %v1267
    %v1269 = vmul.f32 %v1219, 1.442695
    %v1270 = vpow.pop %v1269
    %v1271 = vmul.f32 %v1220, 1.442695
    %v1272 = vpow.pop %v1271
    %v1273 = vmul.f32 %v1221, 1.442695
    %v1274 = vpow.pop %v1273
    %v1275 = vmul.f32 %v1222, 1.442695
    %v1276 = vpow.pop %v1275
    %v1277 = vmul.f32 %v1223, 1.442695
    %v1278 = vpow.pop %v1277
    %v1279 = vmul.f32 %v1224, 1.442695
    %v1280 = vpow.pop %v1279
    %v1281 = vmul.f32 %v1225, 1.442695
    %v1282 = vpow.pop %v1281
    %v1283 = vmul.f32 %v1226, 1.442695
    %v1284 = vpow.pop %v1283
    %v1285 = vmul.f32 %v1227, 1.442695
    %v1286 = vpow.pop %v1285
    %v1287 = vmul.f32 %v1228, 1.442695
    %v1288 = vpow.pop %v1287
    %v1289 = vmul.f32 %v1229, 1.442695
    %v1290 = vpow.pop %v1289
    %v1291 = vmul.f32 %v1230, 1.442695
    %v1292 = vpow.pop %v1291
    %v1293 = vmul.f32 %v1231, 1.442695
    %v1294 = vpow.pop %v1293
    %v1295 = vmul.f32 %v1232, 1.442695
    %v1296 = vpow.pop %v1295
    %v1297 = vmul.f32 %v1170, 0.0
    %v1298 = vmul.f32 %v1172, 0.0
    %v1299 = vmul.f32 %v1174, 0.0
    %v1300 = vmul.f32 %v1176, 0.0
    %v1301 = vmul.f32 %v1178, 0.0
    %v1302 = vmul.f32 %v1180, 0.0
    %v1303 = vmul.f32 %v1182, 0.0
    %v1304 = vmul.f32 %v1184, 0.0
    %v1305 = vmul.f32 %v1186, 0.0
    %v1306 = vmul.f32 %v1188, 0.0
    %v1307 = vmul.f32 %v1190, 0.0
    %v1308 = vmul.f32 %v1192, 0.0
    %v1309 = vmul.f32 %v1194, 0.0
    %v1310 = vmul.f32 %v1196, 0.0
    %v1311 = vmul.f32 %v1198, 0.0
    %v1312 = vmul.f32 %v1200, 0.0
    %v1313 = vadd.f32 %v1234, %v1236
    %1314 = vadd.xlane.f32.xlu0 %v1313
    %v1315 = vpop.xlane.xlu0 %1314
    %v1316 = vadd.f32 %v1238, %v1240
    %1317 = vadd.xlane.f32.xlu0 %v1316
    %v1318 = vpop.xlane.xlu0 %1317
    %v1319 = vadd.f32 %v1242, %v1244
    %1320 = vadd.xlane.f32.xlu0 %v1319
    %v1321 = vpop.xlane.xlu0 %1320
    %v1322 = vadd.f32 %v1246, %v1248
    %1323 = vadd.xlane.f32.xlu0 %v1322
    %v1324 = vpop.xlane.xlu0 %1323
    %v1325 = vadd.f32 %v1250, %v1252
    %1326 = vadd.xlane.f32.xlu0 %v1325
    %v1327 = vpop.xlane.xlu0 %1326
    %v1328 = vadd.f32 %v1254, %v1256
    %1329 = vadd.xlane.f32.xlu0 %v1328
    %v1330 = vpop.xlane.xlu0 %1329
    %v1331 = vadd.f32 %v1258, %v1260
    %1332 = vadd.xlane.f32.xlu0 %v1331
    %v1333 = vpop.xlane.xlu0 %1332
    %v1334 = vadd.f32 %v1262, %v1264
    %1335 = vadd.xlane.f32.xlu0 %v1334
    %v1336 = vpop.xlane.xlu0 %1335
    %v1337 = vadd.f32 %v1266, %v1268
    %1338 = vadd.xlane.f32.xlu0 %v1337
    %v1339 = vpop.xlane.xlu0 %1338
    %v1340 = vadd.f32 %v1270, %v1272
    %1341 = vadd.xlane.f32.xlu0 %v1340
    %v1342 = vpop.xlane.xlu0 %1341
    %v1343 = vadd.f32 %v1274, %v1276
    %1344 = vadd.xlane.f32.xlu0 %v1343
    %v1345 = vpop.xlane.xlu0 %1344
    %v1346 = vadd.f32 %v1278, %v1280
    %1347 = vadd.xlane.f32.xlu0 %v1346
    %v1348 = vpop.xlane.xlu0 %1347
    %v1349 = vadd.f32 %v1282, %v1284
    %1350 = vadd.xlane.f32.xlu0 %v1349
    %v1351 = vpop.xlane.xlu0 %1350
    %v1352 = vadd.f32 %v1286, %v1288
    %1353 = vadd.xlane.f32.xlu0 %v1352
    %v1354 = vpop.xlane.xlu0 %1353
    %v1355 = vadd.f32 %v1290, %v1292
    %1356 = vadd.xlane.f32.xlu0 %v1355
    %v1357 = vpop.xlane.xlu0 %1356
    %v1358 = vadd.f32 %v1294, %v1296
    %1359 = vadd.xlane.f32.xlu0 %v1358
    %v1360 = vpop.xlane.xlu0 %1359
    %v1361 = vadd.f32 %v1297, %v1315
    %v1362 = vadd.f32 %v1298, %v1318
    %v1363 = vadd.f32 %v1299, %v1321
    %v1364 = vadd.f32 %v1300, %v1324
    %v1365 = vadd.f32 %v1301, %v1327
    %v1366 = vadd.f32 %v1302, %v1330
    %v1367 = vadd.f32 %v1303, %v1333
    %v1368 = vadd.f32 %v1304, %v1336
    %v1369 = vadd.f32 %v1305, %v1339
    %v1370 = vadd.f32 %v1306, %v1342
    %v1371 = vadd.f32 %v1307, %v1345
    %v1372 = vadd.f32 %v1308, %v1348
    %v1373 = vadd.f32 %v1309, %v1351
    %v1374 = vadd.f32 %v1310, %v1354
    %v1375 = vadd.f32 %v1311, %v1357
    %v1376 = vadd.f32 %v1312, %v1360
    %v1377 = vpack.c.bf16 %v1238, %v1234
    %v1378 = vpack.c.bf16 %v1240, %v1236
    %v1379 = vpack.c.bf16 %v1246, %v1242
    %v1380 = vpack.c.bf16 %v1248, %v1244
    %v1381 = vpack.c.bf16 %v1254, %v1250
    %v1382 = vpack.c.bf16 %v1256, %v1252
    %v1383 = vpack.c.bf16 %v1262, %v1258
    %v1384 = vpack.c.bf16 %v1264, %v1260
    %v1385 = vpack.c.bf16 %v1270, %v1266
    %v1386 = vpack.c.bf16 %v1272, %v1268
    %v1387 = vpack.c.bf16 %v1278, %v1274
    %v1388 = vpack.c.bf16 %v1280, %v1276
    %v1389 = vpack.c.bf16 %v1286, %v1282
    %v1390 = vpack.c.bf16 %v1288, %v1284
    %v1391 = vpack.c.bf16 %v1294, %v1290
    %v1392 = vpack.c.bf16 %v1296, %v1292
    %v1393 = vpack.c.bf16 %v1075, %v1073
    %v1394 = vpack.c.bf16 %v1076, %v1074
    %v1395 = vpack.c.bf16 %v1079, %v1077
    %v1396 = vpack.c.bf16 %v1080, %v1078
    %v1397 = vpack.c.bf16 %v1083, %v1081
    %v1398 = vpack.c.bf16 %v1084, %v1082
    %v1399 = vpack.c.bf16 %v1087, %v1085
    %v1400 = vpack.c.bf16 %v1088, %v1086
    %v1401 = vpack.c.bf16 %v1091, %v1089
    %v1402 = vpack.c.bf16 %v1092, %v1090
    %v1403 = vpack.c.bf16 %v1095, %v1093
    %v1404 = vpack.c.bf16 %v1096, %v1094
    %v1405 = vpack.c.bf16 %v1099, %v1097
    %v1406 = vpack.c.bf16 %v1100, %v1098
    %v1407 = vpack.c.bf16 %v1103, %v1101
    %v1408 = vpack.c.bf16 %v1104, %v1102
    %1409 = vmatpush.bf16.xpose.msra.mxu0 %v1407
    %1410 = vmatpush.bf16.xpose.msra.mxu0 %v1405
    %1411 = vmatpush.bf16.xpose.msra.mxu0 %v1403
    %1412 = vmatpush.bf16.xpose.msra.mxu0 %v1401
    %1413 = vmatpush.bf16.xpose.msra.mxu0 %v1399
    %1414 = vmatpush.bf16.xpose.msra.mxu0 %v1397
    %1415 = vmatpush.bf16.xpose.msra.mxu0 %v1395
    %1416 = vmatpush.bf16.xpose.msra.mxu0 %v1393
    %1417 = vmatmul.bf16.gmra.mxu0 %v1377
    %v1418 = vpop.f32.mrf.mxu0
    %v1419 = vadd.f32 0.0, %v1418
    %v1420 = vpop.f32.mrf.mxu0
    %v1421 = vadd.f32 0.0, %v1420
    %1422 = vmatmul.bf16.gmra.mxu0 %v1379
    %v1423 = vpop.f32.mrf.mxu0
    %v1424 = vadd.f32 0.0, %v1423
    %v1425 = vpop.f32.mrf.mxu0
    %v1426 = vadd.f32 0.0, %v1425
    %1427 = vmatmul.bf16.gmra.mxu0 %v1381
    %v1428 = vpop.f32.mrf.mxu0
    %v1429 = vadd.f32 0.0, %v1428
    %v1430 = vpop.f32.mrf.mxu0
    %v1431 = vadd.f32 0.0, %v1430
    %1432 = vmatmul.bf16.gmra.mxu0 %v1383
    %v1433 = vpop.f32.mrf.mxu0
    %v1434 = vadd.f32 0.0, %v1433
    %v1435 = vpop.f32.mrf.mxu0
    %v1436 = vadd.f32 0.0, %v1435
    %1437 = vmatmul.bf16.gmra.mxu0 %v1385
    %v1438 = vpop.f32.mrf.mxu0
    %v1439 = vadd.f32 0.0, %v1438
    %v1440 = vpop.f32.mrf.mxu0
    %v1441 = vadd.f32 0.0, %v1440
    %1442 = vmatmul.bf16.gmra.mxu0 %v1387
    %v1443 = vpop.f32.mrf.mxu0
    %v1444 = vadd.f32 0.0, %v1443
    %v1445 = vpop.f32.mrf.mxu0
    %v1446 = vadd.f32 0.0, %v1445
    %1447 = vmatmul.bf16.gmra.mxu0 %v1389
    %v1448 = vpop.f32.mrf.mxu0
    %v1449 = vadd.f32 0.0, %v1448
    %v1450 = vpop.f32.mrf.mxu0
    %v1451 = vadd.f32 0.0, %v1450
    %1452 = vmatmul.bf16.gmra.mxu0 %v1391
    %v1453 = vpop.f32.mrf.mxu0
    %v1454 = vadd.f32 0.0, %v1453
    %v1455 = vpop.f32.mrf.mxu0
    %v1456 = vadd.f32 0.0, %v1455
    %1457 = vdwg.mxu0
    %1458 = vmatpush.bf16.xpose.msra.mxu0 %v1408
    %1459 = vmatpush.bf16.xpose.msra.mxu0 %v1406
    %1460 = vmatpush.bf16.xpose.msra.mxu0 %v1404
    %1461 = vmatpush.bf16.xpose.msra.mxu0 %v1402
    %1462 = vmatpush.bf16.xpose.msra.mxu0 %v1400
    %1463 = vmatpush.bf16.xpose.msra.mxu0 %v1398
    %1464 = vmatpush.bf16.xpose.msra.mxu0 %v1396
    %1465 = vmatpush.bf16.xpose.msra.mxu0 %v1394
    %1466 = vmatmul.bf16.gmra.mxu0 %v1378
    %v1467 = vpop.f32.mrf.mxu0
    %v1468 = vadd.f32 %v1419, %v1467
    %v1469 = vpop.f32.mrf.mxu0
    %v1470 = vadd.f32 %v1421, %v1469
    %1471 = vmatmul.bf16.gmra.mxu0 %v1380
    %v1472 = vpop.f32.mrf.mxu0
    %v1473 = vadd.f32 %v1424, %v1472
    %v1474 = vpop.f32.mrf.mxu0
    %v1475 = vadd.f32 %v1426, %v1474
    %1476 = vmatmul.bf16.gmra.mxu0 %v1382
    %v1477 = vpop.f32.mrf.mxu0
    %v1478 = vadd.f32 %v1429, %v1477
    %v1479 = vpop.f32.mrf.mxu0
    %v1480 = vadd.f32 %v1431, %v1479
    %1481 = vmatmul.bf16.gmra.mxu0 %v1384
    %v1482 = vpop.f32.mrf.mxu0
    %v1483 = vadd.f32 %v1434, %v1482
    %v1484 = vpop.f32.mrf.mxu0
    %v1485 = vadd.f32 %v1436, %v1484
    %1486 = vmatmul.bf16.gmra.mxu0 %v1386
    %v1487 = vpop.f32.mrf.mxu0
    %v1488 = vadd.f32 %v1439, %v1487
    %v1489 = vpop.f32.mrf.mxu0
    %v1490 = vadd.f32 %v1441, %v1489
    %1491 = vmatmul.bf16.gmra.mxu0 %v1388
    %v1492 = vpop.f32.mrf.mxu0
    %v1493 = vadd.f32 %v1444, %v1492
    %v1494 = vpop.f32.mrf.mxu0
    %v1495 = vadd.f32 %v1446, %v1494
    %1496 = vmatmul.bf16.gmra.mxu0 %v1390
    %v1497 = vpop.f32.mrf.mxu0
    %v1498 = vadd.f32 %v1449, %v1497
    %v1499 = vpop.f32.mrf.mxu0
    %v1500 = vadd.f32 %v1451, %v1499
    %1501 = vmatmul.bf16.gmra.mxu0 %v1392
    %v1502 = vpop.f32.mrf.mxu0
    %v1503 = vadd.f32 %v1454, %v1502
    %v1504 = vpop.f32.mrf.mxu0
    %v1505 = vadd.f32 %v1456, %v1504
    %1506 = vdwg.mxu0
    %v1507 = vadd.f32 %v1297, %v1468
    %v1508 = vadd.f32 %v1298, %v1470
    %v1509 = vadd.f32 %v1299, %v1473
    %v1510 = vadd.f32 %v1300, %v1475
    %v1511 = vadd.f32 %v1301, %v1478
    %v1512 = vadd.f32 %v1302, %v1480
    %v1513 = vadd.f32 %v1303, %v1483
    %v1514 = vadd.f32 %v1304, %v1485
    %v1515 = vadd.f32 %v1305, %v1488
    %v1516 = vadd.f32 %v1306, %v1490
    %v1517 = vadd.f32 %v1307, %v1493
    %v1518 = vadd.f32 %v1308, %v1495
    %v1519 = vadd.f32 %v1309, %v1498
    %v1520 = vadd.f32 %v1310, %v1500
    %v1521 = vadd.f32 %v1311, %v1503
    %v1522 = vadd.f32 %v1312, %v1505
    %v1523 = vmul.f32 %v1507, %v71
    %v1524 = vmul.f32 %v1508, %v72
    %v1525 = vmul.f32 %v1509, %v73
    %v1526 = vmul.f32 %v1510, %v74
    %v1527 = vmul.f32 %v1511, %v75
    %v1528 = vmul.f32 %v1512, %v76
    %v1529 = vmul.f32 %v1513, %v77
    %v1530 = vmul.f32 %v1514, %v78
    %v1531 = vmul.f32 %v1515, %v79
    %v1532 = vmul.f32 %v1516, %v80
    %v1533 = vmul.f32 %v1517, %v81
    %v1534 = vmul.f32 %v1518, %v82
    %v1535 = vmul.f32 %v1519, %v83
    %v1536 = vmul.f32 %v1520, %v84
    %v1537 = vmul.f32 %v1521, %v85
    %v1538 = vmul.f32 %v1522, %v86
    %v1539 = vrcp.pop %v1361
    %v1540 = vmul.f32 %v1361, %v1539
    %v1541 = vsub.f32 1.0, %v1540
    %v1542 = vmul.f32 %v1539, %v1541
    %v1543 = vadd.f32 %v1539, %v1542
    %vm1544 = vweird.f32 %v1361
    %vm1545 = vweird.f32 %v1539
    %vm1546 = vmor %vm1544, %vm1545
    %v1547 = vsel %vm1546, %v1539, %v1543
    %v1548 = vand.u32 2147483647, %v1361
    %vm1549 = vcmp.eq.f32.partialorder %v1548, 8.507059e+37
    %v1550 = vand.u32 %v1361, 2147483648
    %v1551 = vor.u32 1.1754944e-38, %v1550
    %v1552 = vsel %vm1549, %v1551, %v1547
    %v1553 = vmul.f32 1.0, %v1552
    %v1554 = vrcp.pop %v1362
    %v1555 = vmul.f32 %v1362, %v1554
    %v1556 = vsub.f32 1.0, %v1555
    %v1557 = vmul.f32 %v1554, %v1556
    %v1558 = vadd.f32 %v1554, %v1557
    %vm1559 = vweird.f32 %v1362
    %vm1560 = vweird.f32 %v1554
    %vm1561 = vmor %vm1559, %vm1560
    %v1562 = vsel %vm1561, %v1554, %v1558
    %v1563 = vand.u32 2147483647, %v1362
    %vm1564 = vcmp.eq.f32.partialorder %v1563, 8.507059e+37
    %v1565 = vand.u32 %v1362, 2147483648
    %v1566 = vor.u32 1.1754944e-38, %v1565
    %v1567 = vsel %vm1564, %v1566, %v1562
    %v1568 = vmul.f32 1.0, %v1567
    %v1569 = vrcp.pop %v1363
    %v1570 = vmul.f32 %v1363, %v1569
    %v1571 = vsub.f32 1.0, %v1570
    %v1572 = vmul.f32 %v1569, %v1571
    %v1573 = vadd.f32 %v1569, %v1572
    %vm1574 = vweird.f32 %v1363
    %vm1575 = vweird.f32 %v1569
    %vm1576 = vmor %vm1574, %vm1575
    %v1577 = vsel %vm1576, %v1569, %v1573
    %v1578 = vand.u32 2147483647, %v1363
    %vm1579 = vcmp.eq.f32.partialorder %v1578, 8.507059e+37
    %v1580 = vand.u32 %v1363, 2147483648
    %v1581 = vor.u32 1.1754944e-38, %v1580
    %v1582 = vsel %vm1579, %v1581, %v1577
    %v1583 = vmul.f32 1.0, %v1582
    %v1584 = vrcp.pop %v1364
    %v1585 = vmul.f32 %v1364, %v1584
    %v1586 = vsub.f32 1.0, %v1585
    %v1587 = vmul.f32 %v1584, %v1586
    %v1588 = vadd.f32 %v1584, %v1587
    %vm1589 = vweird.f32 %v1364
    %vm1590 = vweird.f32 %v1584
    %vm1591 = vmor %vm1589, %vm1590
    %v1592 = vsel %vm1591, %v1584, %v1588
    %v1593 = vand.u32 2147483647, %v1364
    %vm1594 = vcmp.eq.f32.partialorder %v1593, 8.507059e+37
    %v1595 = vand.u32 %v1364, 2147483648
    %v1596 = vor.u32 1.1754944e-38, %v1595
    %v1597 = vsel %vm1594, %v1596, %v1592
    %v1598 = vmul.f32 1.0, %v1597
    %v1599 = vrcp.pop %v1365
    %v1600 = vmul.f32 %v1365, %v1599
    %v1601 = vsub.f32 1.0, %v1600
    %v1602 = vmul.f32 %v1599, %v1601
    %v1603 = vadd.f32 %v1599, %v1602
    %vm1604 = vweird.f32 %v1365
    %vm1605 = vweird.f32 %v1599
    %vm1606 = vmor %vm1604, %vm1605
    %v1607 = vsel %vm1606, %v1599, %v1603
    %v1608 = vand.u32 2147483647, %v1365
    %vm1609 = vcmp.eq.f32.partialorder %v1608, 8.507059e+37
    %v1610 = vand.u32 %v1365, 2147483648
    %v1611 = vor.u32 1.1754944e-38, %v1610
    %v1612 = vsel %vm1609, %v1611, %v1607
    %v1613 = vmul.f32 1.0, %v1612
    %v1614 = vrcp.pop %v1366
    %v1615 = vmul.f32 %v1366, %v1614
    %v1616 = vsub.f32 1.0, %v1615
    %v1617 = vmul.f32 %v1614, %v1616
    %v1618 = vadd.f32 %v1614, %v1617
    %vm1619 = vweird.f32 %v1366
    %vm1620 = vweird.f32 %v1614
    %vm1621 = vmor %vm1619, %vm1620
    %v1622 = vsel %vm1621, %v1614, %v1618
    %v1623 = vand.u32 2147483647, %v1366
    %vm1624 = vcmp.eq.f32.partialorder %v1623, 8.507059e+37
    %v1625 = vand.u32 %v1366, 2147483648
    %v1626 = vor.u32 1.1754944e-38, %v1625
    %v1627 = vsel %vm1624, %v1626, %v1622
    %v1628 = vmul.f32 1.0, %v1627
    %v1629 = vrcp.pop %v1367
    %v1630 = vmul.f32 %v1367, %v1629
    %v1631 = vsub.f32 1.0, %v1630
    %v1632 = vmul.f32 %v1629, %v1631
    %v1633 = vadd.f32 %v1629, %v1632
    %vm1634 = vweird.f32 %v1367
    %vm1635 = vweird.f32 %v1629
    %vm1636 = vmor %vm1634, %vm1635
    %v1637 = vsel %vm1636, %v1629, %v1633
    %v1638 = vand.u32 2147483647, %v1367
    %vm1639 = vcmp.eq.f32.partialorder %v1638, 8.507059e+37
    %v1640 = vand.u32 %v1367, 2147483648
    %v1641 = vor.u32 1.1754944e-38, %v1640
    %v1642 = vsel %vm1639, %v1641, %v1637
    %v1643 = vmul.f32 1.0, %v1642
    %v1644 = vrcp.pop %v1368
    %v1645 = vmul.f32 %v1368, %v1644
    %v1646 = vsub.f32 1.0, %v1645
    %v1647 = vmul.f32 %v1644, %v1646
    %v1648 = vadd.f32 %v1644, %v1647
    %vm1649 = vweird.f32 %v1368
    %vm1650 = vweird.f32 %v1644
    %vm1651 = vmor %vm1649, %vm1650
    %v1652 = vsel %vm1651, %v1644, %v1648
    %v1653 = vand.u32 2147483647, %v1368
    %vm1654 = vcmp.eq.f32.partialorder %v1653, 8.507059e+37
    %v1655 = vand.u32 %v1368, 2147483648
    %v1656 = vor.u32 1.1754944e-38, %v1655
    %v1657 = vsel %vm1654, %v1656, %v1652
    %v1658 = vmul.f32 1.0, %v1657
    %v1659 = vrcp.pop %v1369
    %v1660 = vmul.f32 %v1369, %v1659
    %v1661 = vsub.f32 1.0, %v1660
    %v1662 = vmul.f32 %v1659, %v1661
    %v1663 = vadd.f32 %v1659, %v1662
    %vm1664 = vweird.f32 %v1369
    %vm1665 = vweird.f32 %v1659
    %vm1666 = vmor %vm1664, %vm1665
    %v1667 = vsel %vm1666, %v1659, %v1663
    %v1668 = vand.u32 2147483647, %v1369
    %vm1669 = vcmp.eq.f32.partialorder %v1668, 8.507059e+37
    %v1670 = vand.u32 %v1369, 2147483648
    %v1671 = vor.u32 1.1754944e-38, %v1670
    %v1672 = vsel %vm1669, %v1671, %v1667
    %v1673 = vmul.f32 1.0, %v1672
    %v1674 = vrcp.pop %v1370
    %v1675 = vmul.f32 %v1370, %v1674
    %v1676 = vsub.f32 1.0, %v1675
    %v1677 = vmul.f32 %v1674, %v1676
    %v1678 = vadd.f32 %v1674, %v1677
    %vm1679 = vweird.f32 %v1370
    %vm1680 = vweird.f32 %v1674
    %vm1681 = vmor %vm1679, %vm1680
    %v1682 = vsel %vm1681, %v1674, %v1678
    %v1683 = vand.u32 2147483647, %v1370
    %vm1684 = vcmp.eq.f32.partialorder %v1683, 8.507059e+37
    %v1685 = vand.u32 %v1370, 2147483648
    %v1686 = vor.u32 1.1754944e-38, %v1685
    %v1687 = vsel %vm1684, %v1686, %v1682
    %v1688 = vmul.f32 1.0, %v1687
    %v1689 = vrcp.pop %v1371
    %v1690 = vmul.f32 %v1371, %v1689
    %v1691 = vsub.f32 1.0, %v1690
    %v1692 = vmul.f32 %v1689, %v1691
    %v1693 = vadd.f32 %v1689, %v1692
    %vm1694 = vweird.f32 %v1371
    %vm1695 = vweird.f32 %v1689
    %vm1696 = vmor %vm1694, %vm1695
    %v1697 = vsel %vm1696, %v1689, %v1693
    %v1698 = vand.u32 2147483647, %v1371
    %vm1699 = vcmp.eq.f32.partialorder %v1698, 8.507059e+37
    %v1700 = vand.u32 %v1371, 2147483648
    %v1701 = vor.u32 1.1754944e-38, %v1700
    %v1702 = vsel %vm1699, %v1701, %v1697
    %v1703 = vmul.f32 1.0, %v1702
    %v1704 = vrcp.pop %v1372
    %v1705 = vmul.f32 %v1372, %v1704
    %v1706 = vsub.f32 1.0, %v1705
    %v1707 = vmul.f32 %v1704, %v1706
    %v1708 = vadd.f32 %v1704, %v1707
    %vm1709 = vweird.f32 %v1372
    %vm1710 = vweird.f32 %v1704
    %vm1711 = vmor %vm1709, %vm1710
    %v1712 = vsel %vm1711, %v1704, %v1708
    %v1713 = vand.u32 2147483647, %v1372
    %vm1714 = vcmp.eq.f32.partialorder %v1713, 8.507059e+37
    %v1715 = vand.u32 %v1372, 2147483648
    %v1716 = vor.u32 1.1754944e-38, %v1715
    %v1717 = vsel %vm1714, %v1716, %v1712
    %v1718 = vmul.f32 1.0, %v1717
    %v1719 = vrcp.pop %v1373
    %v1720 = vmul.f32 %v1373, %v1719
    %v1721 = vsub.f32 1.0, %v1720
    %v1722 = vmul.f32 %v1719, %v1721
    %v1723 = vadd.f32 %v1719, %v1722
    %vm1724 = vweird.f32 %v1373
    %vm1725 = vweird.f32 %v1719
    %vm1726 = vmor %vm1724, %vm1725
    %v1727 = vsel %vm1726, %v1719, %v1723
    %v1728 = vand.u32 2147483647, %v1373
    %vm1729 = vcmp.eq.f32.partialorder %v1728, 8.507059e+37
    %v1730 = vand.u32 %v1373, 2147483648
    %v1731 = vor.u32 1.1754944e-38, %v1730
    %v1732 = vsel %vm1729, %v1731, %v1727
    %v1733 = vmul.f32 1.0, %v1732
    %v1734 = vrcp.pop %v1374
    %v1735 = vmul.f32 %v1374, %v1734
    %v1736 = vsub.f32 1.0, %v1735
    %v1737 = vmul.f32 %v1734, %v1736
    %v1738 = vadd.f32 %v1734, %v1737
    %vm1739 = vweird.f32 %v1374
    %vm1740 = vweird.f32 %v1734
    %vm1741 = vmor %vm1739, %vm1740
    %v1742 = vsel %vm1741, %v1734, %v1738
    %v1743 = vand.u32 2147483647, %v1374
    %vm1744 = vcmp.eq.f32.partialorder %v1743, 8.507059e+37
    %v1745 = vand.u32 %v1374, 2147483648
    %v1746 = vor.u32 1.1754944e-38, %v1745
    %v1747 = vsel %vm1744, %v1746, %v1742
    %v1748 = vmul.f32 1.0, %v1747
    %v1749 = vrcp.pop %v1375
    %v1750 = vmul.f32 %v1375, %v1749
    %v1751 = vsub.f32 1.0, %v1750
    %v1752 = vmul.f32 %v1749, %v1751
    %v1753 = vadd.f32 %v1749, %v1752
    %vm1754 = vweird.f32 %v1375
    %vm1755 = vweird.f32 %v1749
    %vm1756 = vmor %vm1754, %vm1755
    %v1757 = vsel %vm1756, %v1749, %v1753
    %v1758 = vand.u32 2147483647, %v1375
    %vm1759 = vcmp.eq.f32.partialorder %v1758, 8.507059e+37
    %v1760 = vand.u32 %v1375, 2147483648
    %v1761 = vor.u32 1.1754944e-38, %v1760
    %v1762 = vsel %vm1759, %v1761, %v1757
    %v1763 = vmul.f32 1.0, %v1762
    %v1764 = vrcp.pop %v1376
    %v1765 = vmul.f32 %v1376, %v1764
    %v1766 = vsub.f32 1.0, %v1765
    %v1767 = vmul.f32 %v1764, %v1766
    %v1768 = vadd.f32 %v1764, %v1767
    %vm1769 = vweird.f32 %v1376
    %vm1770 = vweird.f32 %v1764
    %vm1771 = vmor %vm1769, %vm1770
    %v1772 = vsel %vm1771, %v1764, %v1768
    %v1773 = vand.u32 2147483647, %v1376
    %vm1774 = vcmp.eq.f32.partialorder %v1773, 8.507059e+37
    %v1775 = vand.u32 %v1376, 2147483648
    %v1776 = vor.u32 1.1754944e-38, %v1775
    %v1777 = vsel %vm1774, %v1776, %v1772
    %v1778 = vmul.f32 1.0, %v1777
    %v1779 = vmul.f32 %v1523, %v1553
    %v1780 = vmul.f32 %v1524, %v1568
    %v1781 = vmul.f32 %v1525, %v1583
    %v1782 = vmul.f32 %v1526, %v1598
    %v1783 = vmul.f32 %v1527, %v1613
    %v1784 = vmul.f32 %v1528, %v1628
    %v1785 = vmul.f32 %v1529, %v1643
    %v1786 = vmul.f32 %v1530, %v1658
    %v1787 = vmul.f32 %v1531, %v1673
    %v1788 = vmul.f32 %v1532, %v1688
    %v1789 = vmul.f32 %v1533, %v1703
    %v1790 = vmul.f32 %v1534, %v1718
    %v1791 = vmul.f32 %v1535, %v1733
    %v1792 = vmul.f32 %v1536, %v1748
    %v1793 = vmul.f32 %v1537, %v1763
    %v1794 = vmul.f32 %v1538, %v1778
    %1795 = vmatpush.xpose.msra.mxu0 %v1794
    %1796 = vmatpush.xpose.msra.mxu0 %v1793
    %1797 = vmatpush.xpose.msra.mxu0 %v1792
    %1798 = vmatpush.xpose.msra.mxu0 %v1791
    %1799 = vmatpush.xpose.msra.mxu0 %v1790
    %1800 = vmatpush.xpose.msra.mxu0 %v1789
    %1801 = vmatpush.xpose.msra.mxu0 %v1788
    %1802 = vmatpush.xpose.msra.mxu0 %v1787
    %1803 = vmatpush.xpose.msra.mxu0 %v1786
    %1804 = vmatpush.xpose.msra.mxu0 %v1785
    %1805 = vmatpush.xpose.msra.mxu0 %v1784
    %1806 = vmatpush.xpose.msra.mxu0 %v1783
    %1807 = vmatpush.xpose.msra.mxu0 %v1782
    %1808 = vmatpush.xpose.msra.mxu0 %v1781
    %1809 = vmatpush.xpose.msra.mxu0 %v1780
    %1810 = vmatpush.xpose.msra.mxu0 %v1779
    %1811 = vmatmul.f32.gmra.mxu0 %v69
    %v1812 = vpop.f32.mrf.mxu0
    %v1813 = vadd.f32 0.0, %v1812
    %1814 = vdwg.mxu0
    %v1815 = vpack.c.bf16 %v1813, %v1813
    %1817 = vset.pattern.permute.xlu0 0
    %1818 = vperm.xlu0 %1817, %v21
    %v1819 = vpop.permute.xlu0 %1818
    %1822 = vset.pattern.permute.xlu0 0
    %1823 = vperm.xlu0 %1822, %v22
    %v1824 = vpop.permute.xlu0 %1823
    %1827 = vset.pattern.permute.xlu0 0
    %1828 = vperm.xlu0 %1827, %v23
    %v1829 = vpop.permute.xlu0 %1828
    %1832 = vset.pattern.permute.xlu0 0
    %1833 = vperm.xlu0 %1832, %v24
    %v1834 = vpop.permute.xlu0 %1833
    %1837 = vset.pattern.permute.xlu0 0
    %1838 = vperm.xlu0 %1837, %v25
    %v1839 = vpop.permute.xlu0 %1838
    %1842 = vset.pattern.permute.xlu0 0
    %1843 = vperm.xlu0 %1842, %v26
    %v1844 = vpop.permute.xlu0 %1843
    %1847 = vset.pattern.permute.xlu0 0
    %1848 = vperm.xlu0 %1847, %v27
    %v1849 = vpop.permute.xlu0 %1848
    %1852 = vset.pattern.permute.xlu0 0
    %1853 = vperm.xlu0 %1852, %v28
    %v1854 = vpop.permute.xlu0 %1853
    %1857 = vset.pattern.permute.xlu0 0
    %1858 = vperm.xlu0 %1857, %v29
    %v1859 = vpop.permute.xlu0 %1858
    %1862 = vset.pattern.permute.xlu0 0
    %1863 = vperm.xlu0 %1862, %v30
    %v1864 = vpop.permute.xlu0 %1863
    %1867 = vset.pattern.permute.xlu0 0
    %1868 = vperm.xlu0 %1867, %v31
    %v1869 = vpop.permute.xlu0 %1868
    %1872 = vset.pattern.permute.xlu0 0
    %1873 = vperm.xlu0 %1872, %v32
    %v1874 = vpop.permute.xlu0 %1873
    %1877 = vset.pattern.permute.xlu0 0
    %1878 = vperm.xlu0 %1877, %v33
    %v1879 = vpop.permute.xlu0 %1878
    %1882 = vset.pattern.permute.xlu0 0
    %1883 = vperm.xlu0 %1882, %v34
    %v1884 = vpop.permute.xlu0 %1883
    %1887 = vset.pattern.permute.xlu0 0
    %1888 = vperm.xlu0 %1887, %v35
    %v1889 = vpop.permute.xlu0 %1888
    %1892 = vset.pattern.permute.xlu0 0
    %1893 = vperm.xlu0 %1892, %v36
    %v1894 = vpop.permute.xlu0 %1893
    %v1896 = vmul.f32 %v1819, %v173
    %v1897 = vmul.f32 %v1819, %v174
    %v1898 = vmul.f32 %v1824, %v173
    %v1899 = vmul.f32 %v1824, %v174
    %v1900 = vmul.f32 %v1829, %v173
    %v1901 = vmul.f32 %v1829, %v174
    %v1902 = vmul.f32 %v1834, %v173
    %v1903 = vmul.f32 %v1834, %v174
    %v1904 = vmul.f32 %v1839, %v173
    %v1905 = vmul.f32 %v1839, %v174
    %v1906 = vmul.f32 %v1844, %v173
    %v1907 = vmul.f32 %v1844, %v174
    %v1908 = vmul.f32 %v1849, %v173
    %v1909 = vmul.f32 %v1849, %v174
    %v1910 = vmul.f32 %v1854, %v173
    %v1911 = vmul.f32 %v1854, %v174
    %v1912 = vmul.f32 %v1859, %v173
    %v1913 = vmul.f32 %v1859, %v174
    %v1914 = vmul.f32 %v1864, %v173
    %v1915 = vmul.f32 %v1864, %v174
    %v1916 = vmul.f32 %v1869, %v173
    %v1917 = vmul.f32 %v1869, %v174
    %v1918 = vmul.f32 %v1874, %v173
    %v1919 = vmul.f32 %v1874, %v174
    %v1920 = vmul.f32 %v1879, %v173
    %v1921 = vmul.f32 %v1879, %v174
    %v1922 = vmul.f32 %v1884, %v173
    %v1923 = vmul.f32 %v1884, %v174
    %v1924 = vmul.f32 %v1889, %v173
    %v1925 = vmul.f32 %v1889, %v174
    %v1926 = vmul.f32 %v1894, %v173
    %v1927 = vmul.f32 %v1894, %v174
    %1928 = vset.pattern.permute.xlu0 1
    %1929 = vperm.xlu0 %1928, %v21
    %v1930 = vpop.permute.xlu0 %1929
    %1932 = vset.pattern.permute.xlu0 1
    %1933 = vperm.xlu0 %1932, %v22
    %v1934 = vpop.permute.xlu0 %1933
    %1936 = vset.pattern.permute.xlu0 1
    %1937 = vperm.xlu0 %1936, %v23
    %v1938 = vpop.permute.xlu0 %1937
    %1940 = vset.pattern.permute.xlu0 1
    %1941 = vperm.xlu0 %1940, %v24
    %v1942 = vpop.permute.xlu0 %1941
    %1944 = vset.pattern.permute.xlu0 1
    %1945 = vperm.xlu0 %1944, %v25
    %v1946 = vpop.permute.xlu0 %1945
    %1948 = vset.pattern.permute.xlu0 1
    %1949 = vperm.xlu0 %1948, %v26
    %v1950 = vpop.permute.xlu0 %1949
    %1952 = vset.pattern.permute.xlu0 1
    %1953 = vperm.xlu0 %1952, %v27
    %v1954 = vpop.permute.xlu0 %1953
    %1956 = vset.pattern.permute.xlu0 1
    %1957 = vperm.xlu0 %1956, %v28
    %v1958 = vpop.permute.xlu0 %1957
    %1960 = vset.pattern.permute.xlu0 1
    %1961 = vperm.xlu0 %1960, %v29
    %v1962 = vpop.permute.xlu0 %1961
    %1964 = vset.pattern.permute.xlu0 1
    %1965 = vperm.xlu0 %1964, %v30
    %v1966 = vpop.permute.xlu0 %1965
    %1968 = vset.pattern.permute.xlu0 1
    %1969 = vperm.xlu0 %1968, %v31
    %v1970 = vpop.permute.xlu0 %1969
    %1972 = vset.pattern.permute.xlu0 1
    %1973 = vperm.xlu0 %1972, %v32
    %v1974 = vpop.permute.xlu0 %1973
    %1976 = vset.pattern.permute.xlu0 1
    %1977 = vperm.xlu0 %1976, %v33
    %v1978 = vpop.permute.xlu0 %1977
    %1980 = vset.pattern.permute.xlu0 1
    %1981 = vperm.xlu0 %1980, %v34
    %v1982 = vpop.permute.xlu0 %1981
    %1984 = vset.pattern.permute.xlu0 1
    %1985 = vperm.xlu0 %1984, %v35
    %v1986 = vpop.permute.xlu0 %1985
    %1988 = vset.pattern.permute.xlu0 1
    %1989 = vperm.xlu0 %1988, %v36
    %v1990 = vpop.permute.xlu0 %1989
    %v1992 = vmul.f32 %v1930, %v275
    %v1993 = vmul.f32 %v1930, %v276
    %v1994 = vmul.f32 %v1934, %v275
    %v1995 = vmul.f32 %v1934, %v276
    %v1996 = vmul.f32 %v1938, %v275
    %v1997 = vmul.f32 %v1938, %v276
    %v1998 = vmul.f32 %v1942, %v275
    %v1999 = vmul.f32 %v1942, %v276
    %v2000 = vmul.f32 %v1946, %v275
    %v2001 = vmul.f32 %v1946, %v276
    %v2002 = vmul.f32 %v1950, %v275
    %v2003 = vmul.f32 %v1950, %v276
    %v2004 = vmul.f32 %v1954, %v275
    %v2005 = vmul.f32 %v1954, %v276
    %v2006 = vmul.f32 %v1958, %v275
    %v2007 = vmul.f32 %v1958, %v276
    %v2008 = vmul.f32 %v1962, %v275
    %v2009 = vmul.f32 %v1962, %v276
    %v2010 = vmul.f32 %v1966, %v275
    %v2011 = vmul.f32 %v1966, %v276
    %v2012 = vmul.f32 %v1970, %v275
    %v2013 = vmul.f32 %v1970, %v276
    %v2014 = vmul.f32 %v1974, %v275
    %v2015 = vmul.f32 %v1974, %v276
    %v2016 = vmul.f32 %v1978, %v275
    %v2017 = vmul.f32 %v1978, %v276
    %v2018 = vmul.f32 %v1982, %v275
    %v2019 = vmul.f32 %v1982, %v276
    %v2020 = vmul.f32 %v1986, %v275
    %v2021 = vmul.f32 %v1986, %v276
    %v2022 = vmul.f32 %v1990, %v275
    %v2023 = vmul.f32 %v1990, %v276
    %v2024 = vadd.f32 %v1896, %v1992
    %v2025 = vadd.f32 %v1897, %v1993
    %v2026 = vadd.f32 %v1898, %v1994
    %v2027 = vadd.f32 %v1899, %v1995
    %v2028 = vadd.f32 %v1900, %v1996
    %v2029 = vadd.f32 %v1901, %v1997
    %v2030 = vadd.f32 %v1902, %v1998
    %v2031 = vadd.f32 %v1903, %v1999
    %v2032 = vadd.f32 %v1904, %v2000
    %v2033 = vadd.f32 %v1905, %v2001
    %v2034 = vadd.f32 %v1906, %v2002
    %v2035 = vadd.f32 %v1907, %v2003
    %v2036 = vadd.f32 %v1908, %v2004
    %v2037 = vadd.f32 %v1909, %v2005
    %v2038 = vadd.f32 %v1910, %v2006
    %v2039 = vadd.f32 %v1911, %v2007
    %v2040 = vadd.f32 %v1912, %v2008
    %v2041 = vadd.f32 %v1913, %v2009
    %v2042 = vadd.f32 %v1914, %v2010
    %v2043 = vadd.f32 %v1915, %v2011
    %v2044 = vadd.f32 %v1916, %v2012
    %v2045 = vadd.f32 %v1917, %v2013
    %v2046 = vadd.f32 %v1918, %v2014
    %v2047 = vadd.f32 %v1919, %v2015
    %v2048 = vadd.f32 %v1920, %v2016
    %v2049 = vadd.f32 %v1921, %v2017
    %v2050 = vadd.f32 %v1922, %v2018
    %v2051 = vadd.f32 %v1923, %v2019
    %v2052 = vadd.f32 %v1924, %v2020
    %v2053 = vadd.f32 %v1925, %v2021
    %v2054 = vadd.f32 %v1926, %v2022
    %v2055 = vadd.f32 %v1927, %v2023
    %2056 = vset.pattern.permute.xlu0 2
    %2057 = vperm.xlu0 %2056, %v21
    %v2058 = vpop.permute.xlu0 %2057
    %2060 = vset.pattern.permute.xlu0 2
    %2061 = vperm.xlu0 %2060, %v22
    %v2062 = vpop.permute.xlu0 %2061
    %2064 = vset.pattern.permute.xlu0 2
    %2065 = vperm.xlu0 %2064, %v23
    %v2066 = vpop.permute.xlu0 %2065
    %2068 = vset.pattern.permute.xlu0 2
    %2069 = vperm.xlu0 %2068, %v24
    %v2070 = vpop.permute.xlu0 %2069
    %2072 = vset.pattern.permute.xlu0 2
    %2073 = vperm.xlu0 %2072, %v25
    %v2074 = vpop.permute.xlu0 %2073
    %2076 = vset.pattern.permute.xlu0 2
    %2077 = vperm.xlu0 %2076, %v26
    %v2078 = vpop.permute.xlu0 %2077
    %2080 = vset.pattern.permute.xlu0 2
    %2081 = vperm.xlu0 %2080, %v27
    %v2082 = vpop.permute.xlu0 %2081
    %2084 = vset.pattern.permute.xlu0 2
    %2085 = vperm.xlu0 %2084, %v28
    %v2086 = vpop.permute.xlu0 %2085
    %2088 = vset.pattern.permute.xlu0 2
    %2089 = vperm.xlu0 %2088, %v29
    %v2090 = vpop.permute.xlu0 %2089
    %2092 = vset.pattern.permute.xlu0 2
    %2093 = vperm.xlu0 %2092, %v30
    %v2094 = vpop.permute.xlu0 %2093
    %2096 = vset.pattern.permute.xlu0 2
    %2097 = vperm.xlu0 %2096, %v31
    %v2098 = vpop.permute.xlu0 %2097
    %2100 = vset.pattern.permute.xlu0 2
    %2101 = vperm.xlu0 %2100, %v32
    %v2102 = vpop.permute.xlu0 %2101
    %2104 = vset.pattern.permute.xlu0 2
    %2105 = vperm.xlu0 %2104, %v33
    %v2106 = vpop.permute.xlu0 %2105
    %2108 = vset.pattern.permute.xlu0 2
    %2109 = vperm.xlu0 %2108, %v34
    %v2110 = vpop.permute.xlu0 %2109
    %2112 = vset.pattern.permute.xlu0 2
    %2113 = vperm.xlu0 %2112, %v35
    %v2114 = vpop.permute.xlu0 %2113
    %2116 = vset.pattern.permute.xlu0 2
    %2117 = vperm.xlu0 %2116, %v36
    %v2118 = vpop.permute.xlu0 %2117
    %v2120 = vmul.f32 %v2058, %v409
    %v2121 = vmul.f32 %v2058, %v410
    %v2122 = vmul.f32 %v2062, %v409
    %v2123 = vmul.f32 %v2062, %v410
    %v2124 = vmul.f32 %v2066, %v409
    %v2125 = vmul.f32 %v2066, %v410
    %v2126 = vmul.f32 %v2070, %v409
    %v2127 = vmul.f32 %v2070, %v410
    %v2128 = vmul.f32 %v2074, %v409
    %v2129 = vmul.f32 %v2074, %v410
    %v2130 = vmul.f32 %v2078, %v409
    %v2131 = vmul.f32 %v2078, %v410
    %v2132 = vmul.f32 %v2082, %v409
    %v2133 = vmul.f32 %v2082, %v410
    %v2134 = vmul.f32 %v2086, %v409
    %v2135 = vmul.f32 %v2086, %v410
    %v2136 = vmul.f32 %v2090, %v409
    %v2137 = vmul.f32 %v2090, %v410
    %v2138 = vmul.f32 %v2094, %v409
    %v2139 = vmul.f32 %v2094, %v410
    %v2140 = vmul.f32 %v2098, %v409
    %v2141 = vmul.f32 %v2098, %v410
    %v2142 = vmul.f32 %v2102, %v409
    %v2143 = vmul.f32 %v2102, %v410
    %v2144 = vmul.f32 %v2106, %v409
    %v2145 = vmul.f32 %v2106, %v410
    %v2146 = vmul.f32 %v2110, %v409
    %v2147 = vmul.f32 %v2110, %v410
    %v2148 = vmul.f32 %v2114, %v409
    %v2149 = vmul.f32 %v2114, %v410
    %v2150 = vmul.f32 %v2118, %v409
    %v2151 = vmul.f32 %v2118, %v410
    %v2152 = vadd.f32 %v2024, %v2120
    %v2153 = vadd.f32 %v2025, %v2121
    %v2154 = vadd.f32 %v2026, %v2122
    %v2155 = vadd.f32 %v2027, %v2123
    %v2156 = vadd.f32 %v2028, %v2124
    %v2157 = vadd.f32 %v2029, %v2125
    %v2158 = vadd.f32 %v2030, %v2126
    %v2159 = vadd.f32 %v2031, %v2127
    %v2160 = vadd.f32 %v2032, %v2128
    %v2161 = vadd.f32 %v2033, %v2129
    %v2162 = vadd.f32 %v2034, %v2130
    %v2163 = vadd.f32 %v2035, %v2131
    %v2164 = vadd.f32 %v2036, %v2132
    %v2165 = vadd.f32 %v2037, %v2133
    %v2166 = vadd.f32 %v2038, %v2134
    %v2167 = vadd.f32 %v2039, %v2135
    %v2168 = vadd.f32 %v2040, %v2136
    %v2169 = vadd.f32 %v2041, %v2137
    %v2170 = vadd.f32 %v2042, %v2138
    %v2171 = vadd.f32 %v2043, %v2139
    %v2172 = vadd.f32 %v2044, %v2140
    %v2173 = vadd.f32 %v2045, %v2141
    %v2174 = vadd.f32 %v2046, %v2142
    %v2175 = vadd.f32 %v2047, %v2143
    %v2176 = vadd.f32 %v2048, %v2144
    %v2177 = vadd.f32 %v2049, %v2145
    %v2178 = vadd.f32 %v2050, %v2146
    %v2179 = vadd.f32 %v2051, %v2147
    %v2180 = vadd.f32 %v2052, %v2148
    %v2181 = vadd.f32 %v2053, %v2149
    %v2182 = vadd.f32 %v2054, %v2150
    %v2183 = vadd.f32 %v2055, %v2151
    %2184 = vset.pattern.permute.xlu0 3
    %2185 = vperm.xlu0 %2184, %v21
    %v2186 = vpop.permute.xlu0 %2185
    %2188 = vset.pattern.permute.xlu0 3
    %2189 = vperm.xlu0 %2188, %v22
    %v2190 = vpop.permute.xlu0 %2189
    %2192 = vset.pattern.permute.xlu0 3
    %2193 = vperm.xlu0 %2192, %v23
    %v2194 = vpop.permute.xlu0 %2193
    %2196 = vset.pattern.permute.xlu0 3
    %2197 = vperm.xlu0 %2196, %v24
    %v2198 = vpop.permute.xlu0 %2197
    %2200 = vset.pattern.permute.xlu0 3
    %2201 = vperm.xlu0 %2200, %v25
    %v2202 = vpop.permute.xlu0 %2201
    %2204 = vset.pattern.permute.xlu0 3
    %2205 = vperm.xlu0 %2204, %v26
    %v2206 = vpop.permute.xlu0 %2205
    %2208 = vset.pattern.permute.xlu0 3
    %2209 = vperm.xlu0 %2208, %v27
    %v2210 = vpop.permute.xlu0 %2209
    %2212 = vset.pattern.permute.xlu0 3
    %2213 = vperm.xlu0 %2212, %v28
    %v2214 = vpop.permute.xlu0 %2213
    %2216 = vset.pattern.permute.xlu0 3
    %2217 = vperm.xlu0 %2216, %v29
    %v2218 = vpop.permute.xlu0 %2217
    %2220 = vset.pattern.permute.xlu0 3
    %2221 = vperm.xlu0 %2220, %v30
    %v2222 = vpop.permute.xlu0 %2221
    %2224 = vset.pattern.permute.xlu0 3
    %2225 = vperm.xlu0 %2224, %v31
    %v2226 = vpop.permute.xlu0 %2225
    %2228 = vset.pattern.permute.xlu0 3
    %2229 = vperm.xlu0 %2228, %v32
    %v2230 = vpop.permute.xlu0 %2229
    %2232 = vset.pattern.permute.xlu0 3
    %2233 = vperm.xlu0 %2232, %v33
    %v2234 = vpop.permute.xlu0 %2233
    %2236 = vset.pattern.permute.xlu0 3
    %2237 = vperm.xlu0 %2236, %v34
    %v2238 = vpop.permute.xlu0 %2237
    %2240 = vset.pattern.permute.xlu0 3
    %2241 = vperm.xlu0 %2240, %v35
    %v2242 = vpop.permute.xlu0 %2241
    %2244 = vset.pattern.permute.xlu0 3
    %2245 = vperm.xlu0 %2244, %v36
    %v2246 = vpop.permute.xlu0 %2245
    %v2248 = vmul.f32 %v2186, %v543
    %v2249 = vmul.f32 %v2186, %v544
    %v2250 = vmul.f32 %v2190, %v543
    %v2251 = vmul.f32 %v2190, %v544
    %v2252 = vmul.f32 %v2194, %v543
    %v2253 = vmul.f32 %v2194, %v544
    %v2254 = vmul.f32 %v2198, %v543
    %v2255 = vmul.f32 %v2198, %v544
    %v2256 = vmul.f32 %v2202, %v543
    %v2257 = vmul.f32 %v2202, %v544
    %v2258 = vmul.f32 %v2206, %v543
    %v2259 = vmul.f32 %v2206, %v544
    %v2260 = vmul.f32 %v2210, %v543
    %v2261 = vmul.f32 %v2210, %v544
    %v2262 = vmul.f32 %v2214, %v543
    %v2263 = vmul.f32 %v2214, %v544
    %v2264 = vmul.f32 %v2218, %v543
    %v2265 = vmul.f32 %v2218, %v544
    %v2266 = vmul.f32 %v2222, %v543
    %v2267 = vmul.f32 %v2222, %v544
    %v2268 = vmul.f32 %v2226, %v543
    %v2269 = vmul.f32 %v2226, %v544
    %v2270 = vmul.f32 %v2230, %v543
    %v2271 = vmul.f32 %v2230, %v544
    %v2272 = vmul.f32 %v2234, %v543
    %v2273 = vmul.f32 %v2234, %v544
    %v2274 = vmul.f32 %v2238, %v543
    %v2275 = vmul.f32 %v2238, %v544
    %v2276 = vmul.f32 %v2242, %v543
    %v2277 = vmul.f32 %v2242, %v544
    %v2278 = vmul.f32 %v2246, %v543
    %v2279 = vmul.f32 %v2246, %v544
    %v2280 = vadd.f32 %v2152, %v2248
    %v2281 = vadd.f32 %v2153, %v2249
    %v2282 = vadd.f32 %v2154, %v2250
    %v2283 = vadd.f32 %v2155, %v2251
    %v2284 = vadd.f32 %v2156, %v2252
    %v2285 = vadd.f32 %v2157, %v2253
    %v2286 = vadd.f32 %v2158, %v2254
    %v2287 = vadd.f32 %v2159, %v2255
    %v2288 = vadd.f32 %v2160, %v2256
    %v2289 = vadd.f32 %v2161, %v2257
    %v2290 = vadd.f32 %v2162, %v2258
    %v2291 = vadd.f32 %v2163, %v2259
    %v2292 = vadd.f32 %v2164, %v2260
    %v2293 = vadd.f32 %v2165, %v2261
    %v2294 = vadd.f32 %v2166, %v2262
    %v2295 = vadd.f32 %v2167, %v2263
    %v2296 = vadd.f32 %v2168, %v2264
    %v2297 = vadd.f32 %v2169, %v2265
    %v2298 = vadd.f32 %v2170, %v2266
    %v2299 = vadd.f32 %v2171, %v2267
    %v2300 = vadd.f32 %v2172, %v2268
    %v2301 = vadd.f32 %v2173, %v2269
    %v2302 = vadd.f32 %v2174, %v2270
    %v2303 = vadd.f32 %v2175, %v2271
    %v2304 = vadd.f32 %v2176, %v2272
    %v2305 = vadd.f32 %v2177, %v2273
    %v2306 = vadd.f32 %v2178, %v2274
    %v2307 = vadd.f32 %v2179, %v2275
    %v2308 = vadd.f32 %v2180, %v2276
    %v2309 = vadd.f32 %v2181, %v2277
    %v2310 = vadd.f32 %v2182, %v2278
    %v2311 = vadd.f32 %v2183, %v2279
    %v2312 = vpack.c.bf16 %v2282, %v2280
    %v2313 = vpack.c.bf16 %v2283, %v2281
    %v2314 = vpack.c.bf16 %v2286, %v2284
    %v2315 = vpack.c.bf16 %v2287, %v2285
    %v2316 = vpack.c.bf16 %v2290, %v2288
    %v2317 = vpack.c.bf16 %v2291, %v2289
    %v2318 = vpack.c.bf16 %v2294, %v2292
    %v2319 = vpack.c.bf16 %v2295, %v2293
    %v2320 = vpack.c.bf16 %v2298, %v2296
    %v2321 = vpack.c.bf16 %v2299, %v2297
    %v2322 = vpack.c.bf16 %v2302, %v2300
    %v2323 = vpack.c.bf16 %v2303, %v2301
    %v2324 = vpack.c.bf16 %v2306, %v2304
    %v2325 = vpack.c.bf16 %v2307, %v2305
    %v2326 = vpack.c.bf16 %v2310, %v2308
    %v2327 = vpack.c.bf16 %v2311, %v2309
    %2329 = vset.pattern.permute.xlu0 0
    %2330 = vperm.xlu0 %2329, %v70
    %v2331 = vpop.permute.xlu0 %2330
    %2333 = vmatpush.bf16.msra.mxu0 %v2326
    %2334 = vmatpush.bf16.msra.mxu0 %v2324
    %2335 = vmatpush.bf16.msra.mxu0 %v2322
    %2336 = vmatpush.bf16.msra.mxu0 %v2320
    %2337 = vmatpush.bf16.msra.mxu0 %v2318
    %2338 = vmatpush.bf16.msra.mxu0 %v2316
    %2339 = vmatpush.bf16.msra.mxu0 %v2314
    %2340 = vmatpush.bf16.msra.mxu0 %v2312
    %2341 = vmatmul.bf16.gmra.mxu0 %v1815
    %v2342 = vpop.f32.mrf.mxu0
    %v2343 = vadd.f32 %v2331, %v2342
    %v2344 = vpop.f32.mrf.mxu0
    %2345 = vdwg.mxu0
    %2346 = vmatpush.bf16.msra.mxu0 %v2327
    %2347 = vmatpush.bf16.msra.mxu0 %v2325
    %2348 = vmatpush.bf16.msra.mxu0 %v2323
    %2349 = vmatpush.bf16.msra.mxu0 %v2321
    %2350 = vmatpush.bf16.msra.mxu0 %v2319
    %2351 = vmatpush.bf16.msra.mxu0 %v2317
    %2352 = vmatpush.bf16.msra.mxu0 %v2315
    %2353 = vmatpush.bf16.msra.mxu0 %v2313
    %2354 = vmatmul.bf16.gmra.mxu0 %v1815
    %v2355 = vpop.f32.mrf.mxu0
    %v2356 = vadd.f32 %v2331, %v2355
    %v2357 = vpop.f32.mrf.mxu0
    %2358 = vdwg.mxu0
    %v2361 = vrot.slane %v2356, 4
    %vm2362 = vcmask 1043456
    %v2363 = vsel %vm2362, %v2343, %v2361
    %2365 = vst [vmem:[#allocation2] sm:$0xff] %v2363
    %s2366 = scalar_lea.vmem %s0, 8
    %v2367 = vld [vmem:[%s2366] sm:$0xff]
    %v2369 = vperm.slane %v2367, 0
    %v2370 = vperm.slane %v2367, 4
    %v2373 = vperm.slane %v2369, 0
    %v2374 = vperm.slane %v2370, 0
    %v2375 = vmul.f32 %v91, %v2373
    %v2376 = vmul.f32 %v91, %v2374
    %v2377 = vmul.f32 %v96, %v2373
    %v2378 = vmul.f32 %v96, %v2374
    %v2379 = vmul.f32 %v101, %v2373
    %v2380 = vmul.f32 %v101, %v2374
    %v2381 = vmul.f32 %v106, %v2373
    %v2382 = vmul.f32 %v106, %v2374
    %v2383 = vmul.f32 %v111, %v2373
    %v2384 = vmul.f32 %v111, %v2374
    %v2385 = vmul.f32 %v116, %v2373
    %v2386 = vmul.f32 %v116, %v2374
    %v2387 = vmul.f32 %v121, %v2373
    %v2388 = vmul.f32 %v121, %v2374
    %v2389 = vmul.f32 %v126, %v2373
    %v2390 = vmul.f32 %v126, %v2374
    %v2391 = vmul.f32 %v131, %v2373
    %v2392 = vmul.f32 %v131, %v2374
    %v2393 = vmul.f32 %v136, %v2373
    %v2394 = vmul.f32 %v136, %v2374
    %v2395 = vmul.f32 %v141, %v2373
    %v2396 = vmul.f32 %v141, %v2374
    %v2397 = vmul.f32 %v146, %v2373
    %v2398 = vmul.f32 %v146, %v2374
    %v2399 = vmul.f32 %v151, %v2373
    %v2400 = vmul.f32 %v151, %v2374
    %v2401 = vmul.f32 %v156, %v2373
    %v2402 = vmul.f32 %v156, %v2374
    %v2403 = vmul.f32 %v161, %v2373
    %v2404 = vmul.f32 %v161, %v2374
    %v2405 = vmul.f32 %v166, %v2373
    %v2406 = vmul.f32 %v166, %v2374
    %v2407 = vperm.slane %v2367, 1
    %v2408 = vperm.slane %v2367, 5
    %v2411 = vperm.slane %v2407, 1
    %v2412 = vperm.slane %v2408, 1
    %v2413 = vmul.f32 %v209, %v2411
    %v2414 = vmul.f32 %v209, %v2412
    %v2415 = vmul.f32 %v213, %v2411
    %v2416 = vmul.f32 %v213, %v2412
    %v2417 = vmul.f32 %v217, %v2411
    %v2418 = vmul.f32 %v217, %v2412
    %v2419 = vmul.f32 %v221, %v2411
    %v2420 = vmul.f32 %v221, %v2412
    %v2421 = vmul.f32 %v225, %v2411
    %v2422 = vmul.f32 %v225, %v2412
    %v2423 = vmul.f32 %v229, %v2411
    %v2424 = vmul.f32 %v229, %v2412
    %v2425 = vmul.f32 %v233, %v2411
    %v2426 = vmul.f32 %v233, %v2412
    %v2427 = vmul.f32 %v237, %v2411
    %v2428 = vmul.f32 %v237, %v2412
    %v2429 = vmul.f32 %v241, %v2411
    %v2430 = vmul.f32 %v241, %v2412
    %v2431 = vmul.f32 %v245, %v2411
    %v2432 = vmul.f32 %v245, %v2412
    %v2433 = vmul.f32 %v249, %v2411
    %v2434 = vmul.f32 %v249, %v2412
    %v2435 = vmul.f32 %v253, %v2411
    %v2436 = vmul.f32 %v253, %v2412
    %v2437 = vmul.f32 %v257, %v2411
    %v2438 = vmul.f32 %v257, %v2412
    %v2439 = vmul.f32 %v261, %v2411
    %v2440 = vmul.f32 %v261, %v2412
    %v2441 = vmul.f32 %v265, %v2411
    %v2442 = vmul.f32 %v265, %v2412
    %v2443 = vmul.f32 %v269, %v2411
    %v2444 = vmul.f32 %v269, %v2412
    %v2445 = vadd.f32 %v2375, %v2413
    %v2446 = vadd.f32 %v2376, %v2414
    %v2447 = vadd.f32 %v2377, %v2415
    %v2448 = vadd.f32 %v2378, %v2416
    %v2449 = vadd.f32 %v2379, %v2417
    %v2450 = vadd.f32 %v2380, %v2418
    %v2451 = vadd.f32 %v2381, %v2419
    %v2452 = vadd.f32 %v2382, %v2420
    %v2453 = vadd.f32 %v2383, %v2421
    %v2454 = vadd.f32 %v2384, %v2422
    %v2455 = vadd.f32 %v2385, %v2423
    %v2456 = vadd.f32 %v2386, %v2424
    %v2457 = vadd.f32 %v2387, %v2425
    %v2458 = vadd.f32 %v2388, %v2426
    %v2459 = vadd.f32 %v2389, %v2427
    %v2460 = vadd.f32 %v2390, %v2428
    %v2461 = vadd.f32 %v2391, %v2429
    %v2462 = vadd.f32 %v2392, %v2430
    %v2463 = vadd.f32 %v2393, %v2431
    %v2464 = vadd.f32 %v2394, %v2432
    %v2465 = vadd.f32 %v2395, %v2433
    %v2466 = vadd.f32 %v2396, %v2434
    %v2467 = vadd.f32 %v2397, %v2435
    %v2468 = vadd.f32 %v2398, %v2436
    %v2469 = vadd.f32 %v2399, %v2437
    %v2470 = vadd.f32 %v2400, %v2438
    %v2471 = vadd.f32 %v2401, %v2439
    %v2472 = vadd.f32 %v2402, %v2440
    %v2473 = vadd.f32 %v2403, %v2441
    %v2474 = vadd.f32 %v2404, %v2442
    %v2475 = vadd.f32 %v2405, %v2443
    %v2476 = vadd.f32 %v2406, %v2444
    %v2477 = vperm.slane %v2367, 2
    %v2478 = vperm.slane %v2367, 6
    %v2481 = vperm.slane %v2477, 2
    %v2482 = vperm.slane %v2478, 2
    %v2483 = vmul.f32 %v343, %v2481
    %v2484 = vmul.f32 %v343, %v2482
    %v2485 = vmul.f32 %v347, %v2481
    %v2486 = vmul.f32 %v347, %v2482
    %v2487 = vmul.f32 %v351, %v2481
    %v2488 = vmul.f32 %v351, %v2482
    %v2489 = vmul.f32 %v355, %v2481
    %v2490 = vmul.f32 %v355, %v2482
    %v2491 = vmul.f32 %v359, %v2481
    %v2492 = vmul.f32 %v359, %v2482
    %v2493 = vmul.f32 %v363, %v2481
    %v2494 = vmul.f32 %v363, %v2482
    %v2495 = vmul.f32 %v367, %v2481
    %v2496 = vmul.f32 %v367, %v2482
    %v2497 = vmul.f32 %v371, %v2481
    %v2498 = vmul.f32 %v371, %v2482
    %v2499 = vmul.f32 %v375, %v2481
    %v2500 = vmul.f32 %v375, %v2482
    %v2501 = vmul.f32 %v379, %v2481
    %v2502 = vmul.f32 %v379, %v2482
    %v2503 = vmul.f32 %v383, %v2481
    %v2504 = vmul.f32 %v383, %v2482
    %v2505 = vmul.f32 %v387, %v2481
    %v2506 = vmul.f32 %v387, %v2482
    %v2507 = vmul.f32 %v391, %v2481
    %v2508 = vmul.f32 %v391, %v2482
    %v2509 = vmul.f32 %v395, %v2481
    %v2510 = vmul.f32 %v395, %v2482
    %v2511 = vmul.f32 %v399, %v2481
    %v2512 = vmul.f32 %v399, %v2482
    %v2513 = vmul.f32 %v403, %v2481
    %v2514 = vmul.f32 %v403, %v2482
    %v2515 = vadd.f32 %v2445, %v2483
    %v2516 = vadd.f32 %v2446, %v2484
    %v2517 = vadd.f32 %v2447, %v2485
    %v2518 = vadd.f32 %v2448, %v2486
    %v2519 = vadd.f32 %v2449, %v2487
    %v2520 = vadd.f32 %v2450, %v2488
    %v2521 = vadd.f32 %v2451, %v2489
    %v2522 = vadd.f32 %v2452, %v2490
    %v2523 = vadd.f32 %v2453, %v2491
    %v2524 = vadd.f32 %v2454, %v2492
    %v2525 = vadd.f32 %v2455, %v2493
    %v2526 = vadd.f32 %v2456, %v2494
    %v2527 = vadd.f32 %v2457, %v2495
    %v2528 = vadd.f32 %v2458, %v2496
    %v2529 = vadd.f32 %v2459, %v2497
    %v2530 = vadd.f32 %v2460, %v2498
    %v2531 = vadd.f32 %v2461, %v2499
    %v2532 = vadd.f32 %v2462, %v2500
    %v2533 = vadd.f32 %v2463, %v2501
    %v2534 = vadd.f32 %v2464, %v2502
    %v2535 = vadd.f32 %v2465, %v2503
    %v2536 = vadd.f32 %v2466, %v2504
    %v2537 = vadd.f32 %v2467, %v2505
    %v2538 = vadd.f32 %v2468, %v2506
    %v2539 = vadd.f32 %v2469, %v2507
    %v2540 = vadd.f32 %v2470, %v2508
    %v2541 = vadd.f32 %v2471, %v2509
    %v2542 = vadd.f32 %v2472, %v2510
    %v2543 = vadd.f32 %v2473, %v2511
    %v2544 = vadd.f32 %v2474, %v2512
    %v2545 = vadd.f32 %v2475, %v2513
    %v2546 = vadd.f32 %v2476, %v2514
    %v2547 = vperm.slane %v2367, 3
    %v2548 = vperm.slane %v2367, 7
    %v2551 = vperm.slane %v2547, 3
    %v2552 = vperm.slane %v2548, 3
    %v2553 = vmul.f32 %v477, %v2551
    %v2554 = vmul.f32 %v477, %v2552
    %v2555 = vmul.f32 %v481, %v2551
    %v2556 = vmul.f32 %v481, %v2552
    %v2557 = vmul.f32 %v485, %v2551
    %v2558 = vmul.f32 %v485, %v2552
    %v2559 = vmul.f32 %v489, %v2551
    %v2560 = vmul.f32 %v489, %v2552
    %v2561 = vmul.f32 %v493, %v2551
    %v2562 = vmul.f32 %v493, %v2552
    %v2563 = vmul.f32 %v497, %v2551
    %v2564 = vmul.f32 %v497, %v2552
    %v2565 = vmul.f32 %v501, %v2551
    %v2566 = vmul.f32 %v501, %v2552
    %v2567 = vmul.f32 %v505, %v2551
    %v2568 = vmul.f32 %v505, %v2552
    %v2569 = vmul.f32 %v509, %v2551
    %v2570 = vmul.f32 %v509, %v2552
    %v2571 = vmul.f32 %v513, %v2551
    %v2572 = vmul.f32 %v513, %v2552
    %v2573 = vmul.f32 %v517, %v2551
    %v2574 = vmul.f32 %v517, %v2552
    %v2575 = vmul.f32 %v521, %v2551
    %v2576 = vmul.f32 %v521, %v2552
    %v2577 = vmul.f32 %v525, %v2551
    %v2578 = vmul.f32 %v525, %v2552
    %v2579 = vmul.f32 %v529, %v2551
    %v2580 = vmul.f32 %v529, %v2552
    %v2581 = vmul.f32 %v533, %v2551
    %v2582 = vmul.f32 %v533, %v2552
    %v2583 = vmul.f32 %v537, %v2551
    %v2584 = vmul.f32 %v537, %v2552
    %v2585 = vadd.f32 %v2515, %v2553
    %v2586 = vadd.f32 %v2516, %v2554
    %v2587 = vadd.f32 %v2517, %v2555
    %v2588 = vadd.f32 %v2518, %v2556
    %v2589 = vadd.f32 %v2519, %v2557
    %v2590 = vadd.f32 %v2520, %v2558
    %v2591 = vadd.f32 %v2521, %v2559
    %v2592 = vadd.f32 %v2522, %v2560
    %v2593 = vadd.f32 %v2523, %v2561
    %v2594 = vadd.f32 %v2524, %v2562
    %v2595 = vadd.f32 %v2525, %v2563
    %v2596 = vadd.f32 %v2526, %v2564
    %v2597 = vadd.f32 %v2527, %v2565
    %v2598 = vadd.f32 %v2528, %v2566
    %v2599 = vadd.f32 %v2529, %v2567
    %v2600 = vadd.f32 %v2530, %v2568
    %v2601 = vadd.f32 %v2531, %v2569
    %v2602 = vadd.f32 %v2532, %v2570
    %v2603 = vadd.f32 %v2533, %v2571
    %v2604 = vadd.f32 %v2534, %v2572
    %v2605 = vadd.f32 %v2535, %v2573
    %v2606 = vadd.f32 %v2536, %v2574
    %v2607 = vadd.f32 %v2537, %v2575
    %v2608 = vadd.f32 %v2538, %v2576
    %v2609 = vadd.f32 %v2539, %v2577
    %v2610 = vadd.f32 %v2540, %v2578
    %v2611 = vadd.f32 %v2541, %v2579
    %v2612 = vadd.f32 %v2542, %v2580
    %v2613 = vadd.f32 %v2543, %v2581
    %v2614 = vadd.f32 %v2544, %v2582
    %v2615 = vadd.f32 %v2545, %v2583
    %v2616 = vadd.f32 %v2546, %v2584
    %v2617 = vmul.f32 %v612, %v2373
    %v2618 = vmul.f32 %v612, %v2374
    %v2619 = vmul.f32 %v617, %v2373
    %v2620 = vmul.f32 %v617, %v2374
    %v2621 = vmul.f32 %v622, %v2373
    %v2622 = vmul.f32 %v622, %v2374
    %v2623 = vmul.f32 %v627, %v2373
    %v2624 = vmul.f32 %v627, %v2374
    %v2625 = vmul.f32 %v632, %v2373
    %v2626 = vmul.f32 %v632, %v2374
    %v2627 = vmul.f32 %v637, %v2373
    %v2628 = vmul.f32 %v637, %v2374
    %v2629 = vmul.f32 %v642, %v2373
    %v2630 = vmul.f32 %v642, %v2374
    %v2631 = vmul.f32 %v647, %v2373
    %v2632 = vmul.f32 %v647, %v2374
    %v2633 = vmul.f32 %v652, %v2373
    %v2634 = vmul.f32 %v652, %v2374
    %v2635 = vmul.f32 %v657, %v2373
    %v2636 = vmul.f32 %v657, %v2374
    %v2637 = vmul.f32 %v662, %v2373
    %v2638 = vmul.f32 %v662, %v2374
    %v2639 = vmul.f32 %v667, %v2373
    %v2640 = vmul.f32 %v667, %v2374
    %v2641 = vmul.f32 %v672, %v2373
    %v2642 = vmul.f32 %v672, %v2374
    %v2643 = vmul.f32 %v677, %v2373
    %v2644 = vmul.f32 %v677, %v2374
    %v2645 = vmul.f32 %v682, %v2373
    %v2646 = vmul.f32 %v682, %v2374
    %v2647 = vmul.f32 %v687, %v2373
    %v2648 = vmul.f32 %v687, %v2374
    %v2649 = vmul.f32 %v723, %v2411
    %v2650 = vmul.f32 %v723, %v2412
    %v2651 = vmul.f32 %v727, %v2411
    %v2652 = vmul.f32 %v727, %v2412
    %v2653 = vmul.f32 %v731, %v2411
    %v2654 = vmul.f32 %v731, %v2412
    %v2655 = vmul.f32 %v735, %v2411
    %v2656 = vmul.f32 %v735, %v2412
    %v2657 = vmul.f32 %v739, %v2411
    %v2658 = vmul.f32 %v739, %v2412
    %v2659 = vmul.f32 %v743, %v2411
    %v2660 = vmul.f32 %v743, %v2412
    %v2661 = vmul.f32 %v747, %v2411
    %v2662 = vmul.f32 %v747, %v2412
    %v2663 = vmul.f32 %v751, %v2411
    %v2664 = vmul.f32 %v751, %v2412
    %v2665 = vmul.f32 %v755, %v2411
    %v2666 = vmul.f32 %v755, %v2412
    %v2667 = vmul.f32 %v759, %v2411
    %v2668 = vmul.f32 %v759, %v2412
    %v2669 = vmul.f32 %v763, %v2411
    %v2670 = vmul.f32 %v763, %v2412
    %v2671 = vmul.f32 %v767, %v2411
    %v2672 = vmul.f32 %v767, %v2412
    %v2673 = vmul.f32 %v771, %v2411
    %v2674 = vmul.f32 %v771, %v2412
    %v2675 = vmul.f32 %v775, %v2411
    %v2676 = vmul.f32 %v775, %v2412
    %v2677 = vmul.f32 %v779, %v2411
    %v2678 = vmul.f32 %v779, %v2412
    %v2679 = vmul.f32 %v783, %v2411
    %v2680 = vmul.f32 %v783, %v2412
    %v2681 = vadd.f32 %v2617, %v2649
    %v2682 = vadd.f32 %v2618, %v2650
    %v2683 = vadd.f32 %v2619, %v2651
    %v2684 = vadd.f32 %v2620, %v2652
    %v2685 = vadd.f32 %v2621, %v2653
    %v2686 = vadd.f32 %v2622, %v2654
    %v2687 = vadd.f32 %v2623, %v2655
    %v2688 = vadd.f32 %v2624, %v2656
    %v2689 = vadd.f32 %v2625, %v2657
    %v2690 = vadd.f32 %v2626, %v2658
    %v2691 = vadd.f32 %v2627, %v2659
    %v2692 = vadd.f32 %v2628, %v2660
    %v2693 = vadd.f32 %v2629, %v2661
    %v2694 = vadd.f32 %v2630, %v2662
    %v2695 = vadd.f32 %v2631, %v2663
    %v2696 = vadd.f32 %v2632, %v2664
    %v2697 = vadd.f32 %v2633, %v2665
    %v2698 = vadd.f32 %v2634, %v2666
    %v2699 = vadd.f32 %v2635, %v2667
    %v2700 = vadd.f32 %v2636, %v2668
    %v2701 = vadd.f32 %v2637, %v2669
    %v2702 = vadd.f32 %v2638, %v2670
    %v2703 = vadd.f32 %v2639, %v2671
    %v2704 = vadd.f32 %v2640, %v2672
    %v2705 = vadd.f32 %v2641, %v2673
    %v2706 = vadd.f32 %v2642, %v2674
    %v2707 = vadd.f32 %v2643, %v2675
    %v2708 = vadd.f32 %v2644, %v2676
    %v2709 = vadd.f32 %v2645, %v2677
    %v2710 = vadd.f32 %v2646, %v2678
    %v2711 = vadd.f32 %v2647, %v2679
    %v2712 = vadd.f32 %v2648, %v2680
    %v2713 = vmul.f32 %v851, %v2481
    %v2714 = vmul.f32 %v851, %v2482
    %v2715 = vmul.f32 %v855, %v2481
    %v2716 = vmul.f32 %v855, %v2482
    %v2717 = vmul.f32 %v859, %v2481
    %v2718 = vmul.f32 %v859, %v2482
    %v2719 = vmul.f32 %v863, %v2481
    %v2720 = vmul.f32 %v863, %v2482
    %v2721 = vmul.f32 %v867, %v2481
    %v2722 = vmul.f32 %v867, %v2482
    %v2723 = vmul.f32 %v871, %v2481
    %v2724 = vmul.f32 %v871, %v2482
    %v2725 = vmul.f32 %v875, %v2481
    %v2726 = vmul.f32 %v875, %v2482
    %v2727 = vmul.f32 %v879, %v2481
    %v2728 = vmul.f32 %v879, %v2482
    %v2729 = vmul.f32 %v883, %v2481
    %v2730 = vmul.f32 %v883, %v2482
    %v2731 = vmul.f32 %v887, %v2481
    %v2732 = vmul.f32 %v887, %v2482
    %v2733 = vmul.f32 %v891, %v2481
    %v2734 = vmul.f32 %v891, %v2482
    %v2735 = vmul.f32 %v895, %v2481
    %v2736 = vmul.f32 %v895, %v2482
    %v2737 = vmul.f32 %v899, %v2481
    %v2738 = vmul.f32 %v899, %v2482
    %v2739 = vmul.f32 %v903, %v2481
    %v2740 = vmul.f32 %v903, %v2482
    %v2741 = vmul.f32 %v907, %v2481
    %v2742 = vmul.f32 %v907, %v2482
    %v2743 = vmul.f32 %v911, %v2481
    %v2744 = vmul.f32 %v911, %v2482
    %v2745 = vadd.f32 %v2681, %v2713
    %v2746 = vadd.f32 %v2682, %v2714
    %v2747 = vadd.f32 %v2683, %v2715
    %v2748 = vadd.f32 %v2684, %v2716
    %v2749 = vadd.f32 %v2685, %v2717
    %v2750 = vadd.f32 %v2686, %v2718
    %v2751 = vadd.f32 %v2687, %v2719
    %v2752 = vadd.f32 %v2688, %v2720
    %v2753 = vadd.f32 %v2689, %v2721
    %v2754 = vadd.f32 %v2690, %v2722
    %v2755 = vadd.f32 %v2691, %v2723
    %v2756 = vadd.f32 %v2692, %v2724
    %v2757 = vadd.f32 %v2693, %v2725
    %v2758 = vadd.f32 %v2694, %v2726
    %v2759 = vadd.f32 %v2695, %v2727
    %v2760 = vadd.f32 %v2696, %v2728
    %v2761 = vadd.f32 %v2697, %v2729
    %v2762 = vadd.f32 %v2698, %v2730
    %v2763 = vadd.f32 %v2699, %v2731
    %v2764 = vadd.f32 %v2700, %v2732
    %v2765 = vadd.f32 %v2701, %v2733
    %v2766 = vadd.f32 %v2702, %v2734
    %v2767 = vadd.f32 %v2703, %v2735
    %v2768 = vadd.f32 %v2704, %v2736
    %v2769 = vadd.f32 %v2705, %v2737
    %v2770 = vadd.f32 %v2706, %v2738
    %v2771 = vadd.f32 %v2707, %v2739
    %v2772 = vadd.f32 %v2708, %v2740
    %v2773 = vadd.f32 %v2709, %v2741
    %v2774 = vadd.f32 %v2710, %v2742
    %v2775 = vadd.f32 %v2711, %v2743
    %v2776 = vadd.f32 %v2712, %v2744
    %v2777 = vmul.f32 %v979, %v2551
    %v2778 = vmul.f32 %v979, %v2552
    %v2779 = vmul.f32 %v983, %v2551
    %v2780 = vmul.f32 %v983, %v2552
    %v2781 = vmul.f32 %v987, %v2551
    %v2782 = vmul.f32 %v987, %v2552
    %v2783 = vmul.f32 %v991, %v2551
    %v2784 = vmul.f32 %v991, %v2552
    %v2785 = vmul.f32 %v995, %v2551
    %v2786 = vmul.f32 %v995, %v2552
    %v2787 = vmul.f32 %v999, %v2551
    %v2788 = vmul.f32 %v999, %v2552
    %v2789 = vmul.f32 %v1003, %v2551
    %v2790 = vmul.f32 %v1003, %v2552
    %v2791 = vmul.f32 %v1007, %v2551
    %v2792 = vmul.f32 %v1007, %v2552
    %v2793 = vmul.f32 %v1011, %v2551
    %v2794 = vmul.f32 %v1011, %v2552
    %v2795 = vmul.f32 %v1015, %v2551
    %v2796 = vmul.f32 %v1015, %v2552
    %v2797 = vmul.f32 %v1019, %v2551
    %v2798 = vmul.f32 %v1019, %v2552
    %v2799 = vmul.f32 %v1023, %v2551
    %v2800 = vmul.f32 %v1023, %v2552
    %v2801 = vmul.f32 %v1027, %v2551
    %v2802 = vmul.f32 %v1027, %v2552
    %v2803 = vmul.f32 %v1031, %v2551
    %v2804 = vmul.f32 %v1031, %v2552
    %v2805 = vmul.f32 %v1035, %v2551
    %v2806 = vmul.f32 %v1035, %v2552
    %v2807 = vmul.f32 %v1039, %v2551
    %v2808 = vmul.f32 %v1039, %v2552
    %v2809 = vadd.f32 %v2745, %v2777
    %v2810 = vadd.f32 %v2746, %v2778
    %v2811 = vadd.f32 %v2747, %v2779
    %v2812 = vadd.f32 %v2748, %v2780
    %v2813 = vadd.f32 %v2749, %v2781
    %v2814 = vadd.f32 %v2750, %v2782
    %v2815 = vadd.f32 %v2751, %v2783
    %v2816 = vadd.f32 %v2752, %v2784
    %v2817 = vadd.f32 %v2753, %v2785
    %v2818 = vadd.f32 %v2754, %v2786
    %v2819 = vadd.f32 %v2755, %v2787
    %v2820 = vadd.f32 %v2756, %v2788
    %v2821 = vadd.f32 %v2757, %v2789
    %v2822 = vadd.f32 %v2758, %v2790
    %v2823 = vadd.f32 %v2759, %v2791
    %v2824 = vadd.f32 %v2760, %v2792
    %v2825 = vadd.f32 %v2761, %v2793
    %v2826 = vadd.f32 %v2762, %v2794
    %v2827 = vadd.f32 %v2763, %v2795
    %v2828 = vadd.f32 %v2764, %v2796
    %v2829 = vadd.f32 %v2765, %v2797
    %v2830 = vadd.f32 %v2766, %v2798
    %v2831 = vadd.f32 %v2767, %v2799
    %v2832 = vadd.f32 %v2768, %v2800
    %v2833 = vadd.f32 %v2769, %v2801
    %v2834 = vadd.f32 %v2770, %v2802
    %v2835 = vadd.f32 %v2771, %v2803
    %v2836 = vadd.f32 %v2772, %v2804
    %v2837 = vadd.f32 %v2773, %v2805
    %v2838 = vadd.f32 %v2774, %v2806
    %v2839 = vadd.f32 %v2775, %v2807
    %v2840 = vadd.f32 %v2776, %v2808
    %v2841 = vmax.f32 %v2585, %v2586
    %2842 = vmax.xlane.f32.xlu0 %v2841
    %v2843 = vpop.xlane.xlu0 %2842
    %v2844 = vmax.f32 %v2587, %v2588
    %2845 = vmax.xlane.f32.xlu0 %v2844
    %v2846 = vpop.xlane.xlu0 %2845
    %v2847 = vmax.f32 %v2589, %v2590
    %2848 = vmax.xlane.f32.xlu0 %v2847
    %v2849 = vpop.xlane.xlu0 %2848
    %v2850 = vmax.f32 %v2591, %v2592
    %2851 = vmax.xlane.f32.xlu0 %v2850
    %v2852 = vpop.xlane.xlu0 %2851
    %v2853 = vmax.f32 %v2593, %v2594
    %2854 = vmax.xlane.f32.xlu0 %v2853
    %v2855 = vpop.xlane.xlu0 %2854
    %v2856 = vmax.f32 %v2595, %v2596
    %2857 = vmax.xlane.f32.xlu0 %v2856
    %v2858 = vpop.xlane.xlu0 %2857
    %v2859 = vmax.f32 %v2597, %v2598
    %2860 = vmax.xlane.f32.xlu0 %v2859
    %v2861 = vpop.xlane.xlu0 %2860
    %v2862 = vmax.f32 %v2599, %v2600
    %2863 = vmax.xlane.f32.xlu0 %v2862
    %v2864 = vpop.xlane.xlu0 %2863
    %v2865 = vmax.f32 %v2601, %v2602
    %2866 = vmax.xlane.f32.xlu0 %v2865
    %v2867 = vpop.xlane.xlu0 %2866
    %v2868 = vmax.f32 %v2603, %v2604
    %2869 = vmax.xlane.f32.xlu0 %v2868
    %v2870 = vpop.xlane.xlu0 %2869
    %v2871 = vmax.f32 %v2605, %v2606
    %2872 = vmax.xlane.f32.xlu0 %v2871
    %v2873 = vpop.xlane.xlu0 %2872
    %v2874 = vmax.f32 %v2607, %v2608
    %2875 = vmax.xlane.f32.xlu0 %v2874
    %v2876 = vpop.xlane.xlu0 %2875
    %v2877 = vmax.f32 %v2609, %v2610
    %2878 = vmax.xlane.f32.xlu0 %v2877
    %v2879 = vpop.xlane.xlu0 %2878
    %v2880 = vmax.f32 %v2611, %v2612
    %2881 = vmax.xlane.f32.xlu0 %v2880
    %v2882 = vpop.xlane.xlu0 %2881
    %v2883 = vmax.f32 %v2613, %v2614
    %2884 = vmax.xlane.f32.xlu0 %v2883
    %v2885 = vpop.xlane.xlu0 %2884
    %v2886 = vmax.f32 %v2615, %v2616
    %2887 = vmax.xlane.f32.xlu0 %v2886
    %v2888 = vpop.xlane.xlu0 %2887
    %v2889 = vsub.f32 -inf, %v2843
    %v2890 = vsub.f32 -inf, %v2846
    %v2891 = vsub.f32 -inf, %v2849
    %v2892 = vsub.f32 -inf, %v2852
    %v2893 = vsub.f32 -inf, %v2855
    %v2894 = vsub.f32 -inf, %v2858
    %v2895 = vsub.f32 -inf, %v2861
    %v2896 = vsub.f32 -inf, %v2864
    %v2897 = vsub.f32 -inf, %v2867
    %v2898 = vsub.f32 -inf, %v2870
    %v2899 = vsub.f32 -inf, %v2873
    %v2900 = vsub.f32 -inf, %v2876
    %v2901 = vsub.f32 -inf, %v2879
    %v2902 = vsub.f32 -inf, %v2882
    %v2903 = vsub.f32 -inf, %v2885
    %v2904 = vsub.f32 -inf, %v2888
    %v2905 = vmul.f32 %v2889, 1.442695
    %v2906 = vpow.pop %v2905
    %v2907 = vmul.f32 %v2890, 1.442695
    %v2908 = vpow.pop %v2907
    %v2909 = vmul.f32 %v2891, 1.442695
    %v2910 = vpow.pop %v2909
    %v2911 = vmul.f32 %v2892, 1.442695
    %v2912 = vpow.pop %v2911
    %v2913 = vmul.f32 %v2893, 1.442695
    %v2914 = vpow.pop %v2913
    %v2915 = vmul.f32 %v2894, 1.442695
    %v2916 = vpow.pop %v2915
    %v2917 = vmul.f32 %v2895, 1.442695
    %v2918 = vpow.pop %v2917
    %v2919 = vmul.f32 %v2896, 1.442695
    %v2920 = vpow.pop %v2919
    %v2921 = vmul.f32 %v2897, 1.442695
    %v2922 = vpow.pop %v2921
    %v2923 = vmul.f32 %v2898, 1.442695
    %v2924 = vpow.pop %v2923
    %v2925 = vmul.f32 %v2899, 1.442695
    %v2926 = vpow.pop %v2925
    %v2927 = vmul.f32 %v2900, 1.442695
    %v2928 = vpow.pop %v2927
    %v2929 = vmul.f32 %v2901, 1.442695
    %v2930 = vpow.pop %v2929
    %v2931 = vmul.f32 %v2902, 1.442695
    %v2932 = vpow.pop %v2931
    %v2933 = vmul.f32 %v2903, 1.442695
    %v2934 = vpow.pop %v2933
    %v2935 = vmul.f32 %v2904, 1.442695
    %v2936 = vpow.pop %v2935
    %v2937 = vsub.f32 %v2585, %v2843
    %v2938 = vsub.f32 %v2586, %v2843
    %v2939 = vsub.f32 %v2587, %v2846
    %v2940 = vsub.f32 %v2588, %v2846
    %v2941 = vsub.f32 %v2589, %v2849
    %v2942 = vsub.f32 %v2590, %v2849
    %v2943 = vsub.f32 %v2591, %v2852
    %v2944 = vsub.f32 %v2592, %v2852
    %v2945 = vsub.f32 %v2593, %v2855
    %v2946 = vsub.f32 %v2594, %v2855
    %v2947 = vsub.f32 %v2595, %v2858
    %v2948 = vsub.f32 %v2596, %v2858
    %v2949 = vsub.f32 %v2597, %v2861
    %v2950 = vsub.f32 %v2598, %v2861
    %v2951 = vsub.f32 %v2599, %v2864
    %v2952 = vsub.f32 %v2600, %v2864
    %v2953 = vsub.f32 %v2601, %v2867
    %v2954 = vsub.f32 %v2602, %v2867
    %v2955 = vsub.f32 %v2603, %v2870
    %v2956 = vsub.f32 %v2604, %v2870
    %v2957 = vsub.f32 %v2605, %v2873
    %v2958 = vsub.f32 %v2606, %v2873
    %v2959 = vsub.f32 %v2607, %v2876
    %v2960 = vsub.f32 %v2608, %v2876
    %v2961 = vsub.f32 %v2609, %v2879
    %v2962 = vsub.f32 %v2610, %v2879
    %v2963 = vsub.f32 %v2611, %v2882
    %v2964 = vsub.f32 %v2612, %v2882
    %v2965 = vsub.f32 %v2613, %v2885
    %v2966 = vsub.f32 %v2614, %v2885
    %v2967 = vsub.f32 %v2615, %v2888
    %v2968 = vsub.f32 %v2616, %v2888
    %v2969 = vmul.f32 %v2937, 1.442695
    %v2970 = vpow.pop %v2969
    %v2971 = vmul.f32 %v2938, 1.442695
    %v2972 = vpow.pop %v2971
    %v2973 = vmul.f32 %v2939, 1.442695
    %v2974 = vpow.pop %v2973
    %v2975 = vmul.f32 %v2940, 1.442695
    %v2976 = vpow.pop %v2975
    %v2977 = vmul.f32 %v2941, 1.442695
    %v2978 = vpow.pop %v2977
    %v2979 = vmul.f32 %v2942, 1.442695
    %v2980 = vpow.pop %v2979
    %v2981 = vmul.f32 %v2943, 1.442695
    %v2982 = vpow.pop %v2981
    %v2983 = vmul.f32 %v2944, 1.442695
    %v2984 = vpow.pop %v2983
    %v2985 = vmul.f32 %v2945, 1.442695
    %v2986 = vpow.pop %v2985
    %v2987 = vmul.f32 %v2946, 1.442695
    %v2988 = vpow.pop %v2987
    %v2989 = vmul.f32 %v2947, 1.442695
    %v2990 = vpow.pop %v2989
    %v2991 = vmul.f32 %v2948, 1.442695
    %v2992 = vpow.pop %v2991
    %v2993 = vmul.f32 %v2949, 1.442695
    %v2994 = vpow.pop %v2993
    %v2995 = vmul.f32 %v2950, 1.442695
    %v2996 = vpow.pop %v2995
    %v2997 = vmul.f32 %v2951, 1.442695
    %v2998 = vpow.pop %v2997
    %v2999 = vmul.f32 %v2952, 1.442695
    %v3000 = vpow.pop %v2999
    %v3001 = vmul.f32 %v2953, 1.442695
    %v3002 = vpow.pop %v3001
    %v3003 = vmul.f32 %v2954, 1.442695
    %v3004 = vpow.pop %v3003
    %v3005 = vmul.f32 %v2955, 1.442695
    %v3006 = vpow.pop %v3005
    %v3007 = vmul.f32 %v2956, 1.442695
    %v3008 = vpow.pop %v3007
    %v3009 = vmul.f32 %v2957, 1.442695
    %v3010 = vpow.pop %v3009
    %v3011 = vmul.f32 %v2958, 1.442695
    %v3012 = vpow.pop %v3011
    %v3013 = vmul.f32 %v2959, 1.442695
    %v3014 = vpow.pop %v3013
    %v3015 = vmul.f32 %v2960, 1.442695
    %v3016 = vpow.pop %v3015
    %v3017 = vmul.f32 %v2961, 1.442695
    %v3018 = vpow.pop %v3017
    %v3019 = vmul.f32 %v2962, 1.442695
    %v3020 = vpow.pop %v3019
    %v3021 = vmul.f32 %v2963, 1.442695
    %v3022 = vpow.pop %v3021
    %v3023 = vmul.f32 %v2964, 1.442695
    %v3024 = vpow.pop %v3023
    %v3025 = vmul.f32 %v2965, 1.442695
    %v3026 = vpow.pop %v3025
    %v3027 = vmul.f32 %v2966, 1.442695
    %v3028 = vpow.pop %v3027
    %v3029 = vmul.f32 %v2967, 1.442695
    %v3030 = vpow.pop %v3029
    %v3031 = vmul.f32 %v2968, 1.442695
    %v3032 = vpow.pop %v3031
    %v3033 = vmul.f32 %v2906, 0.0
    %v3034 = vmul.f32 %v2908, 0.0
    %v3035 = vmul.f32 %v2910, 0.0
    %v3036 = vmul.f32 %v2912, 0.0
    %v3037 = vmul.f32 %v2914, 0.0
    %v3038 = vmul.f32 %v2916, 0.0
    %v3039 = vmul.f32 %v2918, 0.0
    %v3040 = vmul.f32 %v2920, 0.0
    %v3041 = vmul.f32 %v2922, 0.0
    %v3042 = vmul.f32 %v2924, 0.0
    %v3043 = vmul.f32 %v2926, 0.0
    %v3044 = vmul.f32 %v2928, 0.0
    %v3045 = vmul.f32 %v2930, 0.0
    %v3046 = vmul.f32 %v2932, 0.0
    %v3047 = vmul.f32 %v2934, 0.0
    %v3048 = vmul.f32 %v2936, 0.0
    %v3049 = vadd.f32 %v2970, %v2972
    %3050 = vadd.xlane.f32.xlu0 %v3049
    %v3051 = vpop.xlane.xlu0 %3050
    %v3052 = vadd.f32 %v2974, %v2976
    %3053 = vadd.xlane.f32.xlu0 %v3052
    %v3054 = vpop.xlane.xlu0 %3053
    %v3055 = vadd.f32 %v2978, %v2980
    %3056 = vadd.xlane.f32.xlu0 %v3055
    %v3057 = vpop.xlane.xlu0 %3056
    %v3058 = vadd.f32 %v2982, %v2984
    %3059 = vadd.xlane.f32.xlu0 %v3058
    %v3060 = vpop.xlane.xlu0 %3059
    %v3061 = vadd.f32 %v2986, %v2988
    %3062 = vadd.xlane.f32.xlu0 %v3061
    %v3063 = vpop.xlane.xlu0 %3062
    %v3064 = vadd.f32 %v2990, %v2992
    %3065 = vadd.xlane.f32.xlu0 %v3064
    %v3066 = vpop.xlane.xlu0 %3065
    %v3067 = vadd.f32 %v2994, %v2996
    %3068 = vadd.xlane.f32.xlu0 %v3067
    %v3069 = vpop.xlane.xlu0 %3068
    %v3070 = vadd.f32 %v2998, %v3000
    %3071 = vadd.xlane.f32.xlu0 %v3070
    %v3072 = vpop.xlane.xlu0 %3071
    %v3073 = vadd.f32 %v3002, %v3004
    %3074 = vadd.xlane.f32.xlu0 %v3073
    %v3075 = vpop.xlane.xlu0 %3074
    %v3076 = vadd.f32 %v3006, %v3008
    %3077 = vadd.xlane.f32.xlu0 %v3076
    %v3078 = vpop.xlane.xlu0 %3077
    %v3079 = vadd.f32 %v3010, %v3012
    %3080 = vadd.xlane.f32.xlu0 %v3079
    %v3081 = vpop.xlane.xlu0 %3080
    %v3082 = vadd.f32 %v3014, %v3016
    %3083 = vadd.xlane.f32.xlu0 %v3082
    %v3084 = vpop.xlane.xlu0 %3083
    %v3085 = vadd.f32 %v3018, %v3020
    %3086 = vadd.xlane.f32.xlu0 %v3085
    %v3087 = vpop.xlane.xlu0 %3086
    %v3088 = vadd.f32 %v3022, %v3024
    %3089 = vadd.xlane.f32.xlu0 %v3088
    %v3090 = vpop.xlane.xlu0 %3089
    %v3091 = vadd.f32 %v3026, %v3028
    %3092 = vadd.xlane.f32.xlu0 %v3091
    %v3093 = vpop.xlane.xlu0 %3092
    %v3094 = vadd.f32 %v3030, %v3032
    %3095 = vadd.xlane.f32.xlu0 %v3094
    %v3096 = vpop.xlane.xlu0 %3095
    %v3097 = vadd.f32 %v3033, %v3051
    %v3098 = vadd.f32 %v3034, %v3054
    %v3099 = vadd.f32 %v3035, %v3057
    %v3100 = vadd.f32 %v3036, %v3060
    %v3101 = vadd.f32 %v3037, %v3063
    %v3102 = vadd.f32 %v3038, %v3066
    %v3103 = vadd.f32 %v3039, %v3069
    %v3104 = vadd.f32 %v3040, %v3072
    %v3105 = vadd.f32 %v3041, %v3075
    %v3106 = vadd.f32 %v3042, %v3078
    %v3107 = vadd.f32 %v3043, %v3081
    %v3108 = vadd.f32 %v3044, %v3084
    %v3109 = vadd.f32 %v3045, %v3087
    %v3110 = vadd.f32 %v3046, %v3090
    %v3111 = vadd.f32 %v3047, %v3093
    %v3112 = vadd.f32 %v3048, %v3096
    %v3113 = vpack.c.bf16 %v2974, %v2970
    %v3114 = vpack.c.bf16 %v2976, %v2972
    %v3115 = vpack.c.bf16 %v2982, %v2978
    %v3116 = vpack.c.bf16 %v2984, %v2980
    %v3117 = vpack.c.bf16 %v2990, %v2986
    %v3118 = vpack.c.bf16 %v2992, %v2988
    %v3119 = vpack.c.bf16 %v2998, %v2994
    %v3120 = vpack.c.bf16 %v3000, %v2996
    %v3121 = vpack.c.bf16 %v3006, %v3002
    %v3122 = vpack.c.bf16 %v3008, %v3004
    %v3123 = vpack.c.bf16 %v3014, %v3010
    %v3124 = vpack.c.bf16 %v3016, %v3012
    %v3125 = vpack.c.bf16 %v3022, %v3018
    %v3126 = vpack.c.bf16 %v3024, %v3020
    %v3127 = vpack.c.bf16 %v3030, %v3026
    %v3128 = vpack.c.bf16 %v3032, %v3028
    %v3129 = vpack.c.bf16 %v2811, %v2809
    %v3130 = vpack.c.bf16 %v2812, %v2810
    %v3131 = vpack.c.bf16 %v2815, %v2813
    %v3132 = vpack.c.bf16 %v2816, %v2814
    %v3133 = vpack.c.bf16 %v2819, %v2817
    %v3134 = vpack.c.bf16 %v2820, %v2818
    %v3135 = vpack.c.bf16 %v2823, %v2821
    %v3136 = vpack.c.bf16 %v2824, %v2822
    %v3137 = vpack.c.bf16 %v2827, %v2825
    %v3138 = vpack.c.bf16 %v2828, %v2826
    %v3139 = vpack.c.bf16 %v2831, %v2829
    %v3140 = vpack.c.bf16 %v2832, %v2830
    %v3141 = vpack.c.bf16 %v2835, %v2833
    %v3142 = vpack.c.bf16 %v2836, %v2834
    %v3143 = vpack.c.bf16 %v2839, %v2837
    %v3144 = vpack.c.bf16 %v2840, %v2838
    %3145 = vmatpush.bf16.xpose.msra.mxu0 %v3143
    %3146 = vmatpush.bf16.xpose.msra.mxu0 %v3141
    %3147 = vmatpush.bf16.xpose.msra.mxu0 %v3139
    %3148 = vmatpush.bf16.xpose.msra.mxu0 %v3137
    %3149 = vmatpush.bf16.xpose.msra.mxu0 %v3135
    %3150 = vmatpush.bf16.xpose.msra.mxu0 %v3133
    %3151 = vmatpush.bf16.xpose.msra.mxu0 %v3131
    %3152 = vmatpush.bf16.xpose.msra.mxu0 %v3129
    %3153 = vmatmul.bf16.gmra.mxu0 %v3113
    %v3154 = vpop.f32.mrf.mxu0
    %v3155 = vadd.f32 0.0, %v3154
    %v3156 = vpop.f32.mrf.mxu0
    %v3157 = vadd.f32 0.0, %v3156
    %3158 = vmatmul.bf16.gmra.mxu0 %v3115
    %v3159 = vpop.f32.mrf.mxu0
    %v3160 = vadd.f32 0.0, %v3159
    %v3161 = vpop.f32.mrf.mxu0
    %v3162 = vadd.f32 0.0, %v3161
    %3163 = vmatmul.bf16.gmra.mxu0 %v3117
    %v3164 = vpop.f32.mrf.mxu0
    %v3165 = vadd.f32 0.0, %v3164
    %v3166 = vpop.f32.mrf.mxu0
    %v3167 = vadd.f32 0.0, %v3166
    %3168 = vmatmul.bf16.gmra.mxu0 %v3119
    %v3169 = vpop.f32.mrf.mxu0
    %v3170 = vadd.f32 0.0, %v3169
    %v3171 = vpop.f32.mrf.mxu0
    %v3172 = vadd.f32 0.0, %v3171
    %3173 = vmatmul.bf16.gmra.mxu0 %v3121
    %v3174 = vpop.f32.mrf.mxu0
    %v3175 = vadd.f32 0.0, %v3174
    %v3176 = vpop.f32.mrf.mxu0
    %v3177 = vadd.f32 0.0, %v3176
    %3178 = vmatmul.bf16.gmra.mxu0 %v3123
    %v3179 = vpop.f32.mrf.mxu0
    %v3180 = vadd.f32 0.0, %v3179
    %v3181 = vpop.f32.mrf.mxu0
    %v3182 = vadd.f32 0.0, %v3181
    %3183 = vmatmul.bf16.gmra.mxu0 %v3125
    %v3184 = vpop.f32.mrf.mxu0
    %v3185 = vadd.f32 0.0, %v3184
    %v3186 = vpop.f32.mrf.mxu0
    %v3187 = vadd.f32 0.0, %v3186
    %3188 = vmatmul.bf16.gmra.mxu0 %v3127
    %v3189 = vpop.f32.mrf.mxu0
    %v3190 = vadd.f32 0.0, %v3189
    %v3191 = vpop.f32.mrf.mxu0
    %v3192 = vadd.f32 0.0, %v3191
    %3193 = vdwg.mxu0
    %3194 = vmatpush.bf16.xpose.msra.mxu0 %v3144
    %3195 = vmatpush.bf16.xpose.msra.mxu0 %v3142
    %3196 = vmatpush.bf16.xpose.msra.mxu0 %v3140
    %3197 = vmatpush.bf16.xpose.msra.mxu0 %v3138
    %3198 = vmatpush.bf16.xpose.msra.mxu0 %v3136
    %3199 = vmatpush.bf16.xpose.msra.mxu0 %v3134
    %3200 = vmatpush.bf16.xpose.msra.mxu0 %v3132
    %3201 = vmatpush.bf16.xpose.msra.mxu0 %v3130
    %3202 = vmatmul.bf16.gmra.mxu0 %v3114
    %v3203 = vpop.f32.mrf.mxu0
    %v3204 = vadd.f32 %v3155, %v3203
    %v3205 = vpop.f32.mrf.mxu0
    %v3206 = vadd.f32 %v3157, %v3205
    %3207 = vmatmul.bf16.gmra.mxu0 %v3116
    %v3208 = vpop.f32.mrf.mxu0
    %v3209 = vadd.f32 %v3160, %v3208
    %v3210 = vpop.f32.mrf.mxu0
    %v3211 = vadd.f32 %v3162, %v3210
    %3212 = vmatmul.bf16.gmra.mxu0 %v3118
    %v3213 = vpop.f32.mrf.mxu0
    %v3214 = vadd.f32 %v3165, %v3213
    %v3215 = vpop.f32.mrf.mxu0
    %v3216 = vadd.f32 %v3167, %v3215
    %3217 = vmatmul.bf16.gmra.mxu0 %v3120
    %v3218 = vpop.f32.mrf.mxu0
    %v3219 = vadd.f32 %v3170, %v3218
    %v3220 = vpop.f32.mrf.mxu0
    %v3221 = vadd.f32 %v3172, %v3220
    %3222 = vmatmul.bf16.gmra.mxu0 %v3122
    %v3223 = vpop.f32.mrf.mxu0
    %v3224 = vadd.f32 %v3175, %v3223
    %v3225 = vpop.f32.mrf.mxu0
    %v3226 = vadd.f32 %v3177, %v3225
    %3227 = vmatmul.bf16.gmra.mxu0 %v3124
    %v3228 = vpop.f32.mrf.mxu0
    %v3229 = vadd.f32 %v3180, %v3228
    %v3230 = vpop.f32.mrf.mxu0
    %v3231 = vadd.f32 %v3182, %v3230
    %3232 = vmatmul.bf16.gmra.mxu0 %v3126
    %v3233 = vpop.f32.mrf.mxu0
    %v3234 = vadd.f32 %v3185, %v3233
    %v3235 = vpop.f32.mrf.mxu0
    %v3236 = vadd.f32 %v3187, %v3235
    %3237 = vmatmul.bf16.gmra.mxu0 %v3128
    %v3238 = vpop.f32.mrf.mxu0
    %v3239 = vadd.f32 %v3190, %v3238
    %v3240 = vpop.f32.mrf.mxu0
    %v3241 = vadd.f32 %v3192, %v3240
    %3242 = vdwg.mxu0
    %v3243 = vadd.f32 %v3033, %v3204
    %v3244 = vadd.f32 %v3034, %v3206
    %v3245 = vadd.f32 %v3035, %v3209
    %v3246 = vadd.f32 %v3036, %v3211
    %v3247 = vadd.f32 %v3037, %v3214
    %v3248 = vadd.f32 %v3038, %v3216
    %v3249 = vadd.f32 %v3039, %v3219
    %v3250 = vadd.f32 %v3040, %v3221
    %v3251 = vadd.f32 %v3041, %v3224
    %v3252 = vadd.f32 %v3042, %v3226
    %v3253 = vadd.f32 %v3043, %v3229
    %v3254 = vadd.f32 %v3044, %v3231
    %v3255 = vadd.f32 %v3045, %v3234
    %v3256 = vadd.f32 %v3046, %v3236
    %v3257 = vadd.f32 %v3047, %v3239
    %v3258 = vadd.f32 %v3048, %v3241
    %v3259 = vmul.f32 %v3243, %v71
    %v3260 = vmul.f32 %v3244, %v72
    %v3261 = vmul.f32 %v3245, %v73
    %v3262 = vmul.f32 %v3246, %v74
    %v3263 = vmul.f32 %v3247, %v75
    %v3264 = vmul.f32 %v3248, %v76
    %v3265 = vmul.f32 %v3249, %v77
    %v3266 = vmul.f32 %v3250, %v78
    %v3267 = vmul.f32 %v3251, %v79
    %v3268 = vmul.f32 %v3252, %v80
    %v3269 = vmul.f32 %v3253, %v81
    %v3270 = vmul.f32 %v3254, %v82
    %v3271 = vmul.f32 %v3255, %v83
    %v3272 = vmul.f32 %v3256, %v84
    %v3273 = vmul.f32 %v3257, %v85
    %v3274 = vmul.f32 %v3258, %v86
    %v3275 = vrcp.pop %v3097
    %v3276 = vmul.f32 %v3097, %v3275
    %v3277 = vsub.f32 1.0, %v3276
    %v3278 = vmul.f32 %v3275, %v3277
    %v3279 = vadd.f32 %v3275, %v3278
    %vm3280 = vweird.f32 %v3097
    %vm3281 = vweird.f32 %v3275
    %vm3282 = vmor %vm3280, %vm3281
    %v3283 = vsel %vm3282, %v3275, %v3279
    %v3284 = vand.u32 2147483647, %v3097
    %vm3285 = vcmp.eq.f32.partialorder %v3284, 8.507059e+37
    %v3286 = vand.u32 %v3097, 2147483648
    %v3287 = vor.u32 1.1754944e-38, %v3286
    %v3288 = vsel %vm3285, %v3287, %v3283
    %v3289 = vmul.f32 1.0, %v3288
    %v3290 = vrcp.pop %v3098
    %v3291 = vmul.f32 %v3098, %v3290
    %v3292 = vsub.f32 1.0, %v3291
    %v3293 = vmul.f32 %v3290, %v3292
    %v3294 = vadd.f32 %v3290, %v3293
    %vm3295 = vweird.f32 %v3098
    %vm3296 = vweird.f32 %v3290
    %vm3297 = vmor %vm3295, %vm3296
    %v3298 = vsel %vm3297, %v3290, %v3294
    %v3299 = vand.u32 2147483647, %v3098
    %vm3300 = vcmp.eq.f32.partialorder %v3299, 8.507059e+37
    %v3301 = vand.u32 %v3098, 2147483648
    %v3302 = vor.u32 1.1754944e-38, %v3301
    %v3303 = vsel %vm3300, %v3302, %v3298
    %v3304 = vmul.f32 1.0, %v3303
    %v3305 = vrcp.pop %v3099
    %v3306 = vmul.f32 %v3099, %v3305
    %v3307 = vsub.f32 1.0, %v3306
    %v3308 = vmul.f32 %v3305, %v3307
    %v3309 = vadd.f32 %v3305, %v3308
    %vm3310 = vweird.f32 %v3099
    %vm3311 = vweird.f32 %v3305
    %vm3312 = vmor %vm3310, %vm3311
    %v3313 = vsel %vm3312, %v3305, %v3309
    %v3314 = vand.u32 2147483647, %v3099
    %vm3315 = vcmp.eq.f32.partialorder %v3314, 8.507059e+37
    %v3316 = vand.u32 %v3099, 2147483648
    %v3317 = vor.u32 1.1754944e-38, %v3316
    %v3318 = vsel %vm3315, %v3317, %v3313
    %v3319 = vmul.f32 1.0, %v3318
    %v3320 = vrcp.pop %v3100
    %v3321 = vmul.f32 %v3100, %v3320
    %v3322 = vsub.f32 1.0, %v3321
    %v3323 = vmul.f32 %v3320, %v3322
    %v3324 = vadd.f32 %v3320, %v3323
    %vm3325 = vweird.f32 %v3100
    %vm3326 = vweird.f32 %v3320
    %vm3327 = vmor %vm3325, %vm3326
    %v3328 = vsel %vm3327, %v3320, %v3324
    %v3329 = vand.u32 2147483647, %v3100
    %vm3330 = vcmp.eq.f32.partialorder %v3329, 8.507059e+37
    %v3331 = vand.u32 %v3100, 2147483648
    %v3332 = vor.u32 1.1754944e-38, %v3331
    %v3333 = vsel %vm3330, %v3332, %v3328
    %v3334 = vmul.f32 1.0, %v3333
    %v3335 = vrcp.pop %v3101
    %v3336 = vmul.f32 %v3101, %v3335
    %v3337 = vsub.f32 1.0, %v3336
    %v3338 = vmul.f32 %v3335, %v3337
    %v3339 = vadd.f32 %v3335, %v3338
    %vm3340 = vweird.f32 %v3101
    %vm3341 = vweird.f32 %v3335
    %vm3342 = vmor %vm3340, %vm3341
    %v3343 = vsel %vm3342, %v3335, %v3339
    %v3344 = vand.u32 2147483647, %v3101
    %vm3345 = vcmp.eq.f32.partialorder %v3344, 8.507059e+37
    %v3346 = vand.u32 %v3101, 2147483648
    %v3347 = vor.u32 1.1754944e-38, %v3346
    %v3348 = vsel %vm3345, %v3347, %v3343
    %v3349 = vmul.f32 1.0, %v3348
    %v3350 = vrcp.pop %v3102
    %v3351 = vmul.f32 %v3102, %v3350
    %v3352 = vsub.f32 1.0, %v3351
    %v3353 = vmul.f32 %v3350, %v3352
    %v3354 = vadd.f32 %v3350, %v3353
    %vm3355 = vweird.f32 %v3102
    %vm3356 = vweird.f32 %v3350
    %vm3357 = vmor %vm3355, %vm3356
    %v3358 = vsel %vm3357, %v3350, %v3354
    %v3359 = vand.u32 2147483647, %v3102
    %vm3360 = vcmp.eq.f32.partialorder %v3359, 8.507059e+37
    %v3361 = vand.u32 %v3102, 2147483648
    %v3362 = vor.u32 1.1754944e-38, %v3361
    %v3363 = vsel %vm3360, %v3362, %v3358
    %v3364 = vmul.f32 1.0, %v3363
    %v3365 = vrcp.pop %v3103
    %v3366 = vmul.f32 %v3103, %v3365
    %v3367 = vsub.f32 1.0, %v3366
    %v3368 = vmul.f32 %v3365, %v3367
    %v3369 = vadd.f32 %v3365, %v3368
    %vm3370 = vweird.f32 %v3103
    %vm3371 = vweird.f32 %v3365
    %vm3372 = vmor %vm3370, %vm3371
    %v3373 = vsel %vm3372, %v3365, %v3369
    %v3374 = vand.u32 2147483647, %v3103
    %vm3375 = vcmp.eq.f32.partialorder %v3374, 8.507059e+37
    %v3376 = vand.u32 %v3103, 2147483648
    %v3377 = vor.u32 1.1754944e-38, %v3376
    %v3378 = vsel %vm3375, %v3377, %v3373
    %v3379 = vmul.f32 1.0, %v3378
    %v3380 = vrcp.pop %v3104
    %v3381 = vmul.f32 %v3104, %v3380
    %v3382 = vsub.f32 1.0, %v3381
    %v3383 = vmul.f32 %v3380, %v3382
    %v3384 = vadd.f32 %v3380, %v3383
    %vm3385 = vweird.f32 %v3104
    %vm3386 = vweird.f32 %v3380
    %vm3387 = vmor %vm3385, %vm3386
    %v3388 = vsel %vm3387, %v3380, %v3384
    %v3389 = vand.u32 2147483647, %v3104
    %vm3390 = vcmp.eq.f32.partialorder %v3389, 8.507059e+37
    %v3391 = vand.u32 %v3104, 2147483648
    %v3392 = vor.u32 1.1754944e-38, %v3391
    %v3393 = vsel %vm3390, %v3392, %v3388
    %v3394 = vmul.f32 1.0, %v3393
    %v3395 = vrcp.pop %v3105
    %v3396 = vmul.f32 %v3105, %v3395
    %v3397 = vsub.f32 1.0, %v3396
    %v3398 = vmul.f32 %v3395, %v3397
    %v3399 = vadd.f32 %v3395, %v3398
    %vm3400 = vweird.f32 %v3105
    %vm3401 = vweird.f32 %v3395
    %vm3402 = vmor %vm3400, %vm3401
    %v3403 = vsel %vm3402, %v3395, %v3399
    %v3404 = vand.u32 2147483647, %v3105
    %vm3405 = vcmp.eq.f32.partialorder %v3404, 8.507059e+37
    %v3406 = vand.u32 %v3105, 2147483648
    %v3407 = vor.u32 1.1754944e-38, %v3406
    %v3408 = vsel %vm3405, %v3407, %v3403
    %v3409 = vmul.f32 1.0, %v3408
    %v3410 = vrcp.pop %v3106
    %v3411 = vmul.f32 %v3106, %v3410
    %v3412 = vsub.f32 1.0, %v3411
    %v3413 = vmul.f32 %v3410, %v3412
    %v3414 = vadd.f32 %v3410, %v3413
    %vm3415 = vweird.f32 %v3106
    %vm3416 = vweird.f32 %v3410
    %vm3417 = vmor %vm3415, %vm3416
    %v3418 = vsel %vm3417, %v3410, %v3414
    %v3419 = vand.u32 2147483647, %v3106
    %vm3420 = vcmp.eq.f32.partialorder %v3419, 8.507059e+37
    %v3421 = vand.u32 %v3106, 2147483648
    %v3422 = vor.u32 1.1754944e-38, %v3421
    %v3423 = vsel %vm3420, %v3422, %v3418
    %v3424 = vmul.f32 1.0, %v3423
    %v3425 = vrcp.pop %v3107
    %v3426 = vmul.f32 %v3107, %v3425
    %v3427 = vsub.f32 1.0, %v3426
    %v3428 = vmul.f32 %v3425, %v3427
    %v3429 = vadd.f32 %v3425, %v3428
    %vm3430 = vweird.f32 %v3107
    %vm3431 = vweird.f32 %v3425
    %vm3432 = vmor %vm3430, %vm3431
    %v3433 = vsel %vm3432, %v3425, %v3429
    %v3434 = vand.u32 2147483647, %v3107
    %vm3435 = vcmp.eq.f32.partialorder %v3434, 8.507059e+37
    %v3436 = vand.u32 %v3107, 2147483648
    %v3437 = vor.u32 1.1754944e-38, %v3436
    %v3438 = vsel %vm3435, %v3437, %v3433
    %v3439 = vmul.f32 1.0, %v3438
    %v3440 = vrcp.pop %v3108
    %v3441 = vmul.f32 %v3108, %v3440
    %v3442 = vsub.f32 1.0, %v3441
    %v3443 = vmul.f32 %v3440, %v3442
    %v3444 = vadd.f32 %v3440, %v3443
    %vm3445 = vweird.f32 %v3108
    %vm3446 = vweird.f32 %v3440
    %vm3447 = vmor %vm3445, %vm3446
    %v3448 = vsel %vm3447, %v3440, %v3444
    %v3449 = vand.u32 2147483647, %v3108
    %vm3450 = vcmp.eq.f32.partialorder %v3449, 8.507059e+37
    %v3451 = vand.u32 %v3108, 2147483648
    %v3452 = vor.u32 1.1754944e-38, %v3451
    %v3453 = vsel %vm3450, %v3452, %v3448
    %v3454 = vmul.f32 1.0, %v3453
    %v3455 = vrcp.pop %v3109
    %v3456 = vmul.f32 %v3109, %v3455
    %v3457 = vsub.f32 1.0, %v3456
    %v3458 = vmul.f32 %v3455, %v3457
    %v3459 = vadd.f32 %v3455, %v3458
    %vm3460 = vweird.f32 %v3109
    %vm3461 = vweird.f32 %v3455
    %vm3462 = vmor %vm3460, %vm3461
    %v3463 = vsel %vm3462, %v3455, %v3459
    %v3464 = vand.u32 2147483647, %v3109
    %vm3465 = vcmp.eq.f32.partialorder %v3464, 8.507059e+37
    %v3466 = vand.u32 %v3109, 2147483648
    %v3467 = vor.u32 1.1754944e-38, %v3466
    %v3468 = vsel %vm3465, %v3467, %v3463
    %v3469 = vmul.f32 1.0, %v3468
    %v3470 = vrcp.pop %v3110
    %v3471 = vmul.f32 %v3110, %v3470
    %v3472 = vsub.f32 1.0, %v3471
    %v3473 = vmul.f32 %v3470, %v3472
    %v3474 = vadd.f32 %v3470, %v3473
    %vm3475 = vweird.f32 %v3110
    %vm3476 = vweird.f32 %v3470
    %vm3477 = vmor %vm3475, %vm3476
    %v3478 = vsel %vm3477, %v3470, %v3474
    %v3479 = vand.u32 2147483647, %v3110
    %vm3480 = vcmp.eq.f32.partialorder %v3479, 8.507059e+37
    %v3481 = vand.u32 %v3110, 2147483648
    %v3482 = vor.u32 1.1754944e-38, %v3481
    %v3483 = vsel %vm3480, %v3482, %v3478
    %v3484 = vmul.f32 1.0, %v3483
    %v3485 = vrcp.pop %v3111
    %v3486 = vmul.f32 %v3111, %v3485
    %v3487 = vsub.f32 1.0, %v3486
    %v3488 = vmul.f32 %v3485, %v3487
    %v3489 = vadd.f32 %v3485, %v3488
    %vm3490 = vweird.f32 %v3111
    %vm3491 = vweird.f32 %v3485
    %vm3492 = vmor %vm3490, %vm3491
    %v3493 = vsel %vm3492, %v3485, %v3489
    %v3494 = vand.u32 2147483647, %v3111
    %vm3495 = vcmp.eq.f32.partialorder %v3494, 8.507059e+37
    %v3496 = vand.u32 %v3111, 2147483648
    %v3497 = vor.u32 1.1754944e-38, %v3496
    %v3498 = vsel %vm3495, %v3497, %v3493
    %v3499 = vmul.f32 1.0, %v3498
    %v3500 = vrcp.pop %v3112
    %v3501 = vmul.f32 %v3112, %v3500
    %v3502 = vsub.f32 1.0, %v3501
    %v3503 = vmul.f32 %v3500, %v3502
    %v3504 = vadd.f32 %v3500, %v3503
    %vm3505 = vweird.f32 %v3112
    %vm3506 = vweird.f32 %v3500
    %vm3507 = vmor %vm3505, %vm3506
    %v3508 = vsel %vm3507, %v3500, %v3504
    %v3509 = vand.u32 2147483647, %v3112
    %vm3510 = vcmp.eq.f32.partialorder %v3509, 8.507059e+37
    %v3511 = vand.u32 %v3112, 2147483648
    %v3512 = vor.u32 1.1754944e-38, %v3511
    %v3513 = vsel %vm3510, %v3512, %v3508
    %v3514 = vmul.f32 1.0, %v3513
    %v3515 = vmul.f32 %v3259, %v3289
    %v3516 = vmul.f32 %v3260, %v3304
    %v3517 = vmul.f32 %v3261, %v3319
    %v3518 = vmul.f32 %v3262, %v3334
    %v3519 = vmul.f32 %v3263, %v3349
    %v3520 = vmul.f32 %v3264, %v3364
    %v3521 = vmul.f32 %v3265, %v3379
    %v3522 = vmul.f32 %v3266, %v3394
    %v3523 = vmul.f32 %v3267, %v3409
    %v3524 = vmul.f32 %v3268, %v3424
    %v3525 = vmul.f32 %v3269, %v3439
    %v3526 = vmul.f32 %v3270, %v3454
    %v3527 = vmul.f32 %v3271, %v3469
    %v3528 = vmul.f32 %v3272, %v3484
    %v3529 = vmul.f32 %v3273, %v3499
    %v3530 = vmul.f32 %v3274, %v3514
    %3531 = vmatpush.xpose.msra.mxu0 %v3530
    %3532 = vmatpush.xpose.msra.mxu0 %v3529
    %3533 = vmatpush.xpose.msra.mxu0 %v3528
    %3534 = vmatpush.xpose.msra.mxu0 %v3527
    %3535 = vmatpush.xpose.msra.mxu0 %v3526
    %3536 = vmatpush.xpose.msra.mxu0 %v3525
    %3537 = vmatpush.xpose.msra.mxu0 %v3524
    %3538 = vmatpush.xpose.msra.mxu0 %v3523
    %3539 = vmatpush.xpose.msra.mxu0 %v3522
    %3540 = vmatpush.xpose.msra.mxu0 %v3521
    %3541 = vmatpush.xpose.msra.mxu0 %v3520
    %3542 = vmatpush.xpose.msra.mxu0 %v3519
    %3543 = vmatpush.xpose.msra.mxu0 %v3518
    %3544 = vmatpush.xpose.msra.mxu0 %v3517
    %3545 = vmatpush.xpose.msra.mxu0 %v3516
    %3546 = vmatpush.xpose.msra.mxu0 %v3515
    %3547 = vmatmul.f32.gmra.mxu0 %v69
    %v3548 = vpop.f32.mrf.mxu0
    %v3549 = vadd.f32 0.0, %v3548
    %3550 = vdwg.mxu0
    %v3551 = vpack.c.bf16 %v3549, %v3549
    %v3552 = vmul.f32 %v1819, %v2373
    %v3553 = vmul.f32 %v1819, %v2374
    %v3554 = vmul.f32 %v1824, %v2373
    %v3555 = vmul.f32 %v1824, %v2374
    %v3556 = vmul.f32 %v1829, %v2373
    %v3557 = vmul.f32 %v1829, %v2374
    %v3558 = vmul.f32 %v1834, %v2373
    %v3559 = vmul.f32 %v1834, %v2374
    %v3560 = vmul.f32 %v1839, %v2373
    %v3561 = vmul.f32 %v1839, %v2374
    %v3562 = vmul.f32 %v1844, %v2373
    %v3563 = vmul.f32 %v1844, %v2374
    %v3564 = vmul.f32 %v1849, %v2373
    %v3565 = vmul.f32 %v1849, %v2374
    %v3566 = vmul.f32 %v1854, %v2373
    %v3567 = vmul.f32 %v1854, %v2374
    %v3568 = vmul.f32 %v1859, %v2373
    %v3569 = vmul.f32 %v1859, %v2374
    %v3570 = vmul.f32 %v1864, %v2373
    %v3571 = vmul.f32 %v1864, %v2374
    %v3572 = vmul.f32 %v1869, %v2373
    %v3573 = vmul.f32 %v1869, %v2374
    %v3574 = vmul.f32 %v1874, %v2373
    %v3575 = vmul.f32 %v1874, %v2374
    %v3576 = vmul.f32 %v1879, %v2373
    %v3577 = vmul.f32 %v1879, %v2374
    %v3578 = vmul.f32 %v1884, %v2373
    %v3579 = vmul.f32 %v1884, %v2374
    %v3580 = vmul.f32 %v1889, %v2373
    %v3581 = vmul.f32 %v1889, %v2374
    %v3582 = vmul.f32 %v1894, %v2373
    %v3583 = vmul.f32 %v1894, %v2374
    %v3584 = vmul.f32 %v1930, %v2411
    %v3585 = vmul.f32 %v1930, %v2412
    %v3586 = vmul.f32 %v1934, %v2411
    %v3587 = vmul.f32 %v1934, %v2412
    %v3588 = vmul.f32 %v1938, %v2411
    %v3589 = vmul.f32 %v1938, %v2412
    %v3590 = vmul.f32 %v1942, %v2411
    %v3591 = vmul.f32 %v1942, %v2412
    %v3592 = vmul.f32 %v1946, %v2411
    %v3593 = vmul.f32 %v1946, %v2412
    %v3594 = vmul.f32 %v1950, %v2411
    %v3595 = vmul.f32 %v1950, %v2412
    %v3596 = vmul.f32 %v1954, %v2411
    %v3597 = vmul.f32 %v1954, %v2412
    %v3598 = vmul.f32 %v1958, %v2411
    %v3599 = vmul.f32 %v1958, %v2412
    %v3600 = vmul.f32 %v1962, %v2411
    %v3601 = vmul.f32 %v1962, %v2412
    %v3602 = vmul.f32 %v1966, %v2411
    %v3603 = vmul.f32 %v1966, %v2412
    %v3604 = vmul.f32 %v1970, %v2411
    %v3605 = vmul.f32 %v1970, %v2412
    %v3606 = vmul.f32 %v1974, %v2411
    %v3607 = vmul.f32 %v1974, %v2412
    %v3608 = vmul.f32 %v1978, %v2411
    %v3609 = vmul.f32 %v1978, %v2412
    %v3610 = vmul.f32 %v1982, %v2411
    %v3611 = vmul.f32 %v1982, %v2412
    %v3612 = vmul.f32 %v1986, %v2411
    %v3613 = vmul.f32 %v1986, %v2412
    %v3614 = vmul.f32 %v1990, %v2411
    %v3615 = vmul.f32 %v1990, %v2412
    %v3616 = vadd.f32 %v3552, %v3584
    %v3617 = vadd.f32 %v3553, %v3585
    %v3618 = vadd.f32 %v3554, %v3586
    %v3619 = vadd.f32 %v3555, %v3587
    %v3620 = vadd.f32 %v3556, %v3588
    %v3621 = vadd.f32 %v3557, %v3589
    %v3622 = vadd.f32 %v3558, %v3590
    %v3623 = vadd.f32 %v3559, %v3591
    %v3624 = vadd.f32 %v3560, %v3592
    %v3625 = vadd.f32 %v3561, %v3593
    %v3626 = vadd.f32 %v3562, %v3594
    %v3627 = vadd.f32 %v3563, %v3595
    %v3628 = vadd.f32 %v3564, %v3596
    %v3629 = vadd.f32 %v3565, %v3597
    %v3630 = vadd.f32 %v3566, %v3598
    %v3631 = vadd.f32 %v3567, %v3599
    %v3632 = vadd.f32 %v3568, %v3600
    %v3633 = vadd.f32 %v3569, %v3601
    %v3634 = vadd.f32 %v3570, %v3602
    %v3635 = vadd.f32 %v3571, %v3603
    %v3636 = vadd.f32 %v3572, %v3604
    %v3637 = vadd.f32 %v3573, %v3605
    %v3638 = vadd.f32 %v3574, %v3606
    %v3639 = vadd.f32 %v3575, %v3607
    %v3640 = vadd.f32 %v3576, %v3608
    %v3641 = vadd.f32 %v3577, %v3609
    %v3642 = vadd.f32 %v3578, %v3610
    %v3643 = vadd.f32 %v3579, %v3611
    %v3644 = vadd.f32 %v3580, %v3612
    %v3645 = vadd.f32 %v3581, %v3613
    %v3646 = vadd.f32 %v3582, %v3614
    %v3647 = vadd.f32 %v3583, %v3615
    %v3648 = vmul.f32 %v2058, %v2481
    %v3649 = vmul.f32 %v2058, %v2482
    %v3650 = vmul.f32 %v2062, %v2481
    %v3651 = vmul.f32 %v2062, %v2482
    %v3652 = vmul.f32 %v2066, %v2481
    %v3653 = vmul.f32 %v2066, %v2482
    %v3654 = vmul.f32 %v2070, %v2481
    %v3655 = vmul.f32 %v2070, %v2482
    %v3656 = vmul.f32 %v2074, %v2481
    %v3657 = vmul.f32 %v2074, %v2482
    %v3658 = vmul.f32 %v2078, %v2481
    %v3659 = vmul.f32 %v2078, %v2482
    %v3660 = vmul.f32 %v2082, %v2481
    %v3661 = vmul.f32 %v2082, %v2482
    %v3662 = vmul.f32 %v2086, %v2481
    %v3663 = vmul.f32 %v2086, %v2482
    %v3664 = vmul.f32 %v2090, %v2481
    %v3665 = vmul.f32 %v2090, %v2482
    %v3666 = vmul.f32 %v2094, %v2481
    %v3667 = vmul.f32 %v2094, %v2482
    %v3668 = vmul.f32 %v2098, %v2481
    %v3669 = vmul.f32 %v2098, %v2482
    %v3670 = vmul.f32 %v2102, %v2481
    %v3671 = vmul.f32 %v2102, %v2482
    %v3672 = vmul.f32 %v2106, %v2481
    %v3673 = vmul.f32 %v2106, %v2482
    %v3674 = vmul.f32 %v2110, %v2481
    %v3675 = vmul.f32 %v2110, %v2482
    %v3676 = vmul.f32 %v2114, %v2481
    %v3677 = vmul.f32 %v2114, %v2482
    %v3678 = vmul.f32 %v2118, %v2481
    %v3679 = vmul.f32 %v2118, %v2482
    %v3680 = vadd.f32 %v3616, %v3648
    %v3681 = vadd.f32 %v3617, %v3649
    %v3682 = vadd.f32 %v3618, %v3650
    %v3683 = vadd.f32 %v3619, %v3651
    %v3684 = vadd.f32 %v3620, %v3652
    %v3685 = vadd.f32 %v3621, %v3653
    %v3686 = vadd.f32 %v3622, %v3654
    %v3687 = vadd.f32 %v3623, %v3655
    %v3688 = vadd.f32 %v3624, %v3656
    %v3689 = vadd.f32 %v3625, %v3657
    %v3690 = vadd.f32 %v3626, %v3658
    %v3691 = vadd.f32 %v3627, %v3659
    %v3692 = vadd.f32 %v3628, %v3660
    %v3693 = vadd.f32 %v3629, %v3661
    %v3694 = vadd.f32 %v3630, %v3662
    %v3695 = vadd.f32 %v3631, %v3663
    %v3696 = vadd.f32 %v3632, %v3664
    %v3697 = vadd.f32 %v3633, %v3665
    %v3698 = vadd.f32 %v3634, %v3666
    %v3699 = vadd.f32 %v3635, %v3667
    %v3700 = vadd.f32 %v3636, %v3668
    %v3701 = vadd.f32 %v3637, %v3669
    %v3702 = vadd.f32 %v3638, %v3670
    %v3703 = vadd.f32 %v3639, %v3671
    %v3704 = vadd.f32 %v3640, %v3672
    %v3705 = vadd.f32 %v3641, %v3673
    %v3706 = vadd.f32 %v3642, %v3674
    %v3707 = vadd.f32 %v3643, %v3675
    %v3708 = vadd.f32 %v3644, %v3676
    %v3709 = vadd.f32 %v3645, %v3677
    %v3710 = vadd.f32 %v3646, %v3678
    %v3711 = vadd.f32 %v3647, %v3679
    %v3712 = vmul.f32 %v2186, %v2551
    %v3713 = vmul.f32 %v2186, %v2552
    %v3714 = vmul.f32 %v2190, %v2551
    %v3715 = vmul.f32 %v2190, %v2552
    %v3716 = vmul.f32 %v2194, %v2551
    %v3717 = vmul.f32 %v2194, %v2552
    %v3718 = vmul.f32 %v2198, %v2551
    %v3719 = vmul.f32 %v2198, %v2552
    %v3720 = vmul.f32 %v2202, %v2551
    %v3721 = vmul.f32 %v2202, %v2552
    %v3722 = vmul.f32 %v2206, %v2551
    %v3723 = vmul.f32 %v2206, %v2552
    %v3724 = vmul.f32 %v2210, %v2551
    %v3725 = vmul.f32 %v2210, %v2552
    %v3726 = vmul.f32 %v2214, %v2551
    %v3727 = vmul.f32 %v2214, %v2552
    %v3728 = vmul.f32 %v2218, %v2551
    %v3729 = vmul.f32 %v2218, %v2552
    %v3730 = vmul.f32 %v2222, %v2551
    %v3731 = vmul.f32 %v2222, %v2552
    %v3732 = vmul.f32 %v2226, %v2551
    %v3733 = vmul.f32 %v2226, %v2552
    %v3734 = vmul.f32 %v2230, %v2551
    %v3735 = vmul.f32 %v2230, %v2552
    %v3736 = vmul.f32 %v2234, %v2551
    %v3737 = vmul.f32 %v2234, %v2552
    %v3738 = vmul.f32 %v2238, %v2551
    %v3739 = vmul.f32 %v2238, %v2552
    %v3740 = vmul.f32 %v2242, %v2551
    %v3741 = vmul.f32 %v2242, %v2552
    %v3742 = vmul.f32 %v2246, %v2551
    %v3743 = vmul.f32 %v2246, %v2552
    %v3744 = vadd.f32 %v3680, %v3712
    %v3745 = vadd.f32 %v3681, %v3713
    %v3746 = vadd.f32 %v3682, %v3714
    %v3747 = vadd.f32 %v3683, %v3715
    %v3748 = vadd.f32 %v3684, %v3716
    %v3749 = vadd.f32 %v3685, %v3717
    %v3750 = vadd.f32 %v3686, %v3718
    %v3751 = vadd.f32 %v3687, %v3719
    %v3752 = vadd.f32 %v3688, %v3720
    %v3753 = vadd.f32 %v3689, %v3721
    %v3754 = vadd.f32 %v3690, %v3722
    %v3755 = vadd.f32 %v3691, %v3723
    %v3756 = vadd.f32 %v3692, %v3724
    %v3757 = vadd.f32 %v3693, %v3725
    %v3758 = vadd.f32 %v3694, %v3726
    %v3759 = vadd.f32 %v3695, %v3727
    %v3760 = vadd.f32 %v3696, %v3728
    %v3761 = vadd.f32 %v3697, %v3729
    %v3762 = vadd.f32 %v3698, %v3730
    %v3763 = vadd.f32 %v3699, %v3731
    %v3764 = vadd.f32 %v3700, %v3732
    %v3765 = vadd.f32 %v3701, %v3733
    %v3766 = vadd.f32 %v3702, %v3734
    %v3767 = vadd.f32 %v3703, %v3735
    %v3768 = vadd.f32 %v3704, %v3736
    %v3769 = vadd.f32 %v3705, %v3737
    %v3770 = vadd.f32 %v3706, %v3738
    %v3771 = vadd.f32 %v3707, %v3739
    %v3772 = vadd.f32 %v3708, %v3740
    %v3773 = vadd.f32 %v3709, %v3741
    %v3774 = vadd.f32 %v3710, %v3742
    %v3775 = vadd.f32 %v3711, %v3743
    %v3776 = vpack.c.bf16 %v3746, %v3744
    %v3777 = vpack.c.bf16 %v3747, %v3745
    %v3778 = vpack.c.bf16 %v3750, %v3748
    %v3779 = vpack.c.bf16 %v3751, %v3749
    %v3780 = vpack.c.bf16 %v3754, %v3752
    %v3781 = vpack.c.bf16 %v3755, %v3753
    %v3782 = vpack.c.bf16 %v3758, %v3756
    %v3783 = vpack.c.bf16 %v3759, %v3757
    %v3784 = vpack.c.bf16 %v3762, %v3760
    %v3785 = vpack.c.bf16 %v3763, %v3761
    %v3786 = vpack.c.bf16 %v3766, %v3764
    %v3787 = vpack.c.bf16 %v3767, %v3765
    %v3788 = vpack.c.bf16 %v3770, %v3768
    %v3789 = vpack.c.bf16 %v3771, %v3769
    %v3790 = vpack.c.bf16 %v3774, %v3772
    %v3791 = vpack.c.bf16 %v3775, %v3773
    %3792 = vmatpush.bf16.msra.mxu0 %v3790
    %3793 = vmatpush.bf16.msra.mxu0 %v3788
    %3794 = vmatpush.bf16.msra.mxu0 %v3786
    %3795 = vmatpush.bf16.msra.mxu0 %v3784
    %3796 = vmatpush.bf16.msra.mxu0 %v3782
    %3797 = vmatpush.bf16.msra.mxu0 %v3780
    %3798 = vmatpush.bf16.msra.mxu0 %v3778
    %3799 = vmatpush.bf16.msra.mxu0 %v3776
    %3800 = vmatmul.bf16.gmra.mxu0 %v3551
    %v3801 = vpop.f32.mrf.mxu0
    %v3802 = vadd.f32 %v2331, %v3801
    %v3803 = vpop.f32.mrf.mxu0
    %3804 = vdwg.mxu0
    %3805 = vmatpush.bf16.msra.mxu0 %v3791
    %3806 = vmatpush.bf16.msra.mxu0 %v3789
    %3807 = vmatpush.bf16.msra.mxu0 %v3787
    %3808 = vmatpush.bf16.msra.mxu0 %v3785
    %3809 = vmatpush.bf16.msra.mxu0 %v3783
    %3810 = vmatpush.bf16.msra.mxu0 %v3781
    %3811 = vmatpush.bf16.msra.mxu0 %v3779
    %3812 = vmatpush.bf16.msra.mxu0 %v3777
    %3813 = vmatmul.bf16.gmra.mxu0 %v3551
    %v3814 = vpop.f32.mrf.mxu0
    %v3815 = vadd.f32 %v2331, %v3814
    %v3816 = vpop.f32.mrf.mxu0
    %3817 = vdwg.mxu0
    %v3820 = vrot.slane %v3815, 4
    %v3821 = vsel %vm2362, %v3802, %v3820
    %s3823 = scalar_lea.vmem [#allocation2], 8
    %3824 = vst [vmem:[%s3823] sm:$0xff] %v3821
    // Predicated region
    $region22: #{tpu_custom_call.1} parent=1 // pred_check
      _
    $region23: #{tpu_custom_call.1} parent=1 // pred_check_branch
      %3826 = sbr.rel (0) target = $region25
    $region24: #{tpu_custom_call.1} parent=1 // pred_region
      %3828 = vsyncadd [#allocation3], 0
      %s3829 = sshll.u32 [#allocation2], 4
      %s3830 = int_to_ptr.vmem [resolvable:$true] %s3829
      %s3831 = sshll.u32 %s5, 4
      %s3832 = int_to_ptr.hbm [resolvable:$true] %s3831
      %3837 = dma.vmem_to_hbm [thread:$0]  %s3830, 256, %s3832, [#allocation3], 128, 128, 8
    $region25: #{tpu_custom_call.1} parent=1 // pred_fallthru
      _
    // Predicated region
    $region26: #{tpu_custom_call.1} parent=1 // pred_check
      _
    $region27: #{tpu_custom_call.1} parent=1 // pred_check_branch
      %3839 = sbr.rel (0) target = $region29
    $region28: #{tpu_custom_call.1} parent=1 // pred_region
      %3841 = dma.done [#allocation3], 256
    $region29: #{tpu_custom_call.1} parent=1 // pred_fallthru
      _
    %3842 = vsyncpa [#allocation3], 1

</llo_original>
